<compile_context>
chip_gen: v7x
topology: tpu7x:2x2x1
jax: 0.10.0
libtpu: 0.0.40
codegen_flags: <defaults>
</compile_context>

<pallas_src>
import functools

import jax
import jax.numpy as jnp
from jax.experimental import pallas as pl
from jax.experimental.pallas import tpu as pltpu

_LANE = 128
_VMEM_LIMIT_BYTES = 32 * 1024 * 1024
_BN_EPS = 1e-5
_LEAKY_SLOPE = 0.2


def _round_up(x, m):
    return ((x + m - 1) // m) * m


def _pick_tile(m, *, split=False, cap=1024):
    # Largest power-of-two row tile <= cap that exactly divides m (so BN batch
    # stats stay unbiased / no partial tiles).  split=True additionally forces
    # >= 2 grid steps when possible (v7x megacore: keep both TensorCores busy).
    if split:
        cap = min(cap, max(m // 2, 8))
    for t in (1024, 512, 256, 128, 64, 32, 16, 8):
        if t <= cap and m % t == 0:
            return t
    return m


def _leaky(z):
    # LeakyReLU(0.2) == max(z, 0.2*z) since slope < 1  (2 VALU ops).
    return jnp.maximum(z, _LEAKY_SLOPE * z)


def _stable_sigmoid(z):
    # No inf intermediate for very negative z.
    e = jnp.exp(-jnp.abs(z))
    return jnp.where(z >= 0, 1.0 / (1.0 + e), e / (1.0 + e))


# ----------------------------------------------------------------------------
# Pallas kernels
# ----------------------------------------------------------------------------
def _matmul_leaky_kernel(x_ref, w_ref, o_ref):
    # x_ref: (TM, K) bf16 im2col tile, w_ref: (K, C_pad) bf16, o_ref: (TM, C_pad) bf16
    y = jnp.dot(x_ref[...], w_ref[...], preferred_element_type=jnp.float32)
    o_ref[...] = _leaky(y).astype(o_ref.dtype)


def _bn_leaky_fused_kernel(x_ref, w_ref, gamma_ref, beta_ref, o_ref, y_scr, *, tm):
    # Single-pass fused conv + BatchNorm + LeakyReLU:
    #   every grid step: matmul its M tile into the resident f32 VMEM scratch;
    #   last step: batch stats over the scratch, scale/shift + LeakyReLU, one
    #   bf16 write of the whole (resident) output block.
    i = pl.program_id(0)
    row = pl.multiple_of(i * tm, tm)
    y_scr[pl.ds(row, tm), :] = jnp.dot(
        x_ref[...], w_ref[...], preferred_element_type=jnp.float32)

    @pl.when(i == pl.num_programs(0) - 1)
    def _():
        y = y_scr[...]
        mean = jnp.mean(y, axis=0, keepdims=True)                    # (1, C)
        var = jnp.mean(jnp.square(y - mean), axis=0, keepdims=True)  # two-pass var
        scale = jax.lax.rsqrt(var + _BN_EPS) * gamma_ref[...]
        shift = beta_ref[...] - mean * scale
        o_ref[...] = _leaky(y * scale + shift).astype(o_ref.dtype)


def _bn_leaky_head_kernel(x_ref, w_ref, gamma_ref, beta_ref, w5t_ref, sel_ref,
                          o_ref, y_scr, *, tm):
    # Layer 4 (conv + BN + LeakyReLU) with layer 5 fused as an epilogue.
    # Layer 5 is a 4x4 / stride-1 / pad-0 conv over the whole 4x4 map, i.e. a
    # per-sample full reduction of z * w5; the block-row-sum is done with a tiny
    # MXU dot against the (N_pad, M) selector matrix.
    i = pl.program_id(0)
    row = pl.multiple_of(i * tm, tm)
    y_scr[pl.ds(row, tm), :] = jnp.dot(
        x_ref[...], w_ref[...], preferred_element_type=jnp.float32)

    @pl.when(i == pl.num_programs(0) - 1)
    def _():
        y = y_scr[...]
        mean = jnp.mean(y, axis=0, keepdims=True)
        var = jnp.mean(jnp.square(y - mean), axis=0, keepdims=True)
        scale = jax.lax.rsqrt(var + _BN_EPS) * gamma_ref[...]
        shift = beta_ref[...] - mean * scale
        z = _leaky(y * scale + shift)                                # (M, C_pad) f32
        t = jnp.dot(sel_ref[...], z * w5t_ref[...],
                    preferred_element_type=jnp.float32)              # (N_pad, C_pad)
        logit = jnp.sum(t, axis=1, keepdims=True)                    # (N_pad, 1)
        o_ref[...] = _stable_sigmoid(logit)


# ----------------------------------------------------------------------------
# Pallas call wrappers
# ----------------------------------------------------------------------------
def _matmul_leaky(x_mat, w_mat):
    M, K = x_mat.shape
    C = w_mat.shape[1]
    TM = _pick_tile(M, split=True)
    assert M % TM == 0, (M, TM)
    return pl.pallas_call(
        _matmul_leaky_kernel,
        out_shape=jax.ShapeDtypeStruct((M, C), jnp.bfloat16),
        grid=(M // TM,),
        in_specs=[pl.BlockSpec((TM, K), lambda i: (i, 0)),
                  pl.BlockSpec((K, C), lambda i: (0, 0))],
        out_specs=pl.BlockSpec((TM, C), lambda i: (i, 0)),
        compiler_params=pltpu.CompilerParams(
            dimension_semantics=("parallel",),
            vmem_limit_bytes=_VMEM_LIMIT_BYTES),
        cost_estimate=pl.CostEstimate(
            flops=2 * M * K * C, transcendentals=0,
            bytes_accessed=M * K * 2 + K * C * 2 + M * C * 2),
    )(x_mat, w_mat)


def _matmul_bn_leaky(x_mat, w_mat, gamma2d, beta2d):
    M, K = x_mat.shape
    C = w_mat.shape[1]
    TM = _pick_tile(M)
    assert M % TM == 0, (M, TM)
    return pl.pallas_call(
        functools.partial(_bn_leaky_fused_kernel, tm=TM),
        out_shape=jax.ShapeDtypeStruct((M, C), jnp.bfloat16),
        grid=(M // TM,),
        in_specs=[pl.BlockSpec((TM, K), lambda i: (i, 0)),
                  pl.BlockSpec((K, C), lambda i: (0, 0)),
                  pl.BlockSpec((1, C), lambda i: (0, 0)),
                  pl.BlockSpec((1, C), lambda i: (0, 0))],
        out_specs=pl.BlockSpec((M, C), lambda i: (0, 0)),     # resident, written once
        scratch_shapes=[pltpu.VMEM((M, C), jnp.float32)],
        compiler_params=pltpu.CompilerParams(
            dimension_semantics=("arbitrary",),
            vmem_limit_bytes=_VMEM_LIMIT_BYTES),
        cost_estimate=pl.CostEstimate(
            flops=2 * M * K * C + 10 * M * C, transcendentals=0,
            bytes_accessed=M * K * 2 + K * C * 2 + M * C * 2 + 2 * C * 4),
    )(x_mat, w_mat, gamma2d, beta2d)


def _matmul_bn_leaky_head(x_mat, w_mat, gamma2d, beta2d, w5t, sel):
    M, K = x_mat.shape
    C = w_mat.shape[1]
    NP = sel.shape[0]
    TM = _pick_tile(M)
    assert M % TM == 0, (M, TM)
    return pl.pallas_call(
        functools.partial(_bn_leaky_head_kernel, tm=TM),
        out_shape=jax.ShapeDtypeStruct((NP, 1), jnp.float32),
        grid=(M // TM,),
        in_specs=[pl.BlockSpec((TM, K), lambda i: (i, 0)),
                  pl.BlockSpec((K, C), lambda i: (0, 0)),
                  pl.BlockSpec((1, C), lambda i: (0, 0)),
                  pl.BlockSpec((1, C), lambda i: (0, 0)),
                  pl.BlockSpec((M, C), lambda i: (0, 0)),
                  pl.BlockSpec((NP, M), lambda i: (0, 0))],
        out_specs=pl.BlockSpec((NP, 1), lambda i: (0, 0)),
        scratch_shapes=[pltpu.VMEM((M, C), jnp.float32)],
        compiler_params=pltpu.CompilerParams(
            dimension_semantics=("arbitrary",),
            vmem_limit_bytes=_VMEM_LIMIT_BYTES),
        cost_estimate=pl.CostEstimate(
            flops=2 * M * K * C + 12 * M * C + 2 * NP * M * C,
            transcendentals=2 * NP,
            bytes_accessed=M * K * 2 + K * C * 2 + 2 * M * C * 4 + NP * 4),
    )(x_mat, w_mat, gamma2d, beta2d, w5t, sel)


# ----------------------------------------------------------------------------
# im2col / weight glue (plain JAX: padding + static strided slices only)
# ----------------------------------------------------------------------------
def _im2col(x_nhwc, ksize, stride, pad):
    N, H, W, Cin = x_nhwc.shape
    if pad > 0:
        x_nhwc = jnp.pad(x_nhwc, ((0, 0), (pad, pad), (pad, pad), (0, 0)))
    Hp, Wp = H + 2 * pad, W + 2 * pad
    Ho = (Hp - ksize) // stride + 1
    Wo = (Wp - ksize) // stride + 1
    patches = []
    for kh in range(ksize):
        for kw in range(ksize):
            patches.append(
                x_nhwc[:, kh:kh + Ho * stride:stride, kw:kw + Wo * stride:stride, :])
    # feature order: ((kh*KW + kw)*Cin + cin), matched by the weight reshape.
    p = jnp.stack(patches, axis=3)
    x_mat = p.reshape(N * Ho * Wo, ksize * ksize * Cin).astype(jnp.bfloat16)
    return x_mat, (N, Ho, Wo)


def _reshape_weight_padded(w_oihw, c_pad):
    # (Cout, Cin, KH, KW) -> (KH*KW*Cin, Cout) zero-padded to c_pad columns.
    Cout, Cin, KH, KW = w_oihw.shape
    w = jnp.transpose(w_oihw, (2, 3, 1, 0)).reshape(KH * KW * Cin, Cout)
    if Cout < c_pad:
        w = jnp.pad(w, ((0, 0), (0, c_pad - Cout)))
    return w.astype(jnp.bfloat16)


def _pad_vec(v, c_pad, fill):
    c = v.shape[0]
    if c < c_pad:
        v = jnp.concatenate([v, jnp.full((c_pad - c,), fill, v.dtype)])
    return v.reshape(1, c_pad).astype(jnp.float32)


def _conv_leaky(x_nhwc, w_oihw, *, stride, pad):
    Cout = w_oihw.shape[0]
    ksize = w_oihw.shape[-1]
    c_pad = _round_up(Cout, _LANE)
    x_mat, (N, Ho, Wo) = _im2col(x_nhwc, ksize, stride, pad)
    w_mat = _reshape_weight_padded(w_oihw, c_pad)
    y = _matmul_leaky(x_mat, w_mat)
    return y[:, :Cout].reshape(N, Ho, Wo, Cout)


def _conv_bn_leaky(x_nhwc, w_oihw, gamma, beta, *, stride, pad):
    Cout = w_oihw.shape[0]
    ksize = w_oihw.shape[-1]
    c_pad = _round_up(Cout, _LANE)
    x_mat, (N, Ho, Wo) = _im2col(x_nhwc, ksize, stride, pad)
    w_mat = _reshape_weight_padded(w_oihw, c_pad)
    y = _matmul_bn_leaky(x_mat, w_mat,
                         _pad_vec(gamma, c_pad, 1.0), _pad_vec(beta, c_pad, 0.0))
    return y[:, :Cout].reshape(N, Ho, Wo, Cout)


def _conv_bn_leaky_sigmoid_head(x_nhwc, w4_oihw, gamma, beta, w5_oihw, *, stride, pad):
    # Layer 4 (conv + BN + LeakyReLU) and layer 5 (full-extent conv + sigmoid)
    # fused into a single pallas_call.
    Cout4 = w4_oihw.shape[0]
    k4 = w4_oihw.shape[-1]
    c_pad = _round_up(Cout4, _LANE)
    x_mat, (N, Ho, Wo) = _im2col(x_nhwc, k4, stride, pad)

    KH5, KW5 = w5_oihw.shape[2], w5_oihw.shape[3]
    assert w5_oihw.shape[0] == 1 and (Ho, Wo) == (KH5, KW5), \
        "head fusion requires imageSize=64 (layer-4 map == layer-5 kernel extent)"

    w4_mat = _reshape_weight_padded(w4_oihw, c_pad)
    # w5 as (kh*KW+kw, Cin) rows so they align with the (N*Ho*Wo, C_pad) rows of
    # layer-4's activation; zero-padded channels, tiled once per sample.
    w5_mat = jnp.transpose(w5_oihw, (2, 3, 1, 0)).reshape(KH5 * KW5, -1)
    w5_mat = jnp.pad(w5_mat, ((0, 0), (0, c_pad - w5_mat.shape[1]))).astype(jnp.float32)
    w5t = jnp.tile(w5_mat, (N, 1))                                   # (N*Ho*Wo, c_pad)

    rows_per = Ho * Wo
    M4 = x_mat.shape[0]
    n_pad = max(8, _round_up(N, 8))                                  # MXU/sublane friendly
    sel = (jnp.arange(n_pad)[:, None] ==
           (jnp.arange(M4) // rows_per)[None, :]).astype(jnp.float32)  # (n_pad, M4)

    probs = _matmul_bn_leaky_head(x_mat, w4_mat,
                                  _pad_vec(gamma, c_pad, 1.0),
                                  _pad_vec(beta, c_pad, 0.0),
                                  w5t, sel)
    return probs[:N]                                                 # (N, 1)


# ----------------------------------------------------------------------------
# _netD forward
# ----------------------------------------------------------------------------
def netD_forward(x_nchw, params):
    x = jnp.transpose(x_nchw, (0, 2, 3, 1)).astype(jnp.float32)      # NCHW -> NHWC
    x = _conv_leaky(x, params["w1"], stride=2, pad=1)
    x = _conv_bn_leaky(x, params["w2"], params["g2"], params["b2"], stride=2, pad=1)
    x = _conv_bn_leaky(x, params["w3"], params["g3"], params["b3"], stride=2, pad=1)
    probs = _conv_bn_leaky_sigmoid_head(x, params["w4"], params["g4"], params["b4"],
                                        params["w5"], stride=2, pad=1)
    # output.view(-1, 1).squeeze(1) -> (N,)
    return probs.reshape(-1, 1).squeeze(1)


def init_params(key, nc=3, ndf=8):
    ks = jax.random.split(key, 9)
    std = 0.02  # DCGAN init
    return {
        "w1": std * jax.random.normal(ks[0], (ndf, nc, 4, 4), jnp.float32),
        "g1": jnp.ones((ndf,), jnp.float32), "b1": jnp.zeros((ndf,), jnp.float32),
        "w2": std * jax.random.normal(ks[1], (ndf * 2, ndf, 4, 4), jnp.float32),
        "g2": 1.0 + std * jax.random.normal(ks[2], (ndf * 2,), jnp.float32),
        "b2": jnp.zeros((ndf * 2,), jnp.float32),
        "w3": std * jax.random.normal(ks[3], (ndf * 4, ndf * 2, 4, 4), jnp.float32),
        "g3": 1.0 + std * jax.random.normal(ks[4], (ndf * 4,), jnp.float32),
        "b3": jnp.zeros((ndf * 4,), jnp.float32),
        "w4": std * jax.random.normal(ks[5], (ndf * 8, ndf * 4, 4, 4), jnp.float32),
        "g4": 1.0 + std * jax.random.normal(ks[6], (ndf * 8,), jnp.float32),
        "b4": jnp.zeros((ndf * 8,), jnp.float32),
        "w5": std * jax.random.normal(ks[7], (1, ndf * 8, 4, 4), jnp.float32),
        "g5": jnp.ones((1,), jnp.float32), "b5": jnp.zeros((1,), jnp.float32),
    }


# ----------------------------------------------------------------------------
# Pure-JAX f32 reference (for correctness check only)
# ----------------------------------------------------------------------------
def _reference_netD(x_nchw, params):
    def conv(x, w, stride, pad):
        return jax.lax.conv_general_dilated(
            x, w, window_strides=(stride, stride),
            padding=[(pad, pad), (pad, pad)],
            dimension_numbers=("NCHW", "OIHW", "NCHW"))

    def bn(x, g, b):
        mean = jnp.mean(x, axis=(0, 2, 3), keepdims=True)
        var = jnp.mean((x - mean) ** 2, axis=(0, 2, 3), keepdims=True)
        xn = (x - mean) * jax.lax.rsqrt(var + _BN_EPS)
        return xn * g.reshape(1, -1, 1, 1) + b.reshape(1, -1, 1, 1)

    def leaky(x):
        return jnp.where(x >= 0, x, _LEAKY_SLOPE * x)

    x = leaky(conv(x_nchw, params["w1"], 2, 1))
    x = leaky(bn(conv(x, params["w2"], 2, 1), params["g2"], params["b2"]))
    x = leaky(bn(conv(x, params["w3"], 2, 1), params["g3"], params["b3"]))
    x = leaky(bn(conv(x, params["w4"], 2, 1), params["g4"], params["b4"]))
    x = jax.nn.sigmoid(conv(x, params["w5"], 1, 0))
    return x.reshape(-1, 1).squeeze(1)


if __name__ == "__main__":
    key = jax.random.PRNGKey(0)
    k_x, k_p = jax.random.split(key)

    N, nc, ndf, img = 2, 3, 8, 64  # imageSize must be 64 so the net ends at 1x1
    x = jax.random.normal(k_x, (N, nc, img, img), jnp.float32)
    params = init_params(k_p, nc=nc, ndf=ndf)

    out = jax.block_until_ready(jax.jit(netD_forward)(x, params))
    ref = jax.block_until_ready(jax.jit(_reference_netD)(x, params))

    assert out.shape == (N,), out.shape
    assert bool(jnp.all(jnp.isfinite(out)))
    assert bool(jnp.all((out >= 0.0) & (out <= 1.0)))  # sigmoid range
    max_err = float(jnp.max(jnp.abs(out - ref)))
    assert max_err < 5e-2, f"mismatch vs f32 reference: max|diff|={max_err}"
    print("KERNEL_OK")
</pallas_src>

<mosaic_0001>
module attributes {stable_mosaic.version = 11 : i64} {
  func.func @_matmul_leaky_kernel(%arg0: i32, %arg1: memref<1024x48xbf16, #tpu.memory_space<vmem>>, %arg2: memref<48x128xbf16, #tpu.memory_space<vmem>>, %arg3: memref<1024x128xbf16, #tpu.memory_space<vmem>>) attributes {dimension_semantics = [#tpu.dimension_semantics<parallel>], iteration_bounds = array<i64: 2>, scalar_prefetch = 0 : i64, scratch_operands = 0 : i64, tpu.core_type = #tpu.core_type<tc>, window_params = [{transform_indices = @transform_0, window_bounds = array<i64: 1024, 48>}, {pipeline_mode = #tpu.pipeline_mode<synchronous>, transform_indices = @transform_1, window_bounds = array<i64: 48, 128>}, {transform_indices = @transform_2, window_bounds = array<i64: 1024, 128>}]} {
    %c0 = arith.constant 0 : index
    %c0_0 = arith.constant 0 : index
    %0 = vector.load %arg1[%c0, %c0_0] : memref<1024x48xbf16, #tpu.memory_space<vmem>>, vector<1024x48xbf16>
    %c0_1 = arith.constant 0 : index
    %c0_2 = arith.constant 0 : index
    %1 = vector.load %arg2[%c0_1, %c0_2] : memref<48x128xbf16, #tpu.memory_space<vmem>>, vector<48x128xbf16>
    %cst = arith.constant dense<0.000000e+00> : vector<1024x128xf32>
    %2 = tpu.matmul %0, %1, %cst {dimension_numbers = #tpu.dot_dimension_numbers<[1], [0], [0], [1], [0, 0, 1, 1], [], []>} : vector<1024x48xbf16>, vector<48x128xbf16>, vector<1024x128xf32> -> vector<1024x128xf32>
    %cst_3 = arith.constant 2.000000e-01 : f32
    %3 = vector.broadcast %cst_3 : f32 to vector<1024x128xf32>
    %4 = arith.mulf %3, %2 : vector<1024x128xf32>
    %5 = arith.maximumf %2, %4 : vector<1024x128xf32>
    %6 = arith.truncf %5 : vector<1024x128xf32> to vector<1024x128xbf16>
    %c0_4 = arith.constant 0 : index
    %c0_5 = arith.constant 0 : index
    %7 = vector.load %arg3[%c0_4, %c0_5] : memref<1024x128xbf16, #tpu.memory_space<vmem>>, vector<1024x128xbf16>
    tpu.vector_store %arg3[%c0_4, %c0_5], %6 {strides = array<i32>} : memref<1024x128xbf16, #tpu.memory_space<vmem>>, vector<1024x128xbf16>,
    return
  }
  func.func @transform_0(%arg0: i32) -> (i32, i32) {
    %c0_i32 = arith.constant 0 : i32
    %c0_i32_0 = arith.constant 0 : i32
    return %arg0, %c0_i32 : i32, i32
  }
  func.func @transform_1(%arg0: i32) -> (i32, i32) {
    %c0_i32 = arith.constant 0 : i32
    %c0_i32_0 = arith.constant 0 : i32
    %c0_i32_1 = arith.constant 0 : i32
    return %c0_i32, %c0_i32_0 : i32, i32
  }
  func.func @transform_2(%arg0: i32) -> (i32, i32) {
    %c0_i32 = arith.constant 0 : i32
    %c0_i32_0 = arith.constant 0 : i32
    return %arg0, %c0_i32 : i32, i32
  }
}

module attributes {stable_mosaic.version = 11 : i64} {
  func.func @_bn_leaky_fused_kernel(%arg0: i32, %arg1: memref<512x128xbf16, #tpu.memory_space<vmem>>, %arg2: memref<128x128xbf16, #tpu.memory_space<vmem>>, %arg3: memref<1x128xf32, #tpu.memory_space<vmem>>, %arg4: memref<1x128xf32, #tpu.memory_space<vmem>>, %arg5: memref<512x128xbf16, #tpu.memory_space<vmem>>, %arg6: memref<512x128xf32, #tpu.memory_space<vmem>>) attributes {dimension_semantics = [#tpu.dimension_semantics<arbitrary>], iteration_bounds = array<i64: 1>, scalar_prefetch = 0 : i64, scratch_operands = 1 : i64, tpu.core_type = #tpu.core_type<tc>, window_params = [{transform_indices = @transform_0, window_bounds = array<i64: 512, 128>}, {pipeline_mode = #tpu.pipeline_mode<synchronous>, transform_indices = @transform_1, window_bounds = array<i64: 128, 128>}, {pipeline_mode = #tpu.pipeline_mode<synchronous>, transform_indices = @transform_2, window_bounds = array<i64: 1, 128>}, {pipeline_mode = #tpu.pipeline_mode<synchronous>, transform_indices = @transform_3, window_bounds = array<i64: 1, 128>}, {pipeline_mode = #tpu.pipeline_mode<synchronous>, transform_indices = @transform_4, window_bounds = array<i64: 512, 128>}]} {
    %c512_i32 = arith.constant 512 : i32
    %0 = arith.muli %arg0, %c512_i32 : i32
    %1 = tpu.assume_multiple %0, 512 : i32
    %c0 = arith.constant 0 : index
    %c0_0 = arith.constant 0 : index
    %2 = vector.load %arg1[%c0, %c0_0] : memref<512x128xbf16, #tpu.memory_space<vmem>>, vector<512x128xbf16>
    %c0_1 = arith.constant 0 : index
    %c0_2 = arith.constant 0 : index
    %3 = vector.load %arg2[%c0_1, %c0_2] : memref<128x128xbf16, #tpu.memory_space<vmem>>, vector<128x128xbf16>
    %cst = arith.constant dense<0.000000e+00> : vector<512x128xf32>
    %4 = tpu.matmul %2, %3, %cst {dimension_numbers = #tpu.dot_dimension_numbers<[1], [0], [0], [1], [0, 0, 1, 1], [], []>} : vector<512x128xbf16>, vector<128x128xbf16>, vector<512x128xf32> -> vector<512x128xf32>
    %5 = arith.index_cast %1 : i32 to index
    %c0_3 = arith.constant 0 : index
    %6 = vector.load %arg6[%5, %c0_3] : memref<512x128xf32, #tpu.memory_space<vmem>>, vector<512x128xf32>
    tpu.vector_store %arg6[%5, %c0_3], %4 {strides = array<i32>} : memref<512x128xf32, #tpu.memory_space<vmem>>, vector<512x128xf32>,
    %c0_i32 = arith.constant 0 : i32
    %7 = arith.cmpi eq, %arg0, %c0_i32 : i32
    %8 = arith.extui %7 : i1 to i32
    %c0_i32_4 = arith.constant 0 : i32
    %9 = arith.cmpi ne, %8, %c0_i32_4 : i32
    scf.if %9 {
      %c0_5 = arith.constant 0 : index
      %c0_6 = arith.constant 0 : index
      %10 = vector.load %arg6[%c0_5, %c0_6] : memref<512x128xf32, #tpu.memory_space<vmem>>, vector<512x128xf32>
      %cst_7 = arith.constant dense<0.000000e+00> : vector<128xf32>
      %11 = vector.multi_reduction <add>, %10, %cst_7 [0] : vector<512x128xf32> to vector<128xf32>
      %12 = vector.shape_cast %11 : vector<128xf32> to vector<1x128xf32>
      %cst_8 = arith.constant 5.120000e+02 : f32
      %13 = vector.broadcast %cst_8 : f32 to vector<1x128xf32>
      %14 = arith.divf %12, %13 : vector<1x128xf32>
      %15 = vector.broadcast %14 : vector<1x128xf32> to vector<512x128xf32>
      %16 = arith.subf %10, %15 : vector<512x128xf32>
      %17 = arith.mulf %16, %16 : vector<512x128xf32>
      %cst_9 = arith.constant dense<0.000000e+00> : vector<128xf32>
      %18 = vector.multi_reduction <add>, %17, %cst_9 [0] : vector<512x128xf32> to vector<128xf32>
      %19 = vector.shape_cast %18 : vector<128xf32> to vector<1x128xf32>
      %cst_10 = arith.constant 5.120000e+02 : f32
      %20 = vector.broadcast %cst_10 : f32 to vector<1x128xf32>
      %21 = arith.divf %19, %20 : vector<1x128xf32>
      %cst_11 = arith.constant 9.99999974E-6 : f32
      %22 = vector.broadcast %cst_11 : f32 to vector<1x128xf32>
      %23 = arith.addf %21, %22 : vector<1x128xf32>
      %24 = math.rsqrt %23 : vector<1x128xf32>
      %c0_12 = arith.constant 0 : index
      %c0_13 = arith.constant 0 : index
      %25 = vector.load %arg3[%c0_12, %c0_13] : memref<1x128xf32, #tpu.memory_space<vmem>>, vector<1x128xf32>
      %26 = arith.mulf %24, %25 : vector<1x128xf32>
      %c0_14 = arith.constant 0 : index
      %c0_15 = arith.constant 0 : index
      %27 = vector.load %arg4[%c0_14, %c0_15] : memref<1x128xf32, #tpu.memory_space<vmem>>, vector<1x128xf32>
      %28 = arith.mulf %14, %26 : vector<1x128xf32>
      %29 = arith.subf %27, %28 : vector<1x128xf32>
      %30 = vector.broadcast %26 : vector<1x128xf32> to vector<512x128xf32>
      %31 = arith.mulf %10, %30 : vector<512x128xf32>
      %32 = vector.broadcast %29 : vector<1x128xf32> to vector<512x128xf32>
      %33 = arith.addf %31, %32 : vector<512x128xf32>
      %cst_16 = arith.constant 2.000000e-01 : f32
      %34 = vector.broadcast %cst_16 : f32 to vector<512x128xf32>
      %35 = arith.mulf %34, %33 : vector<512x128xf32>
      %36 = arith.maximumf %33, %35 : vector<512x128xf32>
      %37 = arith.truncf %36 : vector<512x128xf32> to vector<512x128xbf16>
      %c0_17 = arith.constant 0 : index
      %c0_18 = arith.constant 0 : index
      %38 = vector.load %arg5[%c0_17, %c0_18] : memref<512x128xbf16, #tpu.memory_space<vmem>>, vector<512x128xbf16>
      tpu.vector_store %arg5[%c0_17, %c0_18], %37 {strides = array<i32>} : memref<512x128xbf16, #tpu.memory_space<vmem>>, vector<512x128xbf16>,
    } else {
    }
    return
  }
  func.func @transform_0(%arg0: i32) -> (i32, i32) {
    %c0_i32 = arith.constant 0 : i32
    %c0_i32_0 = arith.constant 0 : i32
    return %arg0, %c0_i32 : i32, i32
  }
  func.func @transform_1(%arg0: i32) -> (i32, i32) {
    %c0_i32 = arith.constant 0 : i32
    %c0_i32_0 = arith.constant 0 : i32
    %c0_i32_1 = arith.constant 0 : i32
    return %c0_i32, %c0_i32_0 : i32, i32
  }
  func.func @transform_2(%arg0: i32) -> (i32, i32) {
    %c0_i32 = arith.constant 0 : i32
    %c0_i32_0 = arith.constant 0 : i32
    %c0_i32_1 = arith.constant 0 : i32
    return %c0_i32, %c0_i32_0 : i32, i32
  }
  func.func @transform_3(%arg0: i32) -> (i32, i32) {
    %c0_i32 = arith.constant 0 : i32
    %c0_i32_0 = arith.constant 0 : i32
    %c0_i32_1 = arith.constant 0 : i32
    return %c0_i32, %c0_i32_0 : i32, i32
  }
  func.func @transform_4(%arg0: i32) -> (i32, i32) {
    %c0_i32 = arith.constant 0 : i32
    %c0_i32_0 = arith.constant 0 : i32
    %c0_i32_1 = arith.constant 0 : i32
    return %c0_i32, %c0_i32_0 : i32, i32
  }
}

module attributes {stable_mosaic.version = 11 : i64} {
  func.func @_bn_leaky_fused_kernel(%arg0: i32, %arg1: memref<128x256xbf16, #tpu.memory_space<vmem>>, %arg2: memref<256x128xbf16, #tpu.memory_space<vmem>>, %arg3: memref<1x128xf32, #tpu.memory_space<vmem>>, %arg4: memref<1x128xf32, #tpu.memory_space<vmem>>, %arg5: memref<128x128xbf16, #tpu.memory_space<vmem>>, %arg6: memref<128x128xf32, #tpu.memory_space<vmem>>) attributes {dimension_semantics = [#tpu.dimension_semantics<arbitrary>], iteration_bounds = array<i64: 1>, scalar_prefetch = 0 : i64, scratch_operands = 1 : i64, tpu.core_type = #tpu.core_type<tc>, window_params = [{transform_indices = @transform_0, window_bounds = array<i64: 128, 256>}, {pipeline_mode = #tpu.pipeline_mode<synchronous>, transform_indices = @transform_1, window_bounds = array<i64: 256, 128>}, {pipeline_mode = #tpu.pipeline_mode<synchronous>, transform_indices = @transform_2, window_bounds = array<i64: 1, 128>}, {pipeline_mode = #tpu.pipeline_mode<synchronous>, transform_indices = @transform_3, window_bounds = array<i64: 1, 128>}, {pipeline_mode = #tpu.pipeline_mode<synchronous>, transform_indices = @transform_4, window_bounds = array<i64: 128, 128>}]} {
    %c128_i32 = arith.constant 128 : i32
    %0 = arith.muli %arg0, %c128_i32 : i32
    %1 = tpu.assume_multiple %0, 128 : i32
    %c0 = arith.constant 0 : index
    %c0_0 = arith.constant 0 : index
    %2 = vector.load %arg1[%c0, %c0_0] : memref<128x256xbf16, #tpu.memory_space<vmem>>, vector<128x256xbf16>
    %c0_1 = arith.constant 0 : index
    %c0_2 = arith.constant 0 : index
    %3 = vector.load %arg2[%c0_1, %c0_2] : memref<256x128xbf16, #tpu.memory_space<vmem>>, vector<256x128xbf16>
    %cst = arith.constant dense<0.000000e+00> : vector<128x128xf32>
    %4 = tpu.matmul %2, %3, %cst {dimension_numbers = #tpu.dot_dimension_numbers<[1], [0], [0], [1], [0, 0, 1, 1], [], []>} : vector<128x256xbf16>, vector<256x128xbf16>, vector<128x128xf32> -> vector<128x128xf32>
    %5 = arith.index_cast %1 : i32 to index
    %c0_3 = arith.constant 0 : index
    %6 = vector.load %arg6[%5, %c0_3] : memref<128x128xf32, #tpu.memory_space<vmem>>, vector<128x128xf32>
    tpu.vector_store %arg6[%5, %c0_3], %4 {strides = array<i32>} : memref<128x128xf32, #tpu.memory_space<vmem>>, vector<128x128xf32>,
    %c0_i32 = arith.constant 0 : i32
    %7 = arith.cmpi eq, %arg0, %c0_i32 : i32
    %8 = arith.extui %7 : i1 to i32
    %c0_i32_4 = arith.constant 0 : i32
    %9 = arith.cmpi ne, %8, %c0_i32_4 : i32
    scf.if %9 {
      %c0_5 = arith.constant 0 : index
      %c0_6 = arith.constant 0 : index
      %10 = vector.load %arg6[%c0_5, %c0_6] : memref<128x128xf32, #tpu.memory_space<vmem>>, vector<128x128xf32>
      %cst_7 = arith.constant dense<0.000000e+00> : vector<128xf32>
      %11 = vector.multi_reduction <add>, %10, %cst_7 [0] : vector<128x128xf32> to vector<128xf32>
      %12 = vector.shape_cast %11 : vector<128xf32> to vector<1x128xf32>
      %cst_8 = arith.constant 1.280000e+02 : f32
      %13 = vector.broadcast %cst_8 : f32 to vector<1x128xf32>
      %14 = arith.divf %12, %13 : vector<1x128xf32>
      %15 = vector.broadcast %14 : vector<1x128xf32> to vector<128x128xf32>
      %16 = arith.subf %10, %15 : vector<128x128xf32>
      %17 = arith.mulf %16, %16 : vector<128x128xf32>
      %cst_9 = arith.constant dense<0.000000e+00> : vector<128xf32>
      %18 = vector.multi_reduction <add>, %17, %cst_9 [0] : vector<128x128xf32> to vector<128xf32>
      %19 = vector.shape_cast %18 : vector<128xf32> to vector<1x128xf32>
      %cst_10 = arith.constant 1.280000e+02 : f32
      %20 = vector.broadcast %cst_10 : f32 to vector<1x128xf32>
      %21 = arith.divf %19, %20 : vector<1x128xf32>
      %cst_11 = arith.constant 9.99999974E-6 : f32
      %22 = vector.broadcast %cst_11 : f32 to vector<1x128xf32>
      %23 = arith.addf %21, %22 : vector<1x128xf32>
      %24 = math.rsqrt %23 : vector<1x128xf32>
      %c0_12 = arith.constant 0 : index
      %c0_13 = arith.constant 0 : index
      %25 = vector.load %arg3[%c0_12, %c0_13] : memref<1x128xf32, #tpu.memory_space<vmem>>, vector<1x128xf32>
      %26 = arith.mulf %24, %25 : vector<1x128xf32>
      %c0_14 = arith.constant 0 : index
      %c0_15 = arith.constant 0 : index
      %27 = vector.load %arg4[%c0_14, %c0_15] : memref<1x128xf32, #tpu.memory_space<vmem>>, vector<1x128xf32>
      %28 = arith.mulf %14, %26 : vector<1x128xf32>
      %29 = arith.subf %27, %28 : vector<1x128xf32>
      %30 = vector.broadcast %26 : vector<1x128xf32> to vector<128x128xf32>
      %31 = arith.mulf %10, %30 : vector<128x128xf32>
      %32 = vector.broadcast %29 : vector<1x128xf32> to vector<128x128xf32>
      %33 = arith.addf %31, %32 : vector<128x128xf32>
      %cst_16 = arith.constant 2.000000e-01 : f32
      %34 = vector.broadcast %cst_16 : f32 to vector<128x128xf32>
      %35 = arith.mulf %34, %33 : vector<128x128xf32>
      %36 = arith.maximumf %33, %35 : vector<128x128xf32>
      %37 = arith.truncf %36 : vector<128x128xf32> to vector<128x128xbf16>
      %c0_17 = arith.constant 0 : index
      %c0_18 = arith.constant 0 : index
      %38 = vector.load %arg5[%c0_17, %c0_18] : memref<128x128xbf16, #tpu.memory_space<vmem>>, vector<128x128xbf16>
      tpu.vector_store %arg5[%c0_17, %c0_18], %37 {strides = array<i32>} : memref<128x128xbf16, #tpu.memory_space<vmem>>, vector<128x128xbf16>,
    } else {
    }
    return
  }
  func.func @transform_0(%arg0: i32) -> (i32, i32) {
    %c0_i32 = arith.constant 0 : i32
    %c0_i32_0 = arith.constant 0 : i32
    return %arg0, %c0_i32 : i32, i32
  }
  func.func @transform_1(%arg0: i32) -> (i32, i32) {
    %c0_i32 = arith.constant 0 : i32
    %c0_i32_0 = arith.constant 0 : i32
    %c0_i32_1 = arith.constant 0 : i32
    return %c0_i32, %c0_i32_0 : i32, i32
  }
  func.func @transform_2(%arg0: i32) -> (i32, i32) {
    %c0_i32 = arith.constant 0 : i32
    %c0_i32_0 = arith.constant 0 : i32
    %c0_i32_1 = arith.constant 0 : i32
    return %c0_i32, %c0_i32_0 : i32, i32
  }
  func.func @transform_3(%arg0: i32) -> (i32, i32) {
    %c0_i32 = arith.constant 0 : i32
    %c0_i32_0 = arith.constant 0 : i32
    %c0_i32_1 = arith.constant 0 : i32
    return %c0_i32, %c0_i32_0 : i32, i32
  }
  func.func @transform_4(%arg0: i32) -> (i32, i32) {
    %c0_i32 = arith.constant 0 : i32
    %c0_i32_0 = arith.constant 0 : i32
    %c0_i32_1 = arith.constant 0 : i32
    return %c0_i32, %c0_i32_0 : i32, i32
  }
}

module attributes {stable_mosaic.version = 11 : i64} {
  func.func @_bn_leaky_head_kernel(%arg0: i32, %arg1: memref<32x512xbf16, #tpu.memory_space<vmem>>, %arg2: memref<512x128xbf16, #tpu.memory_space<vmem>>, %arg3: memref<1x128xf32, #tpu.memory_space<vmem>>, %arg4: memref<1x128xf32, #tpu.memory_space<vmem>>, %arg5: memref<32x128xf32, #tpu.memory_space<vmem>>, %arg6: memref<8x32xf32, #tpu.memory_space<vmem>>, %arg7: memref<8x1xf32, #tpu.memory_space<vmem>>, %arg8: memref<32x128xf32, #tpu.memory_space<vmem>>) attributes {dimension_semantics = [#tpu.dimension_semantics<arbitrary>], iteration_bounds = array<i64: 1>, scalar_prefetch = 0 : i64, scratch_operands = 1 : i64, tpu.core_type = #tpu.core_type<tc>, window_params = [{transform_indices = @transform_0, window_bounds = array<i64: 32, 512>}, {pipeline_mode = #tpu.pipeline_mode<synchronous>, transform_indices = @transform_1, window_bounds = array<i64: 512, 128>}, {pipeline_mode = #tpu.pipeline_mode<synchronous>, transform_indices = @transform_2, window_bounds = array<i64: 1, 128>}, {pipeline_mode = #tpu.pipeline_mode<synchronous>, transform_indices = @transform_3, window_bounds = array<i64: 1, 128>}, {pipeline_mode = #tpu.pipeline_mode<synchronous>, transform_indices = @transform_4, window_bounds = array<i64: 32, 128>}, {pipeline_mode = #tpu.pipeline_mode<synchronous>, transform_indices = @transform_5, window_bounds = array<i64: 8, 32>}, {pipeline_mode = #tpu.pipeline_mode<synchronous>, transform_indices = @transform_6, window_bounds = array<i64: 8, 1>}]} {
    %c32_i32 = arith.constant 32 : i32
    %0 = arith.muli %arg0, %c32_i32 : i32
    %1 = tpu.assume_multiple %0, 32 : i32
    %c0 = arith.constant 0 : index
    %c0_0 = arith.constant 0 : index
    %2 = vector.load %arg1[%c0, %c0_0] : memref<32x512xbf16, #tpu.memory_space<vmem>>, vector<32x512xbf16>
    %c0_1 = arith.constant 0 : index
    %c0_2 = arith.constant 0 : index
    %3 = vector.load %arg2[%c0_1, %c0_2] : memref<512x128xbf16, #tpu.memory_space<vmem>>, vector<512x128xbf16>
    %cst = arith.constant dense<0.000000e+00> : vector<32x128xf32>
    %4 = tpu.matmul %2, %3, %cst {dimension_numbers = #tpu.dot_dimension_numbers<[1], [0], [0], [1], [0, 0, 1, 1], [], []>} : vector<32x512xbf16>, vector<512x128xbf16>, vector<32x128xf32> -> vector<32x128xf32>
    %5 = arith.index_cast %1 : i32 to index
    %c0_3 = arith.constant 0 : index
    %6 = vector.load %arg8[%5, %c0_3] : memref<32x128xf32, #tpu.memory_space<vmem>>, vector<32x128xf32>
    tpu.vector_store %arg8[%5, %c0_3], %4 {strides = array<i32>} : memref<32x128xf32, #tpu.memory_space<vmem>>, vector<32x128xf32>,
    %c0_i32 = arith.constant 0 : i32
    %7 = arith.cmpi eq, %arg0, %c0_i32 : i32
    %8 = arith.extui %7 : i1 to i32
    %c0_i32_4 = arith.constant 0 : i32
    %9 = arith.cmpi ne, %8, %c0_i32_4 : i32
    scf.if %9 {
      %c0_5 = arith.constant 0 : index
      %c0_6 = arith.constant 0 : index
      %10 = vector.load %arg8[%c0_5, %c0_6] : memref<32x128xf32, #tpu.memory_space<vmem>>, vector<32x128xf32>
      %cst_7 = arith.constant dense<0.000000e+00> : vector<128xf32>
      %11 = vector.multi_reduction <add>, %10, %cst_7 [0] : vector<32x128xf32> to vector<128xf32>
      %12 = vector.shape_cast %11 : vector<128xf32> to vector<1x128xf32>
      %cst_8 = arith.constant 3.200000e+01 : f32
      %13 = vector.broadcast %cst_8 : f32 to vector<1x128xf32>
      %14 = arith.divf %12, %13 : vector<1x128xf32>
      %15 = vector.broadcast %14 : vector<1x128xf32> to vector<32x128xf32>
      %16 = arith.subf %10, %15 : vector<32x128xf32>
      %17 = arith.mulf %16, %16 : vector<32x128xf32>
      %cst_9 = arith.constant dense<0.000000e+00> : vector<128xf32>
      %18 = vector.multi_reduction <add>, %17, %cst_9 [0] : vector<32x128xf32> to vector<128xf32>
      %19 = vector.shape_cast %18 : vector<128xf32> to vector<1x128xf32>
      %cst_10 = arith.constant 3.200000e+01 : f32
      %20 = vector.broadcast %cst_10 : f32 to vector<1x128xf32>
      %21 = arith.divf %19, %20 : vector<1x128xf32>
      %cst_11 = arith.constant 9.99999974E-6 : f32
      %22 = vector.broadcast %cst_11 : f32 to vector<1x128xf32>
      %23 = arith.addf %21, %22 : vector<1x128xf32>
      %24 = math.rsqrt %23 : vector<1x128xf32>
      %c0_12 = arith.constant 0 : index
      %c0_13 = arith.constant 0 : index
      %25 = vector.load %arg3[%c0_12, %c0_13] : memref<1x128xf32, #tpu.memory_space<vmem>>, vector<1x128xf32>
      %26 = arith.mulf %24, %25 : vector<1x128xf32>
      %c0_14 = arith.constant 0 : index
      %c0_15 = arith.constant 0 : index
      %27 = vector.load %arg4[%c0_14, %c0_15] : memref<1x128xf32, #tpu.memory_space<vmem>>, vector<1x128xf32>
      %28 = arith.mulf %14, %26 : vector<1x128xf32>
      %29 = arith.subf %27, %28 : vector<1x128xf32>
      %30 = vector.broadcast %26 : vector<1x128xf32> to vector<32x128xf32>
      %31 = arith.mulf %10, %30 : vector<32x128xf32>
      %32 = vector.broadcast %29 : vector<1x128xf32> to vector<32x128xf32>
      %33 = arith.addf %31, %32 : vector<32x128xf32>
      %cst_16 = arith.constant 2.000000e-01 : f32
      %34 = vector.broadcast %cst_16 : f32 to vector<32x128xf32>
      %35 = arith.mulf %34, %33 : vector<32x128xf32>
      %36 = arith.maximumf %33, %35 : vector<32x128xf32>
      %c0_17 = arith.constant 0 : index
      %c0_18 = arith.constant 0 : index
      %37 = vector.load %arg6[%c0_17, %c0_18] : memref<8x32xf32, #tpu.memory_space<vmem>>, vector<8x32xf32>
      %c0_19 = arith.constant 0 : index
      %c0_20 = arith.constant 0 : index
      %38 = vector.load %arg5[%c0_19, %c0_20] : memref<32x128xf32, #tpu.memory_space<vmem>>, vector<32x128xf32>
      %39 = arith.mulf %36, %38 : vector<32x128xf32>
      %cst_21 = arith.constant dense<0.000000e+00> : vector<8x128xf32>
      %40 = tpu.matmul %37, %39, %cst_21 {dimension_numbers = #tpu.dot_dimension_numbers<[1], [0], [0], [1], [0, 0, 1, 1], [], []>} : vector<8x32xf32>, vector<32x128xf32>, vector<8x128xf32> -> vector<8x128xf32>
      %cst_22 = arith.constant dense<0.000000e+00> : vector<8xf32>
      %41 = vector.multi_reduction <add>, %40, %cst_22 [1] : vector<8x128xf32> to vector<8xf32>
      %42 = vector.shape_cast %41 : vector<8xf32> to vector<8x1xf32>
      %43 = math.absf %42 : vector<8x1xf32>
      %cst_23 = arith.constant 0.000000e+00 : f32
      %44 = vector.broadcast %cst_23 : f32 to vector<8x1xf32>
      %45 = arith.subf %44, %43 : vector<8x1xf32>
      %46 = math.exp %45 : vector<8x1xf32>
      %cst_24 = arith.constant 0.000000e+00 : f32
      %47 = vector.broadcast %cst_24 : f32 to vector<8x1xf32>
      %48 = arith.cmpf oge, %42, %47 : vector<8x1xf32>
      %cst_25 = arith.constant 1.000000e+00 : f32
      %49 = vector.broadcast %cst_25 : f32 to vector<8x1xf32>
      %50 = arith.addf %49, %46 : vector<8x1xf32>
      %cst_26 = arith.constant 1.000000e+00 : f32
      %51 = vector.broadcast %cst_26 : f32 to vector<8x1xf32>
      %52 = arith.divf %51, %50 : vector<8x1xf32>
      %cst_27 = arith.constant 1.000000e+00 : f32
      %53 = vector.broadcast %cst_27 : f32 to vector<8x1xf32>
      %54 = arith.addf %53, %46 : vector<8x1xf32>
      %55 = arith.divf %46, %54 : vector<8x1xf32>
      %56 = arith.select %48, %52, %55 : vector<8x1xi1>, vector<8x1xf32>
      %c0_28 = arith.constant 0 : index
      %c0_29 = arith.constant 0 : index
      %57 = vector.load %arg7[%c0_28, %c0_29] : memref<8x1xf32, #tpu.memory_space<vmem>>, vector<8x1xf32>
      tpu.vector_store %arg7[%c0_28, %c0_29], %56 {strides = array<i32>} : memref<8x1xf32, #tpu.memory_space<vmem>>, vector<8x1xf32>,
    } else {
    }
    return
  }
  func.func @transform_0(%arg0: i32) -> (i32, i32) {
    %c0_i32 = arith.constant 0 : i32
    %c0_i32_0 = arith.constant 0 : i32
    return %arg0, %c0_i32 : i32, i32
  }
  func.func @transform_1(%arg0: i32) -> (i32, i32) {
    %c0_i32 = arith.constant 0 : i32
    %c0_i32_0 = arith.constant 0 : i32
    %c0_i32_1 = arith.constant 0 : i32
    return %c0_i32, %c0_i32_0 : i32, i32
  }
  func.func @transform_2(%arg0: i32) -> (i32, i32) {
    %c0_i32 = arith.constant 0 : i32
    %c0_i32_0 = arith.constant 0 : i32
    %c0_i32_1 = arith.constant 0 : i32
    return %c0_i32, %c0_i32_0 : i32, i32
  }
  func.func @transform_3(%arg0: i32) -> (i32, i32) {
    %c0_i32 = arith.constant 0 : i32
    %c0_i32_0 = arith.constant 0 : i32
    %c0_i32_1 = arith.constant 0 : i32
    return %c0_i32, %c0_i32_0 : i32, i32
  }
  func.func @transform_4(%arg0: i32) -> (i32, i32) {
    %c0_i32 = arith.constant 0 : i32
    %c0_i32_0 = arith.constant 0 : i32
    %c0_i32_1 = arith.constant 0 : i32
    return %c0_i32, %c0_i32_0 : i32, i32
  }
  func.func @transform_5(%arg0: i32) -> (i32, i32) {
    %c0_i32 = arith.constant 0 : i32
    %c0_i32_0 = arith.constant 0 : i32
    %c0_i32_1 = arith.constant 0 : i32
    return %c0_i32, %c0_i32_0 : i32, i32
  }
  func.func @transform_6(%arg0: i32) -> (i32, i32) {
    %c0_i32 = arith.constant 0 : i32
    %c0_i32_0 = arith.constant 0 : i32
    %c0_i32_1 = arith.constant 0 : i32
    return %c0_i32, %c0_i32_0 : i32, i32
  }
}

</mosaic_0001>

<llo_original>
// kernel: netD_forward.4
$region0: #{netD_forward.4}
  #allocation0 [shape = 'u32[]', space=smem, size = 0x4, offset = 0x4, fixed_abs, tag = 'smem constant byte address 0x4 - core index']
  #allocation1 [shape = 'u32[144,128]{1,0:T(1,128)}', space=vmem, size = 0x12000, scoped, tag = 'internal scratch']
  %s0 = inlined_call_operand.vmem [shape: bf16[2048,48], index: 0, kind: input, shape index: {}]
  %s1 = inlined_call_operand.vmem [shape: bf16[48,128], index: 1, kind: input, shape index: {}]
  %s2 = inlined_call_operand.vmem [shape: bf16[2048,128], index: 2, kind: output, shape index: {}]
  %s3 = sld [smem:[#allocation0]]
  $region41: #{netD_forward.4} parent=0
    _
  %s5 = ssub.s32 1, %s3
  %s6 = scalar_select 0, %s5, %s3
  loop: start=0, step=1, limit=4
  $region2: #{netD_forward.4} parent=0 // loop_pre_header
    _
  $region3: #{netD_forward.4} parent=0 // loop_header
    %s8 = sphi 0, %s12
    %p9 = scmp.ge.s32.totalorder %s8, 4
    %s18 = sphi 0, %s20
    %s21 = sphi 0, %s18
    %s22 = sphi 0, %s21
    %s38 = sphi 0, %s22
    %s42 = sphi 0, %s42
    %s44 = sphi 0, %s42
    %s45 = sphi 0, %s44
    %s59 = sphi 0, %s45
    %s65 = sphi 0, %s67
    %s68 = sphi 0, %s65
    %s69 = sphi 0, %s68
    %s85 = sphi 0, %s69
  $region4: #{netD_forward.4} parent=0 // loop_header_branch
    %11 = sbr.rel (%p9) target = $region8
  $region5: #{netD_forward.4} parent=0 // loop_body
    %s13 = ssub.s32 %s8, 1
    %s14 = ssub.s32 %s8, 2
    %s15 = sadd.s32 %s8, 1
    %s16 = ssub.s32 %s8, %s15
    %p17 = scmp.eq.s32.totalorder %s16, 0
    %s19 = sadd.s32 %s18, 1
    %s20 = scalar_select %p17, %s18, %s19
    %p23 = pneg %p17
    %p24 = scmp.eq.s32.totalorder %s8, 1
    %p25 = por %p23, %p24
    %p26 = scmp.ne.s32.totalorder %s18, %s21
    %p27 = scmp.eq.s32.totalorder %s8, 0
    %p28 = por %p26, %p27
    %p29 = scmp.ne.s32.totalorder %s18, %s21
    %p30 = scmp.eq.s32.totalorder %s13, 1
    %p31 = por %p29, %p30
    %p32 = scmp.ne.s32.totalorder %s21, %s22
    %p33 = scmp.eq.s32.totalorder %s13, 0
    %p34 = por %p32, %p33
    %p35 = scmp.ne.s32.totalorder %s21, %s22
    %p36 = scmp.eq.s32.totalorder %s14, 1
    %p37 = por %p35, %p36
    %p39 = scmp.ne.s32.totalorder %s22, %s38
    %p40 = scmp.eq.s32.totalorder %s14, 0
    %p41 = por %p39, %p40
    %s43 = sadd.s32 %s42, 1
    %p46 = scmp.eq.s32.totalorder %s8, 1
    %p47 = scmp.ne.s32.totalorder %s42, %s44
    %p48 = scmp.eq.s32.totalorder %s8, 0
    %p49 = por %p47, %p48
    %p50 = scmp.ne.s32.totalorder %s42, %s44
    %p51 = scmp.eq.s32.totalorder %s13, 1
    %p52 = por %p50, %p51
    %p53 = scmp.ne.s32.totalorder %s44, %s45
    %p54 = scmp.eq.s32.totalorder %s13, 0
    %p55 = por %p53, %p54
    %p56 = scmp.ne.s32.totalorder %s44, %s45
    %p57 = scmp.eq.s32.totalorder %s14, 1
    %p58 = por %p56, %p57
    %p60 = scmp.ne.s32.totalorder %s45, %s59
    %p61 = scmp.eq.s32.totalorder %s14, 0
    %p62 = por %p60, %p61
    %s63 = ssub.s32 %s8, %s15
    %p64 = scmp.eq.s32.totalorder %s63, 0
    %s66 = sadd.s32 %s65, 1
    %s67 = scalar_select %p64, %s65, %s66
    %p70 = pneg %p64
    %p71 = scmp.eq.s32.totalorder %s8, 1
    %p72 = por %p70, %p71
    %p73 = scmp.ne.s32.totalorder %s65, %s68
    %p74 = scmp.eq.s32.totalorder %s8, 0
    %p75 = por %p73, %p74
    %p76 = scmp.ne.s32.totalorder %s65, %s68
    %p77 = scmp.eq.s32.totalorder %s13, 1
    %p78 = por %p76, %p77
    %p79 = scmp.ne.s32.totalorder %s68, %s69
    %p80 = scmp.eq.s32.totalorder %s13, 0
    %p81 = por %p79, %p80
    %p82 = scmp.ne.s32.totalorder %s68, %s69
    %p83 = scmp.eq.s32.totalorder %s14, 1
    %p84 = por %p82, %p83
    %p86 = scmp.ne.s32.totalorder %s69, %s85
    %p87 = scmp.eq.s32.totalorder %s14, 0
    %p88 = por %p86, %p87
    %p89 = scmp.le.s32.totalorder 1, %s8
    %p90 = scmp.lt.s32.totalorder %s8, 3
    %p91 = pnand %p89, %p90
    %p92 = pneg %p91
    // Predicated region
    $region9: #{netD_forward.4} parent=5 // pred_check
      _
    $region10: #{netD_forward.4} parent=5 // pred_check_branch
      %94 = sbr.rel (%p91) target = $region12
    $region11: #{netD_forward.4} parent=5 // pred_region
      %s95 = ssub.s32 %s8, 1
      // Predicated region
      $region13: #{netD_forward.4} parent=11 // pred_check
        %p96 = pneg %p55
      $region14: #{netD_forward.4} parent=11 // pred_check_branch
        %98 = sbr.rel (%p96) target = $region16
      $region15: #{netD_forward.4} parent=11 // pred_region
        _
      $region16: #{netD_forward.4} parent=11 // pred_fallthru
        _
    $region12: #{netD_forward.4} parent=5 // pred_fallthru
      _
    %p99 = scmp.lt.s32.totalorder %s8, 2
    // Predicated region
    $region17: #{netD_forward.4} parent=5 // pred_check
      %p100 = pneg %p99
    $region18: #{netD_forward.4} parent=5 // pred_check_branch
      %102 = sbr.rel (%p100) target = $region20
    $region19: #{netD_forward.4} parent=5 // pred_region
      // Predicated region
      $region21: #{netD_forward.4} parent=19 // pred_check
        %p103 = pneg %p28
      $region22: #{netD_forward.4} parent=19 // pred_check_branch
        %105 = sbr.rel (%p103) target = $region24
      $region23: #{netD_forward.4} parent=19 // pred_region
        %s106 = smul.u32 128, %s8
        %p107 = scmp.lt.s32.totalorder %s106, 255
        %s108 = scalar_select %p107, %s106, 255
        %s109 = smul.addr %s108, 4
        %s110 = scalar_lea.vmem %s0, %s109
        %s111 = smul.u32 128, %s8
      $region24: #{netD_forward.4} parent=19 // pred_fallthru
        _
    $region20: #{netD_forward.4} parent=5 // pred_fallthru
      _
    %p112 = scmp.le.s32.totalorder 1, %s8
    %p113 = scmp.lt.s32.totalorder %s8, 3
    %p114 = pnand %p112, %p113
    %p115 = pneg %p114
    // Predicated region
    $region25: #{netD_forward.4} parent=5 // pred_check
      _
    $region26: #{netD_forward.4} parent=5 // pred_check_branch
      %117 = sbr.rel (%p114) target = $region28
    $region27: #{netD_forward.4} parent=5 // pred_region
      %s118 = ssub.s32 %s8, 1
      %s119 = smul.u32 128, %s13
      %p120 = scmp.lt.s32.totalorder %s119, 255
      %s121 = scalar_select %p120, %s119, 255
      %s122 = smul.addr %s121, 4
      %s123 = scalar_lea.vmem %s0, %s122
      %p124 = pneg %p34
      %p125 = pneg %p31
      %p126 = pneg %p55
      %p127 = pneg %p52
      %p128 = pneg %p81
      %p129 = pneg %p78
      %s130 = smul.u32 128, %s13
      %p131 = scmp.lt.s32.totalorder %s130, 255
      %s132 = scalar_select %p131, %s130, 255
      %s133 = smul.addr %s132, 4
      %s134 = scalar_lea.vmem %s2, %s133
      %s135 = smul.u32 128, %s13
      %p136 = scmp.lt.s32.totalorder %s135, 255
      %s137 = scalar_select %p136, %s135, 255
      %s138 = smul.addr %s137, 4
      %s139 = scalar_lea.vmem %s0, %s138
      %s140 = smul.u32 128, %s13
      %s141 = smul.u32 128, %s13
      %p142 = scmp.lt.s32.totalorder %s141, 255
      %s143 = scalar_select %p142, %s141, 255
      %s144 = smul.addr %s143, 4
      %s145 = scalar_lea.vmem %s2, %s144
      %s146 = smul.u32 128, %s13
      %v148 = vld [vmem:[%s139] sm:$0xf]
      %v149 = vld [vmem:[%s139 + $0x4] sm:$0xf]
      %v150 = vld [vmem:[%s139 + $0x8] sm:$0xf]
      %v151 = vld [vmem:[%s139 + $0xc] sm:$0xf]
      %v152 = vld [vmem:[%s139 + $0x10] sm:$0xf]
      %v153 = vld [vmem:[%s139 + $0x14] sm:$0xf]
      %v154 = vld [vmem:[%s139 + $0x18] sm:$0xf]
      %v155 = vld [vmem:[%s139 + $0x1c] sm:$0xf]
      %v156 = vld [vmem:[%s139 + $0x20] sm:$0xf]
      %v157 = vld [vmem:[%s139 + $0x24] sm:$0xf]
      %v158 = vld [vmem:[%s139 + $0x28] sm:$0xf]
      %v159 = vld [vmem:[%s139 + $0x2c] sm:$0xf]
      %v160 = vld [vmem:[%s139 + $0x30] sm:$0xf]
      %v161 = vld [vmem:[%s139 + $0x34] sm:$0xf]
      %v162 = vld [vmem:[%s139 + $0x38] sm:$0xf]
      %v163 = vld [vmem:[%s139 + $0x3c] sm:$0xf]
      %v164 = vld [vmem:[%s139 + $0x40] sm:$0xf]
      %v165 = vld [vmem:[%s139 + $0x44] sm:$0xf]
      %v166 = vld [vmem:[%s139 + $0x48] sm:$0xf]
      %v167 = vld [vmem:[%s139 + $0x4c] sm:$0xf]
      %v168 = vld [vmem:[%s139 + $0x50] sm:$0xf]
      %v169 = vld [vmem:[%s139 + $0x54] sm:$0xf]
      %v170 = vld [vmem:[%s139 + $0x58] sm:$0xf]
      %v171 = vld [vmem:[%s139 + $0x5c] sm:$0xf]
      %v172 = vld [vmem:[%s139 + $0x60] sm:$0xf]
      %v173 = vld [vmem:[%s139 + $0x64] sm:$0xf]
      %v174 = vld [vmem:[%s139 + $0x68] sm:$0xf]
      %v175 = vld [vmem:[%s139 + $0x6c] sm:$0xf]
      %v176 = vld [vmem:[%s139 + $0x70] sm:$0xf]
      %v177 = vld [vmem:[%s139 + $0x74] sm:$0xf]
      %v178 = vld [vmem:[%s139 + $0x78] sm:$0xf]
      %v179 = vld [vmem:[%s139 + $0x7c] sm:$0xf]
      %v180 = vld [vmem:[%s139 + $0x80] sm:$0xf]
      %v181 = vld [vmem:[%s139 + $0x84] sm:$0xf]
      %v182 = vld [vmem:[%s139 + $0x88] sm:$0xf]
      %v183 = vld [vmem:[%s139 + $0x8c] sm:$0xf]
      %v184 = vld [vmem:[%s139 + $0x90] sm:$0xf]
      %v185 = vld [vmem:[%s139 + $0x94] sm:$0xf]
      %v186 = vld [vmem:[%s139 + $0x98] sm:$0xf]
      %v187 = vld [vmem:[%s139 + $0x9c] sm:$0xf]
      %v188 = vld [vmem:[%s139 + $0xa0] sm:$0xf]
      %v189 = vld [vmem:[%s139 + $0xa4] sm:$0xf]
      %v190 = vld [vmem:[%s139 + $0xa8] sm:$0xf]
      %v191 = vld [vmem:[%s139 + $0xac] sm:$0xf]
      %v192 = vld [vmem:[%s139 + $0xb0] sm:$0xf]
      %v193 = vld [vmem:[%s139 + $0xb4] sm:$0xf]
      %v194 = vld [vmem:[%s139 + $0xb8] sm:$0xf]
      %v195 = vld [vmem:[%s139 + $0xbc] sm:$0xf]
      %v196 = vld [vmem:[%s139 + $0xc0] sm:$0xf]
      %v197 = vld [vmem:[%s139 + $0xc4] sm:$0xf]
      %v198 = vld [vmem:[%s139 + $0xc8] sm:$0xf]
      %v199 = vld [vmem:[%s139 + $0xcc] sm:$0xf]
      %v200 = vld [vmem:[%s139 + $0xd0] sm:$0xf]
      %v201 = vld [vmem:[%s139 + $0xd4] sm:$0xf]
      %v202 = vld [vmem:[%s139 + $0xd8] sm:$0xf]
      %v203 = vld [vmem:[%s139 + $0xdc] sm:$0xf]
      %v204 = vld [vmem:[%s139 + $0xe0] sm:$0xf]
      %v205 = vld [vmem:[%s139 + $0xe4] sm:$0xf]
      %v206 = vld [vmem:[%s139 + $0xe8] sm:$0xf]
      %v207 = vld [vmem:[%s139 + $0xec] sm:$0xf]
      %v208 = vld [vmem:[%s139 + $0xf0] sm:$0xf]
      %v209 = vld [vmem:[%s139 + $0xf4] sm:$0xf]
      %v210 = vld [vmem:[%s139 + $0xf8] sm:$0xf]
      %v211 = vld [vmem:[%s139 + $0xfc] sm:$0xf]
      %v212 = vld [vmem:[%s139 + $0x100] sm:$0xf]
      %v213 = vld [vmem:[%s139 + $0x104] sm:$0xf]
      %v214 = vld [vmem:[%s139 + $0x108] sm:$0xf]
      %v215 = vld [vmem:[%s139 + $0x10c] sm:$0xf]
      %v216 = vld [vmem:[%s139 + $0x110] sm:$0xf]
      %v217 = vld [vmem:[%s139 + $0x114] sm:$0xf]
      %v218 = vld [vmem:[%s139 + $0x118] sm:$0xf]
      %v219 = vld [vmem:[%s139 + $0x11c] sm:$0xf]
      %v220 = vld [vmem:[%s139 + $0x120] sm:$0xf]
      %v221 = vld [vmem:[%s139 + $0x124] sm:$0xf]
      %v222 = vld [vmem:[%s139 + $0x128] sm:$0xf]
      %v223 = vld [vmem:[%s139 + $0x12c] sm:$0xf]
      %v224 = vld [vmem:[%s139 + $0x130] sm:$0xf]
      %v225 = vld [vmem:[%s139 + $0x134] sm:$0xf]
      %v226 = vld [vmem:[%s139 + $0x138] sm:$0xf]
      %v227 = vld [vmem:[%s139 + $0x13c] sm:$0xf]
      %v228 = vld [vmem:[%s139 + $0x140] sm:$0xf]
      %v229 = vld [vmem:[%s139 + $0x144] sm:$0xf]
      %v230 = vld [vmem:[%s139 + $0x148] sm:$0xf]
      %v231 = vld [vmem:[%s139 + $0x14c] sm:$0xf]
      %v232 = vld [vmem:[%s139 + $0x150] sm:$0xf]
      %v233 = vld [vmem:[%s139 + $0x154] sm:$0xf]
      %v234 = vld [vmem:[%s139 + $0x158] sm:$0xf]
      %v235 = vld [vmem:[%s139 + $0x15c] sm:$0xf]
      %v236 = vld [vmem:[%s139 + $0x160] sm:$0xf]
      %v237 = vld [vmem:[%s139 + $0x164] sm:$0xf]
      %v238 = vld [vmem:[%s139 + $0x168] sm:$0xf]
      %v239 = vld [vmem:[%s139 + $0x16c] sm:$0xf]
      %v240 = vld [vmem:[%s139 + $0x170] sm:$0xf]
      %v241 = vld [vmem:[%s139 + $0x174] sm:$0xf]
      %v242 = vld [vmem:[%s139 + $0x178] sm:$0xf]
      %v243 = vld [vmem:[%s139 + $0x17c] sm:$0xf]
      %v244 = vld [vmem:[%s139 + $0x180] sm:$0xf]
      %v245 = vld [vmem:[%s139 + $0x184] sm:$0xf]
      %v246 = vld [vmem:[%s139 + $0x188] sm:$0xf]
      %v247 = vld [vmem:[%s139 + $0x18c] sm:$0xf]
      %v248 = vld [vmem:[%s139 + $0x190] sm:$0xf]
      %v249 = vld [vmem:[%s139 + $0x194] sm:$0xf]
      %v250 = vld [vmem:[%s139 + $0x198] sm:$0xf]
      %v251 = vld [vmem:[%s139 + $0x19c] sm:$0xf]
      %v252 = vld [vmem:[%s139 + $0x1a0] sm:$0xf]
      %v253 = vld [vmem:[%s139 + $0x1a4] sm:$0xf]
      %v254 = vld [vmem:[%s139 + $0x1a8] sm:$0xf]
      %v255 = vld [vmem:[%s139 + $0x1ac] sm:$0xf]
      %v256 = vld [vmem:[%s139 + $0x1b0] sm:$0xf]
      %v257 = vld [vmem:[%s139 + $0x1b4] sm:$0xf]
      %v258 = vld [vmem:[%s139 + $0x1b8] sm:$0xf]
      %v259 = vld [vmem:[%s139 + $0x1bc] sm:$0xf]
      %v260 = vld [vmem:[%s139 + $0x1c0] sm:$0xf]
      %v261 = vld [vmem:[%s139 + $0x1c4] sm:$0xf]
      %v262 = vld [vmem:[%s139 + $0x1c8] sm:$0xf]
      %v263 = vld [vmem:[%s139 + $0x1cc] sm:$0xf]
      %v264 = vld [vmem:[%s139 + $0x1d0] sm:$0xf]
      %v265 = vld [vmem:[%s139 + $0x1d4] sm:$0xf]
      %v266 = vld [vmem:[%s139 + $0x1d8] sm:$0xf]
      %v267 = vld [vmem:[%s139 + $0x1dc] sm:$0xf]
      %v268 = vld [vmem:[%s139 + $0x1e0] sm:$0xf]
      %v269 = vld [vmem:[%s139 + $0x1e4] sm:$0xf]
      %v270 = vld [vmem:[%s139 + $0x1e8] sm:$0xf]
      %v271 = vld [vmem:[%s139 + $0x1ec] sm:$0xf]
      %v272 = vld [vmem:[%s139 + $0x1f0] sm:$0xf]
      %v273 = vld [vmem:[%s139 + $0x1f4] sm:$0xf]
      %v274 = vld [vmem:[%s139 + $0x1f8] sm:$0xf]
      %v275 = vld [vmem:[%s139 + $0x1fc] sm:$0xf]
      %v276 = vld [vmem:[%s1] sm:$0xf]
      %v277 = vld [vmem:[%s1 + $0x4] sm:$0xf]
      %v278 = vld [vmem:[%s1 + $0x8] sm:$0xf]
      %v279 = vld [vmem:[%s1 + $0xc] sm:$0xf]
      %v280 = vld [vmem:[%s1 + $0x10] sm:$0xf]
      %v281 = vld [vmem:[%s1 + $0x14] sm:$0xf]
      %v410 = vunpack.c.l.b16 %v148
      %v411 = vunpack.c.l.b16 %v149
      %v412 = vunpack.c.l.b16 %v150
      %v413 = vunpack.c.l.b16 %v151
      %v414 = vunpack.c.l.b16 %v152
      %v415 = vunpack.c.l.b16 %v153
      %v416 = vunpack.c.l.b16 %v154
      %v417 = vunpack.c.l.b16 %v155
      %v418 = vunpack.c.l.b16 %v156
      %v419 = vunpack.c.l.b16 %v157
      %v420 = vunpack.c.l.b16 %v158
      %v421 = vunpack.c.l.b16 %v159
      %v422 = vunpack.c.l.b16 %v160
      %v423 = vunpack.c.l.b16 %v161
      %v424 = vunpack.c.l.b16 %v162
      %v425 = vunpack.c.l.b16 %v163
      %v426 = vunpack.c.l.b16 %v164
      %v427 = vunpack.c.l.b16 %v165
      %v428 = vunpack.c.l.b16 %v166
      %v429 = vunpack.c.l.b16 %v167
      %v430 = vunpack.c.l.b16 %v168
      %v431 = vunpack.c.l.b16 %v169
      %v432 = vunpack.c.l.b16 %v170
      %v433 = vunpack.c.l.b16 %v171
      %v434 = vunpack.c.l.b16 %v172
      %v435 = vunpack.c.l.b16 %v173
      %v436 = vunpack.c.l.b16 %v174
      %v437 = vunpack.c.l.b16 %v175
      %v438 = vunpack.c.l.b16 %v176
      %v439 = vunpack.c.l.b16 %v177
      %v440 = vunpack.c.l.b16 %v178
      %v441 = vunpack.c.l.b16 %v179
      %v442 = vunpack.c.l.b16 %v180
      %v443 = vunpack.c.l.b16 %v181
      %v444 = vunpack.c.l.b16 %v182
      %v445 = vunpack.c.l.b16 %v183
      %v446 = vunpack.c.l.b16 %v184
      %v447 = vunpack.c.l.b16 %v185
      %v448 = vunpack.c.l.b16 %v186
      %v449 = vunpack.c.l.b16 %v187
      %v450 = vunpack.c.l.b16 %v188
      %v451 = vunpack.c.l.b16 %v189
      %v452 = vunpack.c.l.b16 %v190
      %v453 = vunpack.c.l.b16 %v191
      %v454 = vunpack.c.l.b16 %v192
      %v455 = vunpack.c.l.b16 %v193
      %v456 = vunpack.c.l.b16 %v194
      %v457 = vunpack.c.l.b16 %v195
      %v458 = vunpack.c.l.b16 %v196
      %v459 = vunpack.c.l.b16 %v197
      %v460 = vunpack.c.l.b16 %v198
      %v461 = vunpack.c.l.b16 %v199
      %v462 = vunpack.c.l.b16 %v200
      %v463 = vunpack.c.l.b16 %v201
      %v464 = vunpack.c.l.b16 %v202
      %v465 = vunpack.c.l.b16 %v203
      %v466 = vunpack.c.l.b16 %v204
      %v467 = vunpack.c.l.b16 %v205
      %v468 = vunpack.c.l.b16 %v206
      %v469 = vunpack.c.l.b16 %v207
      %v470 = vunpack.c.l.b16 %v208
      %v471 = vunpack.c.l.b16 %v209
      %v472 = vunpack.c.l.b16 %v210
      %v473 = vunpack.c.l.b16 %v211
      %v474 = vunpack.c.l.b16 %v212
      %v475 = vunpack.c.l.b16 %v213
      %v476 = vunpack.c.l.b16 %v214
      %v477 = vunpack.c.l.b16 %v215
      %v478 = vunpack.c.l.b16 %v216
      %v479 = vunpack.c.l.b16 %v217
      %v480 = vunpack.c.l.b16 %v218
      %v481 = vunpack.c.l.b16 %v219
      %v482 = vunpack.c.l.b16 %v220
      %v483 = vunpack.c.l.b16 %v221
      %v484 = vunpack.c.l.b16 %v222
      %v485 = vunpack.c.l.b16 %v223
      %v486 = vunpack.c.l.b16 %v224
      %v487 = vunpack.c.l.b16 %v225
      %v488 = vunpack.c.l.b16 %v226
      %v489 = vunpack.c.l.b16 %v227
      %v490 = vunpack.c.l.b16 %v228
      %v491 = vunpack.c.l.b16 %v229
      %v492 = vunpack.c.l.b16 %v230
      %v493 = vunpack.c.l.b16 %v231
      %v494 = vunpack.c.l.b16 %v232
      %v495 = vunpack.c.l.b16 %v233
      %v496 = vunpack.c.l.b16 %v234
      %v497 = vunpack.c.l.b16 %v235
      %v498 = vunpack.c.l.b16 %v236
      %v499 = vunpack.c.l.b16 %v237
      %v500 = vunpack.c.l.b16 %v238
      %v501 = vunpack.c.l.b16 %v239
      %v502 = vunpack.c.l.b16 %v240
      %v503 = vunpack.c.l.b16 %v241
      %v504 = vunpack.c.l.b16 %v242
      %v505 = vunpack.c.l.b16 %v243
      %v506 = vunpack.c.l.b16 %v244
      %v507 = vunpack.c.l.b16 %v245
      %v508 = vunpack.c.l.b16 %v246
      %v509 = vunpack.c.l.b16 %v247
      %v510 = vunpack.c.l.b16 %v248
      %v511 = vunpack.c.l.b16 %v249
      %v512 = vunpack.c.l.b16 %v250
      %v513 = vunpack.c.l.b16 %v251
      %v514 = vunpack.c.l.b16 %v252
      %v515 = vunpack.c.l.b16 %v253
      %v516 = vunpack.c.l.b16 %v254
      %v517 = vunpack.c.l.b16 %v255
      %v518 = vunpack.c.l.b16 %v256
      %v519 = vunpack.c.l.b16 %v257
      %v520 = vunpack.c.l.b16 %v258
      %v521 = vunpack.c.l.b16 %v259
      %v522 = vunpack.c.l.b16 %v260
      %v523 = vunpack.c.l.b16 %v261
      %v524 = vunpack.c.l.b16 %v262
      %v525 = vunpack.c.l.b16 %v263
      %v526 = vunpack.c.l.b16 %v264
      %v527 = vunpack.c.l.b16 %v265
      %v528 = vunpack.c.l.b16 %v266
      %v529 = vunpack.c.l.b16 %v267
      %v530 = vunpack.c.l.b16 %v268
      %v531 = vunpack.c.l.b16 %v269
      %v532 = vunpack.c.l.b16 %v270
      %v533 = vunpack.c.l.b16 %v271
      %v534 = vunpack.c.l.b16 %v272
      %v535 = vunpack.c.l.b16 %v273
      %v536 = vunpack.c.l.b16 %v274
      %v537 = vunpack.c.l.b16 %v275
      %v538 = vpack.c.b16 %v411, %v410
      %v539 = vpack.c.b16 %v413, %v412
      %v540 = vpack.c.b16 %v415, %v414
      %v541 = vpack.c.b16 %v417, %v416
      %v542 = vpack.c.b16 %v419, %v418
      %v543 = vpack.c.b16 %v421, %v420
      %v544 = vpack.c.b16 %v423, %v422
      %v545 = vpack.c.b16 %v425, %v424
      %v546 = vpack.c.b16 %v427, %v426
      %v547 = vpack.c.b16 %v429, %v428
      %v548 = vpack.c.b16 %v431, %v430
      %v549 = vpack.c.b16 %v433, %v432
      %v550 = vpack.c.b16 %v435, %v434
      %v551 = vpack.c.b16 %v437, %v436
      %v552 = vpack.c.b16 %v439, %v438
      %v553 = vpack.c.b16 %v441, %v440
      %v554 = vpack.c.b16 %v443, %v442
      %v555 = vpack.c.b16 %v445, %v444
      %v556 = vpack.c.b16 %v447, %v446
      %v557 = vpack.c.b16 %v449, %v448
      %v558 = vpack.c.b16 %v451, %v450
      %v559 = vpack.c.b16 %v453, %v452
      %v560 = vpack.c.b16 %v455, %v454
      %v561 = vpack.c.b16 %v457, %v456
      %v562 = vpack.c.b16 %v459, %v458
      %v563 = vpack.c.b16 %v461, %v460
      %v564 = vpack.c.b16 %v463, %v462
      %v565 = vpack.c.b16 %v465, %v464
      %v566 = vpack.c.b16 %v467, %v466
      %v567 = vpack.c.b16 %v469, %v468
      %v568 = vpack.c.b16 %v471, %v470
      %v569 = vpack.c.b16 %v473, %v472
      %v570 = vpack.c.b16 %v475, %v474
      %v571 = vpack.c.b16 %v477, %v476
      %v572 = vpack.c.b16 %v479, %v478
      %v573 = vpack.c.b16 %v481, %v480
      %v574 = vpack.c.b16 %v483, %v482
      %v575 = vpack.c.b16 %v485, %v484
      %v576 = vpack.c.b16 %v487, %v486
      %v577 = vpack.c.b16 %v489, %v488
      %v578 = vpack.c.b16 %v491, %v490
      %v579 = vpack.c.b16 %v493, %v492
      %v580 = vpack.c.b16 %v495, %v494
      %v581 = vpack.c.b16 %v497, %v496
      %v582 = vpack.c.b16 %v499, %v498
      %v583 = vpack.c.b16 %v501, %v500
      %v584 = vpack.c.b16 %v503, %v502
      %v585 = vpack.c.b16 %v505, %v504
      %v586 = vpack.c.b16 %v507, %v506
      %v587 = vpack.c.b16 %v509, %v508
      %v588 = vpack.c.b16 %v511, %v510
      %v589 = vpack.c.b16 %v513, %v512
      %v590 = vpack.c.b16 %v515, %v514
      %v591 = vpack.c.b16 %v517, %v516
      %v592 = vpack.c.b16 %v519, %v518
      %v593 = vpack.c.b16 %v521, %v520
      %v594 = vpack.c.b16 %v523, %v522
      %v595 = vpack.c.b16 %v525, %v524
      %v596 = vpack.c.b16 %v527, %v526
      %v597 = vpack.c.b16 %v529, %v528
      %v598 = vpack.c.b16 %v531, %v530
      %v599 = vpack.c.b16 %v533, %v532
      %v600 = vpack.c.b16 %v535, %v534
      %v601 = vpack.c.b16 %v537, %v536
      %v608 = vunpack.c.l.b16 %v276
      %v609 = vunpack.c.l.b16 %v277
      %v610 = vunpack.c.l.b16 %v278
      %v611 = vunpack.c.l.b16 %v279
      %v612 = vunpack.c.l.b16 %v280
      %v613 = vunpack.c.l.b16 %v281
      %v614 = vpack.c.b16 %v609, %v608
      %v615 = vpack.c.b16 %v611, %v610
      %v616 = vpack.c.b16 %v613, %v612
      %vm620 = vcmask 392192
      %v622 = vsel %vm620, %v538, 0
      %v625 = vsel %vm620, %v539, 0
      %v628 = vsel %vm620, %v540, 0
      %v631 = vsel %vm620, %v541, 0
      %v634 = vsel %vm620, %v542, 0
      %v637 = vsel %vm620, %v543, 0
      %v640 = vsel %vm620, %v544, 0
      %v643 = vsel %vm620, %v545, 0
      %v646 = vsel %vm620, %v546, 0
      %v649 = vsel %vm620, %v547, 0
      %v652 = vsel %vm620, %v548, 0
      %v655 = vsel %vm620, %v549, 0
      %v658 = vsel %vm620, %v550, 0
      %v661 = vsel %vm620, %v551, 0
      %v664 = vsel %vm620, %v552, 0
      %v667 = vsel %vm620, %v553, 0
      %v670 = vsel %vm620, %v554, 0
      %v673 = vsel %vm620, %v555, 0
      %v676 = vsel %vm620, %v556, 0
      %v679 = vsel %vm620, %v557, 0
      %v682 = vsel %vm620, %v558, 0
      %v685 = vsel %vm620, %v559, 0
      %v688 = vsel %vm620, %v560, 0
      %v691 = vsel %vm620, %v561, 0
      %v694 = vsel %vm620, %v562, 0
      %v697 = vsel %vm620, %v563, 0
      %v700 = vsel %vm620, %v564, 0
      %v703 = vsel %vm620, %v565, 0
      %v706 = vsel %vm620, %v566, 0
      %v709 = vsel %vm620, %v567, 0
      %v712 = vsel %vm620, %v568, 0
      %v715 = vsel %vm620, %v569, 0
      %v718 = vsel %vm620, %v570, 0
      %v721 = vsel %vm620, %v571, 0
      %v724 = vsel %vm620, %v572, 0
      %v727 = vsel %vm620, %v573, 0
      %v730 = vsel %vm620, %v574, 0
      %v733 = vsel %vm620, %v575, 0
      %v736 = vsel %vm620, %v576, 0
      %v739 = vsel %vm620, %v577, 0
      %v742 = vsel %vm620, %v578, 0
      %v745 = vsel %vm620, %v579, 0
      %v748 = vsel %vm620, %v580, 0
      %v751 = vsel %vm620, %v581, 0
      %v754 = vsel %vm620, %v582, 0
      %v757 = vsel %vm620, %v583, 0
      %v760 = vsel %vm620, %v584, 0
      %v763 = vsel %vm620, %v585, 0
      %v766 = vsel %vm620, %v586, 0
      %v769 = vsel %vm620, %v587, 0
      %v772 = vsel %vm620, %v588, 0
      %v775 = vsel %vm620, %v589, 0
      %v778 = vsel %vm620, %v590, 0
      %v781 = vsel %vm620, %v591, 0
      %v784 = vsel %vm620, %v592, 0
      %v787 = vsel %vm620, %v593, 0
      %v790 = vsel %vm620, %v594, 0
      %v793 = vsel %vm620, %v595, 0
      %v796 = vsel %vm620, %v596, 0
      %v799 = vsel %vm620, %v597, 0
      %v802 = vsel %vm620, %v598, 0
      %v805 = vsel %vm620, %v599, 0
      %v808 = vsel %vm620, %v600, 0
      %v811 = vsel %vm620, %v601, 0
      %813 = vmatprep.subr.bf16.mxu0 0
      %814 = vmatpush1.bf16.msra.mxu0 %v614
      %815 = vmatprep.subr.bf16.mxu0 0
      %816 = vmatpush1.bf16.msra.mxu0 %v615
      %817 = vmatprep.subr.bf16.mxu0 0
      %818 = vmatpush1.bf16.msra.mxu0 %v616
      %819 = vmatprep.subr.bf16.mxu0 0
      %820 = vmatpush1.bf16.msra.mxu0 0
      %821 = vmatprep.subr.bf16.mxu0 0
      %822 = vmatpush1.bf16.msra.mxu0 0
      %823 = vmatprep.subr.bf16.mxu0 0
      %824 = vmatpush1.bf16.msra.mxu0 0
      %825 = vmatprep.subr.bf16.mxu0 0
      %826 = vmatpush1.bf16.msra.mxu0 0
      %827 = vmatprep.subr.bf16.mxu0 0
      %828 = vmatpush1.bf16.msra.mxu0 0
      %829 = vmatprep.subr.bf16.mxu0 0
      %830 = vmatpush1.bf16.msra.mxu0 0
      %831 = vmatprep.subr.bf16.mxu0 0
      %832 = vmatpush1.bf16.msra.mxu0 0
      %833 = vmatprep.subr.bf16.mxu0 0
      %834 = vmatpush1.bf16.msra.mxu0 0
      %835 = vmatprep.subr.bf16.mxu0 0
      %836 = vmatpush1.bf16.msra.mxu0 0
      %837 = vmatprep.subr.bf16.mxu0 0
      %838 = vmatpush1.bf16.msra.mxu0 0
      %839 = vmatprep.subr.bf16.mxu0 0
      %840 = vmatpush1.bf16.msra.mxu0 0
      %841 = vmatprep.subr.bf16.mxu0 0
      %842 = vmatpush1.bf16.msra.mxu0 0
      %843 = vmatprep.subr.bf16.mxu0 0
      %844 = vmatpush1.bf16.msra.mxu0 0
      %845 = vmatprep.mubr.bf16.mxu0 0
      %846 = vmatmul.mubr.bf16.gmra.mrb[0].mxu0 %v622
      %v847 = vpop.f32.mrb[0].mxu0
      %v848 = vadd.f32 0.0, %v847
      %v849 = vpop.f32.mrb[0].mxu0
      %v850 = vpop.f32.mrb[0].mxu0
      %v851 = vadd.f32 0.0, %v850
      %v852 = vpop.f32.mrb[0].mxu0
      %853 = vmatprep.mubr.bf16.mxu0 0
      %854 = vmatmul.mubr.bf16.gmra.mrb[0].mxu0 %v625
      %v855 = vpop.f32.mrb[0].mxu0
      %v856 = vadd.f32 0.0, %v855
      %v857 = vpop.f32.mrb[0].mxu0
      %v858 = vpop.f32.mrb[0].mxu0
      %v859 = vadd.f32 0.0, %v858
      %v860 = vpop.f32.mrb[0].mxu0
      %861 = vmatprep.mubr.bf16.mxu0 0
      %862 = vmatmul.mubr.bf16.gmra.mrb[0].mxu0 %v628
      %v863 = vpop.f32.mrb[0].mxu0
      %v864 = vadd.f32 0.0, %v863
      %v865 = vpop.f32.mrb[0].mxu0
      %v866 = vpop.f32.mrb[0].mxu0
      %v867 = vadd.f32 0.0, %v866
      %v868 = vpop.f32.mrb[0].mxu0
      %869 = vmatprep.mubr.bf16.mxu0 0
      %870 = vmatmul.mubr.bf16.gmra.mrb[0].mxu0 %v631
      %v871 = vpop.f32.mrb[0].mxu0
      %v872 = vadd.f32 0.0, %v871
      %v873 = vpop.f32.mrb[0].mxu0
      %v874 = vpop.f32.mrb[0].mxu0
      %v875 = vadd.f32 0.0, %v874
      %v876 = vpop.f32.mrb[0].mxu0
      %877 = vmatprep.mubr.bf16.mxu0 0
      %878 = vmatmul.mubr.bf16.gmra.mrb[0].mxu0 %v634
      %v879 = vpop.f32.mrb[0].mxu0
      %v880 = vadd.f32 0.0, %v879
      %v881 = vpop.f32.mrb[0].mxu0
      %v882 = vpop.f32.mrb[0].mxu0
      %v883 = vadd.f32 0.0, %v882
      %v884 = vpop.f32.mrb[0].mxu0
      %885 = vmatprep.mubr.bf16.mxu0 0
      %886 = vmatmul.mubr.bf16.gmra.mrb[0].mxu0 %v637
      %v887 = vpop.f32.mrb[0].mxu0
      %v888 = vadd.f32 0.0, %v887
      %v889 = vpop.f32.mrb[0].mxu0
      %v890 = vpop.f32.mrb[0].mxu0
      %v891 = vadd.f32 0.0, %v890
      %v892 = vpop.f32.mrb[0].mxu0
      %893 = vmatprep.mubr.bf16.mxu0 0
      %894 = vmatmul.mubr.bf16.gmra.mrb[0].mxu0 %v640
      %v895 = vpop.f32.mrb[0].mxu0
      %v896 = vadd.f32 0.0, %v895
      %v897 = vpop.f32.mrb[0].mxu0
      %v898 = vpop.f32.mrb[0].mxu0
      %v899 = vadd.f32 0.0, %v898
      %v900 = vpop.f32.mrb[0].mxu0
      %901 = vmatprep.mubr.bf16.mxu0 0
      %902 = vmatmul.mubr.bf16.gmra.mrb[0].mxu0 %v643
      %v903 = vpop.f32.mrb[0].mxu0
      %v904 = vadd.f32 0.0, %v903
      %v905 = vpop.f32.mrb[0].mxu0
      %v906 = vpop.f32.mrb[0].mxu0
      %v907 = vadd.f32 0.0, %v906
      %v908 = vpop.f32.mrb[0].mxu0
      %909 = vmatprep.mubr.bf16.mxu0 0
      %910 = vmatmul.mubr.bf16.gmra.mrb[0].mxu0 %v646
      %v911 = vpop.f32.mrb[0].mxu0
      %v912 = vadd.f32 0.0, %v911
      %v913 = vpop.f32.mrb[0].mxu0
      %v914 = vpop.f32.mrb[0].mxu0
      %v915 = vadd.f32 0.0, %v914
      %v916 = vpop.f32.mrb[0].mxu0
      %917 = vmatprep.mubr.bf16.mxu0 0
      %918 = vmatmul.mubr.bf16.gmra.mrb[0].mxu0 %v649
      %v919 = vpop.f32.mrb[0].mxu0
      %v920 = vadd.f32 0.0, %v919
      %v921 = vpop.f32.mrb[0].mxu0
      %v922 = vpop.f32.mrb[0].mxu0
      %v923 = vadd.f32 0.0, %v922
      %v924 = vpop.f32.mrb[0].mxu0
      %925 = vmatprep.mubr.bf16.mxu0 0
      %926 = vmatmul.mubr.bf16.gmra.mrb[0].mxu0 %v652
      %v927 = vpop.f32.mrb[0].mxu0
      %v928 = vadd.f32 0.0, %v927
      %v929 = vpop.f32.mrb[0].mxu0
      %v930 = vpop.f32.mrb[0].mxu0
      %v931 = vadd.f32 0.0, %v930
      %v932 = vpop.f32.mrb[0].mxu0
      %933 = vmatprep.mubr.bf16.mxu0 0
      %934 = vmatmul.mubr.bf16.gmra.mrb[0].mxu0 %v655
      %v935 = vpop.f32.mrb[0].mxu0
      %v936 = vadd.f32 0.0, %v935
      %v937 = vpop.f32.mrb[0].mxu0
      %v938 = vpop.f32.mrb[0].mxu0
      %v939 = vadd.f32 0.0, %v938
      %v940 = vpop.f32.mrb[0].mxu0
      %941 = vmatprep.mubr.bf16.mxu0 0
      %942 = vmatmul.mubr.bf16.gmra.mrb[0].mxu0 %v658
      %v943 = vpop.f32.mrb[0].mxu0
      %v944 = vadd.f32 0.0, %v943
      %v945 = vpop.f32.mrb[0].mxu0
      %v946 = vpop.f32.mrb[0].mxu0
      %v947 = vadd.f32 0.0, %v946
      %v948 = vpop.f32.mrb[0].mxu0
      %949 = vmatprep.mubr.bf16.mxu0 0
      %950 = vmatmul.mubr.bf16.gmra.mrb[0].mxu0 %v661
      %v951 = vpop.f32.mrb[0].mxu0
      %v952 = vadd.f32 0.0, %v951
      %v953 = vpop.f32.mrb[0].mxu0
      %v954 = vpop.f32.mrb[0].mxu0
      %v955 = vadd.f32 0.0, %v954
      %v956 = vpop.f32.mrb[0].mxu0
      %957 = vmatprep.mubr.bf16.mxu0 0
      %958 = vmatmul.mubr.bf16.gmra.mrb[0].mxu0 %v664
      %v959 = vpop.f32.mrb[0].mxu0
      %v960 = vadd.f32 0.0, %v959
      %v961 = vpop.f32.mrb[0].mxu0
      %v962 = vpop.f32.mrb[0].mxu0
      %v963 = vadd.f32 0.0, %v962
      %v964 = vpop.f32.mrb[0].mxu0
      %965 = vmatprep.mubr.bf16.mxu0 0
      %966 = vmatmul.mubr.bf16.gmra.mrb[0].mxu0 %v667
      %v967 = vpop.f32.mrb[0].mxu0
      %v968 = vadd.f32 0.0, %v967
      %v969 = vpop.f32.mrb[0].mxu0
      %v970 = vpop.f32.mrb[0].mxu0
      %v971 = vadd.f32 0.0, %v970
      %v972 = vpop.f32.mrb[0].mxu0
      %973 = vmatprep.mubr.bf16.mxu0 0
      %974 = vmatmul.mubr.bf16.gmra.mrb[0].mxu0 %v670
      %v975 = vpop.f32.mrb[0].mxu0
      %v976 = vadd.f32 0.0, %v975
      %v977 = vpop.f32.mrb[0].mxu0
      %v978 = vpop.f32.mrb[0].mxu0
      %v979 = vadd.f32 0.0, %v978
      %v980 = vpop.f32.mrb[0].mxu0
      %981 = vmatprep.mubr.bf16.mxu0 0
      %982 = vmatmul.mubr.bf16.gmra.mrb[0].mxu0 %v673
      %v983 = vpop.f32.mrb[0].mxu0
      %v984 = vadd.f32 0.0, %v983
      %v985 = vpop.f32.mrb[0].mxu0
      %v986 = vpop.f32.mrb[0].mxu0
      %v987 = vadd.f32 0.0, %v986
      %v988 = vpop.f32.mrb[0].mxu0
      %989 = vmatprep.mubr.bf16.mxu0 0
      %990 = vmatmul.mubr.bf16.gmra.mrb[0].mxu0 %v676
      %v991 = vpop.f32.mrb[0].mxu0
      %v992 = vadd.f32 0.0, %v991
      %v993 = vpop.f32.mrb[0].mxu0
      %v994 = vpop.f32.mrb[0].mxu0
      %v995 = vadd.f32 0.0, %v994
      %v996 = vpop.f32.mrb[0].mxu0
      %997 = vmatprep.mubr.bf16.mxu0 0
      %998 = vmatmul.mubr.bf16.gmra.mrb[0].mxu0 %v679
      %v999 = vpop.f32.mrb[0].mxu0
      %v1000 = vadd.f32 0.0, %v999
      %v1001 = vpop.f32.mrb[0].mxu0
      %v1002 = vpop.f32.mrb[0].mxu0
      %v1003 = vadd.f32 0.0, %v1002
      %v1004 = vpop.f32.mrb[0].mxu0
      %1005 = vmatprep.mubr.bf16.mxu0 0
      %1006 = vmatmul.mubr.bf16.gmra.mrb[0].mxu0 %v682
      %v1007 = vpop.f32.mrb[0].mxu0
      %v1008 = vadd.f32 0.0, %v1007
      %v1009 = vpop.f32.mrb[0].mxu0
      %v1010 = vpop.f32.mrb[0].mxu0
      %v1011 = vadd.f32 0.0, %v1010
      %v1012 = vpop.f32.mrb[0].mxu0
      %1013 = vmatprep.mubr.bf16.mxu0 0
      %1014 = vmatmul.mubr.bf16.gmra.mrb[0].mxu0 %v685
      %v1015 = vpop.f32.mrb[0].mxu0
      %v1016 = vadd.f32 0.0, %v1015
      %v1017 = vpop.f32.mrb[0].mxu0
      %v1018 = vpop.f32.mrb[0].mxu0
      %v1019 = vadd.f32 0.0, %v1018
      %v1020 = vpop.f32.mrb[0].mxu0
      %1021 = vmatprep.mubr.bf16.mxu0 0
      %1022 = vmatmul.mubr.bf16.gmra.mrb[0].mxu0 %v688
      %v1023 = vpop.f32.mrb[0].mxu0
      %v1024 = vadd.f32 0.0, %v1023
      %v1025 = vpop.f32.mrb[0].mxu0
      %v1026 = vpop.f32.mrb[0].mxu0
      %v1027 = vadd.f32 0.0, %v1026
      %v1028 = vpop.f32.mrb[0].mxu0
      %1029 = vmatprep.mubr.bf16.mxu0 0
      %1030 = vmatmul.mubr.bf16.gmra.mrb[0].mxu0 %v691
      %v1031 = vpop.f32.mrb[0].mxu0
      %v1032 = vadd.f32 0.0, %v1031
      %v1033 = vpop.f32.mrb[0].mxu0
      %v1034 = vpop.f32.mrb[0].mxu0
      %v1035 = vadd.f32 0.0, %v1034
      %v1036 = vpop.f32.mrb[0].mxu0
      %1037 = vmatprep.mubr.bf16.mxu0 0
      %1038 = vmatmul.mubr.bf16.gmra.mrb[0].mxu0 %v694
      %v1039 = vpop.f32.mrb[0].mxu0
      %v1040 = vadd.f32 0.0, %v1039
      %v1041 = vpop.f32.mrb[0].mxu0
      %v1042 = vpop.f32.mrb[0].mxu0
      %v1043 = vadd.f32 0.0, %v1042
      %v1044 = vpop.f32.mrb[0].mxu0
      %1045 = vmatprep.mubr.bf16.mxu0 0
      %1046 = vmatmul.mubr.bf16.gmra.mrb[0].mxu0 %v697
      %v1047 = vpop.f32.mrb[0].mxu0
      %v1048 = vadd.f32 0.0, %v1047
      %v1049 = vpop.f32.mrb[0].mxu0
      %v1050 = vpop.f32.mrb[0].mxu0
      %v1051 = vadd.f32 0.0, %v1050
      %v1052 = vpop.f32.mrb[0].mxu0
      %1053 = vmatprep.mubr.bf16.mxu0 0
      %1054 = vmatmul.mubr.bf16.gmra.mrb[0].mxu0 %v700
      %v1055 = vpop.f32.mrb[0].mxu0
      %v1056 = vadd.f32 0.0, %v1055
      %v1057 = vpop.f32.mrb[0].mxu0
      %v1058 = vpop.f32.mrb[0].mxu0
      %v1059 = vadd.f32 0.0, %v1058
      %v1060 = vpop.f32.mrb[0].mxu0
      %1061 = vmatprep.mubr.bf16.mxu0 0
      %1062 = vmatmul.mubr.bf16.gmra.mrb[0].mxu0 %v703
      %v1063 = vpop.f32.mrb[0].mxu0
      %v1064 = vadd.f32 0.0, %v1063
      %v1065 = vpop.f32.mrb[0].mxu0
      %v1066 = vpop.f32.mrb[0].mxu0
      %v1067 = vadd.f32 0.0, %v1066
      %v1068 = vpop.f32.mrb[0].mxu0
      %1069 = vmatprep.mubr.bf16.mxu0 0
      %1070 = vmatmul.mubr.bf16.gmra.mrb[0].mxu0 %v706
      %v1071 = vpop.f32.mrb[0].mxu0
      %v1072 = vadd.f32 0.0, %v1071
      %v1073 = vpop.f32.mrb[0].mxu0
      %v1074 = vpop.f32.mrb[0].mxu0
      %v1075 = vadd.f32 0.0, %v1074
      %v1076 = vpop.f32.mrb[0].mxu0
      %1077 = vmatprep.mubr.bf16.mxu0 0
      %1078 = vmatmul.mubr.bf16.gmra.mrb[0].mxu0 %v709
      %v1079 = vpop.f32.mrb[0].mxu0
      %v1080 = vadd.f32 0.0, %v1079
      %v1081 = vpop.f32.mrb[0].mxu0
      %v1082 = vpop.f32.mrb[0].mxu0
      %v1083 = vadd.f32 0.0, %v1082
      %v1084 = vpop.f32.mrb[0].mxu0
      %1085 = vmatprep.mubr.bf16.mxu0 0
      %1086 = vmatmul.mubr.bf16.gmra.mrb[0].mxu0 %v712
      %v1087 = vpop.f32.mrb[0].mxu0
      %v1088 = vadd.f32 0.0, %v1087
      %v1089 = vpop.f32.mrb[0].mxu0
      %v1090 = vpop.f32.mrb[0].mxu0
      %v1091 = vadd.f32 0.0, %v1090
      %v1092 = vpop.f32.mrb[0].mxu0
      %1093 = vmatprep.mubr.bf16.mxu0 0
      %1094 = vmatmul.mubr.bf16.gmra.mrb[0].mxu0 %v715
      %v1095 = vpop.f32.mrb[0].mxu0
      %v1096 = vadd.f32 0.0, %v1095
      %v1097 = vpop.f32.mrb[0].mxu0
      %v1098 = vpop.f32.mrb[0].mxu0
      %v1099 = vadd.f32 0.0, %v1098
      %v1100 = vpop.f32.mrb[0].mxu0
      %1101 = vmatprep.mubr.bf16.mxu0 0
      %1102 = vmatmul.mubr.bf16.gmra.mrb[0].mxu0 %v718
      %v1103 = vpop.f32.mrb[0].mxu0
      %v1104 = vadd.f32 0.0, %v1103
      %v1105 = vpop.f32.mrb[0].mxu0
      %v1106 = vpop.f32.mrb[0].mxu0
      %v1107 = vadd.f32 0.0, %v1106
      %v1108 = vpop.f32.mrb[0].mxu0
      %1109 = vmatprep.mubr.bf16.mxu0 0
      %1110 = vmatmul.mubr.bf16.gmra.mrb[0].mxu0 %v721
      %v1111 = vpop.f32.mrb[0].mxu0
      %v1112 = vadd.f32 0.0, %v1111
      %v1113 = vpop.f32.mrb[0].mxu0
      %v1114 = vpop.f32.mrb[0].mxu0
      %v1115 = vadd.f32 0.0, %v1114
      %v1116 = vpop.f32.mrb[0].mxu0
      %1117 = vmatprep.mubr.bf16.mxu0 0
      %1118 = vmatmul.mubr.bf16.gmra.mrb[0].mxu0 %v724
      %v1119 = vpop.f32.mrb[0].mxu0
      %v1120 = vadd.f32 0.0, %v1119
      %v1121 = vpop.f32.mrb[0].mxu0
      %v1122 = vpop.f32.mrb[0].mxu0
      %v1123 = vadd.f32 0.0, %v1122
      %v1124 = vpop.f32.mrb[0].mxu0
      %1125 = vmatprep.mubr.bf16.mxu0 0
      %1126 = vmatmul.mubr.bf16.gmra.mrb[0].mxu0 %v727
      %v1127 = vpop.f32.mrb[0].mxu0
      %v1128 = vadd.f32 0.0, %v1127
      %v1129 = vpop.f32.mrb[0].mxu0
      %v1130 = vpop.f32.mrb[0].mxu0
      %v1131 = vadd.f32 0.0, %v1130
      %v1132 = vpop.f32.mrb[0].mxu0
      %1133 = vmatprep.mubr.bf16.mxu0 0
      %1134 = vmatmul.mubr.bf16.gmra.mrb[0].mxu0 %v730
      %v1135 = vpop.f32.mrb[0].mxu0
      %v1136 = vadd.f32 0.0, %v1135
      %v1137 = vpop.f32.mrb[0].mxu0
      %v1138 = vpop.f32.mrb[0].mxu0
      %v1139 = vadd.f32 0.0, %v1138
      %v1140 = vpop.f32.mrb[0].mxu0
      %1141 = vmatprep.mubr.bf16.mxu0 0
      %1142 = vmatmul.mubr.bf16.gmra.mrb[0].mxu0 %v733
      %v1143 = vpop.f32.mrb[0].mxu0
      %v1144 = vadd.f32 0.0, %v1143
      %v1145 = vpop.f32.mrb[0].mxu0
      %v1146 = vpop.f32.mrb[0].mxu0
      %v1147 = vadd.f32 0.0, %v1146
      %v1148 = vpop.f32.mrb[0].mxu0
      %1149 = vmatprep.mubr.bf16.mxu0 0
      %1150 = vmatmul.mubr.bf16.gmra.mrb[0].mxu0 %v736
      %v1151 = vpop.f32.mrb[0].mxu0
      %v1152 = vadd.f32 0.0, %v1151
      %v1153 = vpop.f32.mrb[0].mxu0
      %v1154 = vpop.f32.mrb[0].mxu0
      %v1155 = vadd.f32 0.0, %v1154
      %v1156 = vpop.f32.mrb[0].mxu0
      %1157 = vmatprep.mubr.bf16.mxu0 0
      %1158 = vmatmul.mubr.bf16.gmra.mrb[0].mxu0 %v739
      %v1159 = vpop.f32.mrb[0].mxu0
      %v1160 = vadd.f32 0.0, %v1159
      %v1161 = vpop.f32.mrb[0].mxu0
      %v1162 = vpop.f32.mrb[0].mxu0
      %v1163 = vadd.f32 0.0, %v1162
      %v1164 = vpop.f32.mrb[0].mxu0
      %1165 = vmatprep.mubr.bf16.mxu0 0
      %1166 = vmatmul.mubr.bf16.gmra.mrb[0].mxu0 %v742
      %v1167 = vpop.f32.mrb[0].mxu0
      %v1168 = vadd.f32 0.0, %v1167
      %v1169 = vpop.f32.mrb[0].mxu0
      %v1170 = vpop.f32.mrb[0].mxu0
      %v1171 = vadd.f32 0.0, %v1170
      %v1172 = vpop.f32.mrb[0].mxu0
      %1173 = vmatprep.mubr.bf16.mxu0 0
      %1174 = vmatmul.mubr.bf16.gmra.mrb[0].mxu0 %v745
      %v1175 = vpop.f32.mrb[0].mxu0
      %v1176 = vadd.f32 0.0, %v1175
      %v1177 = vpop.f32.mrb[0].mxu0
      %v1178 = vpop.f32.mrb[0].mxu0
      %v1179 = vadd.f32 0.0, %v1178
      %v1180 = vpop.f32.mrb[0].mxu0
      %1181 = vmatprep.mubr.bf16.mxu0 0
      %1182 = vmatmul.mubr.bf16.gmra.mrb[0].mxu0 %v748
      %v1183 = vpop.f32.mrb[0].mxu0
      %v1184 = vadd.f32 0.0, %v1183
      %v1185 = vpop.f32.mrb[0].mxu0
      %v1186 = vpop.f32.mrb[0].mxu0
      %v1187 = vadd.f32 0.0, %v1186
      %v1188 = vpop.f32.mrb[0].mxu0
      %1189 = vmatprep.mubr.bf16.mxu0 0
      %1190 = vmatmul.mubr.bf16.gmra.mrb[0].mxu0 %v751
      %v1191 = vpop.f32.mrb[0].mxu0
      %v1192 = vadd.f32 0.0, %v1191
      %v1193 = vpop.f32.mrb[0].mxu0
      %v1194 = vpop.f32.mrb[0].mxu0
      %v1195 = vadd.f32 0.0, %v1194
      %v1196 = vpop.f32.mrb[0].mxu0
      %1197 = vmatprep.mubr.bf16.mxu0 0
      %1198 = vmatmul.mubr.bf16.gmra.mrb[0].mxu0 %v754
      %v1199 = vpop.f32.mrb[0].mxu0
      %v1200 = vadd.f32 0.0, %v1199
      %v1201 = vpop.f32.mrb[0].mxu0
      %v1202 = vpop.f32.mrb[0].mxu0
      %v1203 = vadd.f32 0.0, %v1202
      %v1204 = vpop.f32.mrb[0].mxu0
      %1205 = vmatprep.mubr.bf16.mxu0 0
      %1206 = vmatmul.mubr.bf16.gmra.mrb[0].mxu0 %v757
      %v1207 = vpop.f32.mrb[0].mxu0
      %v1208 = vadd.f32 0.0, %v1207
      %v1209 = vpop.f32.mrb[0].mxu0
      %v1210 = vpop.f32.mrb[0].mxu0
      %v1211 = vadd.f32 0.0, %v1210
      %v1212 = vpop.f32.mrb[0].mxu0
      %1213 = vmatprep.mubr.bf16.mxu0 0
      %1214 = vmatmul.mubr.bf16.gmra.mrb[0].mxu0 %v760
      %v1215 = vpop.f32.mrb[0].mxu0
      %v1216 = vadd.f32 0.0, %v1215
      %v1217 = vpop.f32.mrb[0].mxu0
      %v1218 = vpop.f32.mrb[0].mxu0
      %v1219 = vadd.f32 0.0, %v1218
      %v1220 = vpop.f32.mrb[0].mxu0
      %1221 = vmatprep.mubr.bf16.mxu0 0
      %1222 = vmatmul.mubr.bf16.gmra.mrb[0].mxu0 %v763
      %v1223 = vpop.f32.mrb[0].mxu0
      %v1224 = vadd.f32 0.0, %v1223
      %v1225 = vpop.f32.mrb[0].mxu0
      %v1226 = vpop.f32.mrb[0].mxu0
      %v1227 = vadd.f32 0.0, %v1226
      %v1228 = vpop.f32.mrb[0].mxu0
      %1229 = vmatprep.mubr.bf16.mxu0 0
      %1230 = vmatmul.mubr.bf16.gmra.mrb[0].mxu0 %v766
      %v1231 = vpop.f32.mrb[0].mxu0
      %v1232 = vadd.f32 0.0, %v1231
      %v1233 = vpop.f32.mrb[0].mxu0
      %v1234 = vpop.f32.mrb[0].mxu0
      %v1235 = vadd.f32 0.0, %v1234
      %v1236 = vpop.f32.mrb[0].mxu0
      %1237 = vmatprep.mubr.bf16.mxu0 0
      %1238 = vmatmul.mubr.bf16.gmra.mrb[0].mxu0 %v769
      %v1239 = vpop.f32.mrb[0].mxu0
      %v1240 = vadd.f32 0.0, %v1239
      %v1241 = vpop.f32.mrb[0].mxu0
      %v1242 = vpop.f32.mrb[0].mxu0
      %v1243 = vadd.f32 0.0, %v1242
      %v1244 = vpop.f32.mrb[0].mxu0
      %1245 = vmatprep.mubr.bf16.mxu0 0
      %1246 = vmatmul.mubr.bf16.gmra.mrb[0].mxu0 %v772
      %v1247 = vpop.f32.mrb[0].mxu0
      %v1248 = vadd.f32 0.0, %v1247
      %v1249 = vpop.f32.mrb[0].mxu0
      %v1250 = vpop.f32.mrb[0].mxu0
      %v1251 = vadd.f32 0.0, %v1250
      %v1252 = vpop.f32.mrb[0].mxu0
      %1253 = vmatprep.mubr.bf16.mxu0 0
      %1254 = vmatmul.mubr.bf16.gmra.mrb[0].mxu0 %v775
      %v1255 = vpop.f32.mrb[0].mxu0
      %v1256 = vadd.f32 0.0, %v1255
      %v1257 = vpop.f32.mrb[0].mxu0
      %v1258 = vpop.f32.mrb[0].mxu0
      %v1259 = vadd.f32 0.0, %v1258
      %v1260 = vpop.f32.mrb[0].mxu0
      %1261 = vmatprep.mubr.bf16.mxu0 0
      %1262 = vmatmul.mubr.bf16.gmra.mrb[0].mxu0 %v778
      %v1263 = vpop.f32.mrb[0].mxu0
      %v1264 = vadd.f32 0.0, %v1263
      %v1265 = vpop.f32.mrb[0].mxu0
      %v1266 = vpop.f32.mrb[0].mxu0
      %v1267 = vadd.f32 0.0, %v1266
      %v1268 = vpop.f32.mrb[0].mxu0
      %1269 = vmatprep.mubr.bf16.mxu0 0
      %1270 = vmatmul.mubr.bf16.gmra.mrb[0].mxu0 %v781
      %v1271 = vpop.f32.mrb[0].mxu0
      %v1272 = vadd.f32 0.0, %v1271
      %v1273 = vpop.f32.mrb[0].mxu0
      %v1274 = vpop.f32.mrb[0].mxu0
      %v1275 = vadd.f32 0.0, %v1274
      %v1276 = vpop.f32.mrb[0].mxu0
      %1277 = vmatprep.mubr.bf16.mxu0 0
      %1278 = vmatmul.mubr.bf16.gmra.mrb[0].mxu0 %v784
      %v1279 = vpop.f32.mrb[0].mxu0
      %v1280 = vadd.f32 0.0, %v1279
      %v1281 = vpop.f32.mrb[0].mxu0
      %v1282 = vpop.f32.mrb[0].mxu0
      %v1283 = vadd.f32 0.0, %v1282
      %v1284 = vpop.f32.mrb[0].mxu0
      %1285 = vmatprep.mubr.bf16.mxu0 0
      %1286 = vmatmul.mubr.bf16.gmra.mrb[0].mxu0 %v787
      %v1287 = vpop.f32.mrb[0].mxu0
      %v1288 = vadd.f32 0.0, %v1287
      %v1289 = vpop.f32.mrb[0].mxu0
      %v1290 = vpop.f32.mrb[0].mxu0
      %v1291 = vadd.f32 0.0, %v1290
      %v1292 = vpop.f32.mrb[0].mxu0
      %1293 = vmatprep.mubr.bf16.mxu0 0
      %1294 = vmatmul.mubr.bf16.gmra.mrb[0].mxu0 %v790
      %v1295 = vpop.f32.mrb[0].mxu0
      %v1296 = vadd.f32 0.0, %v1295
      %v1297 = vpop.f32.mrb[0].mxu0
      %v1298 = vpop.f32.mrb[0].mxu0
      %v1299 = vadd.f32 0.0, %v1298
      %v1300 = vpop.f32.mrb[0].mxu0
      %1301 = vmatprep.mubr.bf16.mxu0 0
      %1302 = vmatmul.mubr.bf16.gmra.mrb[0].mxu0 %v793
      %v1303 = vpop.f32.mrb[0].mxu0
      %v1304 = vadd.f32 0.0, %v1303
      %v1305 = vpop.f32.mrb[0].mxu0
      %v1306 = vpop.f32.mrb[0].mxu0
      %v1307 = vadd.f32 0.0, %v1306
      %v1308 = vpop.f32.mrb[0].mxu0
      %1309 = vmatprep.mubr.bf16.mxu0 0
      %1310 = vmatmul.mubr.bf16.gmra.mrb[0].mxu0 %v796
      %v1311 = vpop.f32.mrb[0].mxu0
      %v1312 = vadd.f32 0.0, %v1311
      %v1313 = vpop.f32.mrb[0].mxu0
      %v1314 = vpop.f32.mrb[0].mxu0
      %v1315 = vadd.f32 0.0, %v1314
      %v1316 = vpop.f32.mrb[0].mxu0
      %1317 = vmatprep.mubr.bf16.mxu0 0
      %1318 = vmatmul.mubr.bf16.gmra.mrb[0].mxu0 %v799
      %v1319 = vpop.f32.mrb[0].mxu0
      %v1320 = vadd.f32 0.0, %v1319
      %v1321 = vpop.f32.mrb[0].mxu0
      %v1322 = vpop.f32.mrb[0].mxu0
      %v1323 = vadd.f32 0.0, %v1322
      %v1324 = vpop.f32.mrb[0].mxu0
      %1325 = vmatprep.mubr.bf16.mxu0 0
      %1326 = vmatmul.mubr.bf16.gmra.mrb[0].mxu0 %v802
      %v1327 = vpop.f32.mrb[0].mxu0
      %v1328 = vadd.f32 0.0, %v1327
      %v1329 = vpop.f32.mrb[0].mxu0
      %v1330 = vpop.f32.mrb[0].mxu0
      %v1331 = vadd.f32 0.0, %v1330
      %v1332 = vpop.f32.mrb[0].mxu0
      %1333 = vmatprep.mubr.bf16.mxu0 0
      %1334 = vmatmul.mubr.bf16.gmra.mrb[0].mxu0 %v805
      %v1335 = vpop.f32.mrb[0].mxu0
      %v1336 = vadd.f32 0.0, %v1335
      %v1337 = vpop.f32.mrb[0].mxu0
      %v1338 = vpop.f32.mrb[0].mxu0
      %v1339 = vadd.f32 0.0, %v1338
      %v1340 = vpop.f32.mrb[0].mxu0
      %1341 = vmatprep.mubr.bf16.mxu0 0
      %1342 = vmatmul.mubr.bf16.gmra.mrb[0].mxu0 %v808
      %v1343 = vpop.f32.mrb[0].mxu0
      %v1344 = vadd.f32 0.0, %v1343
      %v1345 = vpop.f32.mrb[0].mxu0
      %v1346 = vpop.f32.mrb[0].mxu0
      %v1347 = vadd.f32 0.0, %v1346
      %v1348 = vpop.f32.mrb[0].mxu0
      %1349 = vmatprep.mubr.bf16.mxu0 0
      %1350 = vmatmul.mubr.bf16.gmra.mrb[0].mxu0 %v811
      %v1351 = vpop.f32.mrb[0].mxu0
      %v1352 = vadd.f32 0.0, %v1351
      %v1353 = vpop.f32.mrb[0].mxu0
      %v1354 = vpop.f32.mrb[0].mxu0
      %v1355 = vadd.f32 0.0, %v1354
      %v1356 = vpop.f32.mrb[0].mxu0
      %1357 = vdwg.mxu0
      %v1358 = vmul.f32 %v848, 0.2
      %v1359 = vmul.f32 %v851, 0.2
      %v1360 = vmul.f32 %v856, 0.2
      %v1361 = vmul.f32 %v859, 0.2
      %v1362 = vmul.f32 %v864, 0.2
      %v1363 = vmul.f32 %v867, 0.2
      %v1364 = vmul.f32 %v872, 0.2
      %v1365 = vmul.f32 %v875, 0.2
      %v1366 = vmul.f32 %v880, 0.2
      %v1367 = vmul.f32 %v883, 0.2
      %v1368 = vmul.f32 %v888, 0.2
      %v1369 = vmul.f32 %v891, 0.2
      %v1370 = vmul.f32 %v896, 0.2
      %v1371 = vmul.f32 %v899, 0.2
      %v1372 = vmul.f32 %v904, 0.2
      %v1373 = vmul.f32 %v907, 0.2
      %v1374 = vmul.f32 %v912, 0.2
      %v1375 = vmul.f32 %v915, 0.2
      %v1376 = vmul.f32 %v920, 0.2
      %v1377 = vmul.f32 %v923, 0.2
      %v1378 = vmul.f32 %v928, 0.2
      %v1379 = vmul.f32 %v931, 0.2
      %v1380 = vmul.f32 %v936, 0.2
      %v1381 = vmul.f32 %v939, 0.2
      %v1382 = vmul.f32 %v944, 0.2
      %v1383 = vmul.f32 %v947, 0.2
      %v1384 = vmul.f32 %v952, 0.2
      %v1385 = vmul.f32 %v955, 0.2
      %v1386 = vmul.f32 %v960, 0.2
      %v1387 = vmul.f32 %v963, 0.2
      %v1388 = vmul.f32 %v968, 0.2
      %v1389 = vmul.f32 %v971, 0.2
      %v1390 = vmul.f32 %v976, 0.2
      %v1391 = vmul.f32 %v979, 0.2
      %v1392 = vmul.f32 %v984, 0.2
      %v1393 = vmul.f32 %v987, 0.2
      %v1394 = vmul.f32 %v992, 0.2
      %v1395 = vmul.f32 %v995, 0.2
      %v1396 = vmul.f32 %v1000, 0.2
      %v1397 = vmul.f32 %v1003, 0.2
      %v1398 = vmul.f32 %v1008, 0.2
      %v1399 = vmul.f32 %v1011, 0.2
      %v1400 = vmul.f32 %v1016, 0.2
      %v1401 = vmul.f32 %v1019, 0.2
      %v1402 = vmul.f32 %v1024, 0.2
      %v1403 = vmul.f32 %v1027, 0.2
      %v1404 = vmul.f32 %v1032, 0.2
      %v1405 = vmul.f32 %v1035, 0.2
      %v1406 = vmul.f32 %v1040, 0.2
      %v1407 = vmul.f32 %v1043, 0.2
      %v1408 = vmul.f32 %v1048, 0.2
      %v1409 = vmul.f32 %v1051, 0.2
      %v1410 = vmul.f32 %v1056, 0.2
      %v1411 = vmul.f32 %v1059, 0.2
      %v1412 = vmul.f32 %v1064, 0.2
      %v1413 = vmul.f32 %v1067, 0.2
      %v1414 = vmul.f32 %v1072, 0.2
      %v1415 = vmul.f32 %v1075, 0.2
      %v1416 = vmul.f32 %v1080, 0.2
      %v1417 = vmul.f32 %v1083, 0.2
      %v1418 = vmul.f32 %v1088, 0.2
      %v1419 = vmul.f32 %v1091, 0.2
      %v1420 = vmul.f32 %v1096, 0.2
      %v1421 = vmul.f32 %v1099, 0.2
      %v1422 = vmul.f32 %v1104, 0.2
      %v1423 = vmul.f32 %v1107, 0.2
      %v1424 = vmul.f32 %v1112, 0.2
      %v1425 = vmul.f32 %v1115, 0.2
      %v1426 = vmul.f32 %v1120, 0.2
      %v1427 = vmul.f32 %v1123, 0.2
      %v1428 = vmul.f32 %v1128, 0.2
      %v1429 = vmul.f32 %v1131, 0.2
      %v1430 = vmul.f32 %v1136, 0.2
      %v1431 = vmul.f32 %v1139, 0.2
      %v1432 = vmul.f32 %v1144, 0.2
      %v1433 = vmul.f32 %v1147, 0.2
      %v1434 = vmul.f32 %v1152, 0.2
      %v1435 = vmul.f32 %v1155, 0.2
      %v1436 = vmul.f32 %v1160, 0.2
      %v1437 = vmul.f32 %v1163, 0.2
      %v1438 = vmul.f32 %v1168, 0.2
      %v1439 = vmul.f32 %v1171, 0.2
      %v1440 = vmul.f32 %v1176, 0.2
      %v1441 = vmul.f32 %v1179, 0.2
      %v1442 = vmul.f32 %v1184, 0.2
      %v1443 = vmul.f32 %v1187, 0.2
      %v1444 = vmul.f32 %v1192, 0.2
      %v1445 = vmul.f32 %v1195, 0.2
      %v1446 = vmul.f32 %v1200, 0.2
      %v1447 = vmul.f32 %v1203, 0.2
      %v1448 = vmul.f32 %v1208, 0.2
      %v1449 = vmul.f32 %v1211, 0.2
      %v1450 = vmul.f32 %v1216, 0.2
      %v1451 = vmul.f32 %v1219, 0.2
      %v1452 = vmul.f32 %v1224, 0.2
      %v1453 = vmul.f32 %v1227, 0.2
      %v1454 = vmul.f32 %v1232, 0.2
      %v1455 = vmul.f32 %v1235, 0.2
      %v1456 = vmul.f32 %v1240, 0.2
      %v1457 = vmul.f32 %v1243, 0.2
      %v1458 = vmul.f32 %v1248, 0.2
      %v1459 = vmul.f32 %v1251, 0.2
      %v1460 = vmul.f32 %v1256, 0.2
      %v1461 = vmul.f32 %v1259, 0.2
      %v1462 = vmul.f32 %v1264, 0.2
      %v1463 = vmul.f32 %v1267, 0.2
      %v1464 = vmul.f32 %v1272, 0.2
      %v1465 = vmul.f32 %v1275, 0.2
      %v1466 = vmul.f32 %v1280, 0.2
      %v1467 = vmul.f32 %v1283, 0.2
      %v1468 = vmul.f32 %v1288, 0.2
      %v1469 = vmul.f32 %v1291, 0.2
      %v1470 = vmul.f32 %v1296, 0.2
      %v1471 = vmul.f32 %v1299, 0.2
      %v1472 = vmul.f32 %v1304, 0.2
      %v1473 = vmul.f32 %v1307, 0.2
      %v1474 = vmul.f32 %v1312, 0.2
      %v1475 = vmul.f32 %v1315, 0.2
      %v1476 = vmul.f32 %v1320, 0.2
      %v1477 = vmul.f32 %v1323, 0.2
      %v1478 = vmul.f32 %v1328, 0.2
      %v1479 = vmul.f32 %v1331, 0.2
      %v1480 = vmul.f32 %v1336, 0.2
      %v1481 = vmul.f32 %v1339, 0.2
      %v1482 = vmul.f32 %v1344, 0.2
      %v1483 = vmul.f32 %v1347, 0.2
      %v1484 = vmul.f32 %v1352, 0.2
      %v1485 = vmul.f32 %v1355, 0.2
      %v1486 = vmax.f32 %v848, %v1358
      %v1487 = vmax.f32 %v851, %v1359
      %v1488 = vmax.f32 %v856, %v1360
      %v1489 = vmax.f32 %v859, %v1361
      %v1490 = vmax.f32 %v864, %v1362
      %v1491 = vmax.f32 %v867, %v1363
      %v1492 = vmax.f32 %v872, %v1364
      %v1493 = vmax.f32 %v875, %v1365
      %v1494 = vmax.f32 %v880, %v1366
      %v1495 = vmax.f32 %v883, %v1367
      %v1496 = vmax.f32 %v888, %v1368
      %v1497 = vmax.f32 %v891, %v1369
      %v1498 = vmax.f32 %v896, %v1370
      %v1499 = vmax.f32 %v899, %v1371
      %v1500 = vmax.f32 %v904, %v1372
      %v1501 = vmax.f32 %v907, %v1373
      %v1502 = vmax.f32 %v912, %v1374
      %v1503 = vmax.f32 %v915, %v1375
      %v1504 = vmax.f32 %v920, %v1376
      %v1505 = vmax.f32 %v923, %v1377
      %v1506 = vmax.f32 %v928, %v1378
      %v1507 = vmax.f32 %v931, %v1379
      %v1508 = vmax.f32 %v936, %v1380
      %v1509 = vmax.f32 %v939, %v1381
      %v1510 = vmax.f32 %v944, %v1382
      %v1511 = vmax.f32 %v947, %v1383
      %v1512 = vmax.f32 %v952, %v1384
      %v1513 = vmax.f32 %v955, %v1385
      %v1514 = vmax.f32 %v960, %v1386
      %v1515 = vmax.f32 %v963, %v1387
      %v1516 = vmax.f32 %v968, %v1388
      %v1517 = vmax.f32 %v971, %v1389
      %v1518 = vmax.f32 %v976, %v1390
      %v1519 = vmax.f32 %v979, %v1391
      %v1520 = vmax.f32 %v984, %v1392
      %v1521 = vmax.f32 %v987, %v1393
      %v1522 = vmax.f32 %v992, %v1394
      %v1523 = vmax.f32 %v995, %v1395
      %v1524 = vmax.f32 %v1000, %v1396
      %v1525 = vmax.f32 %v1003, %v1397
      %v1526 = vmax.f32 %v1008, %v1398
      %v1527 = vmax.f32 %v1011, %v1399
      %v1528 = vmax.f32 %v1016, %v1400
      %v1529 = vmax.f32 %v1019, %v1401
      %v1530 = vmax.f32 %v1024, %v1402
      %v1531 = vmax.f32 %v1027, %v1403
      %v1532 = vmax.f32 %v1032, %v1404
      %v1533 = vmax.f32 %v1035, %v1405
      %v1534 = vmax.f32 %v1040, %v1406
      %v1535 = vmax.f32 %v1043, %v1407
      %v1536 = vmax.f32 %v1048, %v1408
      %v1537 = vmax.f32 %v1051, %v1409
      %v1538 = vmax.f32 %v1056, %v1410
      %v1539 = vmax.f32 %v1059, %v1411
      %v1540 = vmax.f32 %v1064, %v1412
      %v1541 = vmax.f32 %v1067, %v1413
      %v1542 = vmax.f32 %v1072, %v1414
      %v1543 = vmax.f32 %v1075, %v1415
      %v1544 = vmax.f32 %v1080, %v1416
      %v1545 = vmax.f32 %v1083, %v1417
      %v1546 = vmax.f32 %v1088, %v1418
      %v1547 = vmax.f32 %v1091, %v1419
      %v1548 = vmax.f32 %v1096, %v1420
      %v1549 = vmax.f32 %v1099, %v1421
      %v1550 = vmax.f32 %v1104, %v1422
      %v1551 = vmax.f32 %v1107, %v1423
      %v1552 = vmax.f32 %v1112, %v1424
      %v1553 = vmax.f32 %v1115, %v1425
      %v1554 = vmax.f32 %v1120, %v1426
      %v1555 = vmax.f32 %v1123, %v1427
      %v1556 = vmax.f32 %v1128, %v1428
      %v1557 = vmax.f32 %v1131, %v1429
      %v1558 = vmax.f32 %v1136, %v1430
      %v1559 = vmax.f32 %v1139, %v1431
      %v1560 = vmax.f32 %v1144, %v1432
      %v1561 = vmax.f32 %v1147, %v1433
      %v1562 = vmax.f32 %v1152, %v1434
      %v1563 = vmax.f32 %v1155, %v1435
      %v1564 = vmax.f32 %v1160, %v1436
      %v1565 = vmax.f32 %v1163, %v1437
      %v1566 = vmax.f32 %v1168, %v1438
      %v1567 = vmax.f32 %v1171, %v1439
      %v1568 = vmax.f32 %v1176, %v1440
      %v1569 = vmax.f32 %v1179, %v1441
      %v1570 = vmax.f32 %v1184, %v1442
      %v1571 = vmax.f32 %v1187, %v1443
      %v1572 = vmax.f32 %v1192, %v1444
      %v1573 = vmax.f32 %v1195, %v1445
      %v1574 = vmax.f32 %v1200, %v1446
      %v1575 = vmax.f32 %v1203, %v1447
      %v1576 = vmax.f32 %v1208, %v1448
      %v1577 = vmax.f32 %v1211, %v1449
      %v1578 = vmax.f32 %v1216, %v1450
      %v1579 = vmax.f32 %v1219, %v1451
      %v1580 = vmax.f32 %v1224, %v1452
      %v1581 = vmax.f32 %v1227, %v1453
      %v1582 = vmax.f32 %v1232, %v1454
      %v1583 = vmax.f32 %v1235, %v1455
      %v1584 = vmax.f32 %v1240, %v1456
      %v1585 = vmax.f32 %v1243, %v1457
      %v1586 = vmax.f32 %v1248, %v1458
      %v1587 = vmax.f32 %v1251, %v1459
      %v1588 = vmax.f32 %v1256, %v1460
      %v1589 = vmax.f32 %v1259, %v1461
      %v1590 = vmax.f32 %v1264, %v1462
      %v1591 = vmax.f32 %v1267, %v1463
      %v1592 = vmax.f32 %v1272, %v1464
      %v1593 = vmax.f32 %v1275, %v1465
      %v1594 = vmax.f32 %v1280, %v1466
      %v1595 = vmax.f32 %v1283, %v1467
      %v1596 = vmax.f32 %v1288, %v1468
      %v1597 = vmax.f32 %v1291, %v1469
      %v1598 = vmax.f32 %v1296, %v1470
      %v1599 = vmax.f32 %v1299, %v1471
      %v1600 = vmax.f32 %v1304, %v1472
      %v1601 = vmax.f32 %v1307, %v1473
      %v1602 = vmax.f32 %v1312, %v1474
      %v1603 = vmax.f32 %v1315, %v1475
      %v1604 = vmax.f32 %v1320, %v1476
      %v1605 = vmax.f32 %v1323, %v1477
      %v1606 = vmax.f32 %v1328, %v1478
      %v1607 = vmax.f32 %v1331, %v1479
      %v1608 = vmax.f32 %v1336, %v1480
      %v1609 = vmax.f32 %v1339, %v1481
      %v1610 = vmax.f32 %v1344, %v1482
      %v1611 = vmax.f32 %v1347, %v1483
      %v1612 = vmax.f32 %v1352, %v1484
      %v1613 = vmax.f32 %v1355, %v1485
      %v1614 = vpack.c.bf16 %v1487, %v1486
      %v1615 = vpack.c.bf16 %v1489, %v1488
      %v1616 = vpack.c.bf16 %v1491, %v1490
      %v1617 = vpack.c.bf16 %v1493, %v1492
      %v1618 = vpack.c.bf16 %v1495, %v1494
      %v1619 = vpack.c.bf16 %v1497, %v1496
      %v1620 = vpack.c.bf16 %v1499, %v1498
      %v1621 = vpack.c.bf16 %v1501, %v1500
      %v1622 = vpack.c.bf16 %v1503, %v1502
      %v1623 = vpack.c.bf16 %v1505, %v1504
      %v1624 = vpack.c.bf16 %v1507, %v1506
      %v1625 = vpack.c.bf16 %v1509, %v1508
      %v1626 = vpack.c.bf16 %v1511, %v1510
      %v1627 = vpack.c.bf16 %v1513, %v1512
      %v1628 = vpack.c.bf16 %v1515, %v1514
      %v1629 = vpack.c.bf16 %v1517, %v1516
      %v1630 = vpack.c.bf16 %v1519, %v1518
      %v1631 = vpack.c.bf16 %v1521, %v1520
      %v1632 = vpack.c.bf16 %v1523, %v1522
      %v1633 = vpack.c.bf16 %v1525, %v1524
      %v1634 = vpack.c.bf16 %v1527, %v1526
      %v1635 = vpack.c.bf16 %v1529, %v1528
      %v1636 = vpack.c.bf16 %v1531, %v1530
      %v1637 = vpack.c.bf16 %v1533, %v1532
      %v1638 = vpack.c.bf16 %v1535, %v1534
      %v1639 = vpack.c.bf16 %v1537, %v1536
      %v1640 = vpack.c.bf16 %v1539, %v1538
      %v1641 = vpack.c.bf16 %v1541, %v1540
      %v1642 = vpack.c.bf16 %v1543, %v1542
      %v1643 = vpack.c.bf16 %v1545, %v1544
      %v1644 = vpack.c.bf16 %v1547, %v1546
      %v1645 = vpack.c.bf16 %v1549, %v1548
      %v1646 = vpack.c.bf16 %v1551, %v1550
      %v1647 = vpack.c.bf16 %v1553, %v1552
      %v1648 = vpack.c.bf16 %v1555, %v1554
      %v1649 = vpack.c.bf16 %v1557, %v1556
      %v1650 = vpack.c.bf16 %v1559, %v1558
      %v1651 = vpack.c.bf16 %v1561, %v1560
      %v1652 = vpack.c.bf16 %v1563, %v1562
      %v1653 = vpack.c.bf16 %v1565, %v1564
      %v1654 = vpack.c.bf16 %v1567, %v1566
      %v1655 = vpack.c.bf16 %v1569, %v1568
      %v1656 = vpack.c.bf16 %v1571, %v1570
      %v1657 = vpack.c.bf16 %v1573, %v1572
      %v1658 = vpack.c.bf16 %v1575, %v1574
      %v1659 = vpack.c.bf16 %v1577, %v1576
      %v1660 = vpack.c.bf16 %v1579, %v1578
      %v1661 = vpack.c.bf16 %v1581, %v1580
      %v1662 = vpack.c.bf16 %v1583, %v1582
      %v1663 = vpack.c.bf16 %v1585, %v1584
      %v1664 = vpack.c.bf16 %v1587, %v1586
      %v1665 = vpack.c.bf16 %v1589, %v1588
      %v1666 = vpack.c.bf16 %v1591, %v1590
      %v1667 = vpack.c.bf16 %v1593, %v1592
      %v1668 = vpack.c.bf16 %v1595, %v1594
      %v1669 = vpack.c.bf16 %v1597, %v1596
      %v1670 = vpack.c.bf16 %v1599, %v1598
      %v1671 = vpack.c.bf16 %v1601, %v1600
      %v1672 = vpack.c.bf16 %v1603, %v1602
      %v1673 = vpack.c.bf16 %v1605, %v1604
      %v1674 = vpack.c.bf16 %v1607, %v1606
      %v1675 = vpack.c.bf16 %v1609, %v1608
      %v1676 = vpack.c.bf16 %v1611, %v1610
      %v1677 = vpack.c.bf16 %v1613, %v1612
      %v1742 = vunpack.c.l.b16 %v1614
      %v1743 = vunpack.c.h.b16 %v1614
      %v1744 = vunpack.c.l.b16 %v1615
      %v1745 = vunpack.c.h.b16 %v1615
      %v1746 = vunpack.c.l.b16 %v1616
      %v1747 = vunpack.c.h.b16 %v1616
      %v1748 = vunpack.c.l.b16 %v1617
      %v1749 = vunpack.c.h.b16 %v1617
      %v1750 = vunpack.c.l.b16 %v1618
      %v1751 = vunpack.c.h.b16 %v1618
      %v1752 = vunpack.c.l.b16 %v1619
      %v1753 = vunpack.c.h.b16 %v1619
      %v1754 = vunpack.c.l.b16 %v1620
      %v1755 = vunpack.c.h.b16 %v1620
      %v1756 = vunpack.c.l.b16 %v1621
      %v1757 = vunpack.c.h.b16 %v1621
      %v1758 = vunpack.c.l.b16 %v1622
      %v1759 = vunpack.c.h.b16 %v1622
      %v1760 = vunpack.c.l.b16 %v1623
      %v1761 = vunpack.c.h.b16 %v1623
      %v1762 = vunpack.c.l.b16 %v1624
      %v1763 = vunpack.c.h.b16 %v1624
      %v1764 = vunpack.c.l.b16 %v1625
      %v1765 = vunpack.c.h.b16 %v1625
      %v1766 = vunpack.c.l.b16 %v1626
      %v1767 = vunpack.c.h.b16 %v1626
      %v1768 = vunpack.c.l.b16 %v1627
      %v1769 = vunpack.c.h.b16 %v1627
      %v1770 = vunpack.c.l.b16 %v1628
      %v1771 = vunpack.c.h.b16 %v1628
      %v1772 = vunpack.c.l.b16 %v1629
      %v1773 = vunpack.c.h.b16 %v1629
      %v1774 = vunpack.c.l.b16 %v1630
      %v1775 = vunpack.c.h.b16 %v1630
      %v1776 = vunpack.c.l.b16 %v1631
      %v1777 = vunpack.c.h.b16 %v1631
      %v1778 = vunpack.c.l.b16 %v1632
      %v1779 = vunpack.c.h.b16 %v1632
      %v1780 = vunpack.c.l.b16 %v1633
      %v1781 = vunpack.c.h.b16 %v1633
      %v1782 = vunpack.c.l.b16 %v1634
      %v1783 = vunpack.c.h.b16 %v1634
      %v1784 = vunpack.c.l.b16 %v1635
      %v1785 = vunpack.c.h.b16 %v1635
      %v1786 = vunpack.c.l.b16 %v1636
      %v1787 = vunpack.c.h.b16 %v1636
      %v1788 = vunpack.c.l.b16 %v1637
      %v1789 = vunpack.c.h.b16 %v1637
      %v1790 = vunpack.c.l.b16 %v1638
      %v1791 = vunpack.c.h.b16 %v1638
      %v1792 = vunpack.c.l.b16 %v1639
      %v1793 = vunpack.c.h.b16 %v1639
      %v1794 = vunpack.c.l.b16 %v1640
      %v1795 = vunpack.c.h.b16 %v1640
      %v1796 = vunpack.c.l.b16 %v1641
      %v1797 = vunpack.c.h.b16 %v1641
      %v1798 = vunpack.c.l.b16 %v1642
      %v1799 = vunpack.c.h.b16 %v1642
      %v1800 = vunpack.c.l.b16 %v1643
      %v1801 = vunpack.c.h.b16 %v1643
      %v1802 = vunpack.c.l.b16 %v1644
      %v1803 = vunpack.c.h.b16 %v1644
      %v1804 = vunpack.c.l.b16 %v1645
      %v1805 = vunpack.c.h.b16 %v1645
      %v1806 = vunpack.c.l.b16 %v1646
      %v1807 = vunpack.c.h.b16 %v1646
      %v1808 = vunpack.c.l.b16 %v1647
      %v1809 = vunpack.c.h.b16 %v1647
      %v1810 = vunpack.c.l.b16 %v1648
      %v1811 = vunpack.c.h.b16 %v1648
      %v1812 = vunpack.c.l.b16 %v1649
      %v1813 = vunpack.c.h.b16 %v1649
      %v1814 = vunpack.c.l.b16 %v1650
      %v1815 = vunpack.c.h.b16 %v1650
      %v1816 = vunpack.c.l.b16 %v1651
      %v1817 = vunpack.c.h.b16 %v1651
      %v1818 = vunpack.c.l.b16 %v1652
      %v1819 = vunpack.c.h.b16 %v1652
      %v1820 = vunpack.c.l.b16 %v1653
      %v1821 = vunpack.c.h.b16 %v1653
      %v1822 = vunpack.c.l.b16 %v1654
      %v1823 = vunpack.c.h.b16 %v1654
      %v1824 = vunpack.c.l.b16 %v1655
      %v1825 = vunpack.c.h.b16 %v1655
      %v1826 = vunpack.c.l.b16 %v1656
      %v1827 = vunpack.c.h.b16 %v1656
      %v1828 = vunpack.c.l.b16 %v1657
      %v1829 = vunpack.c.h.b16 %v1657
      %v1830 = vunpack.c.l.b16 %v1658
      %v1831 = vunpack.c.h.b16 %v1658
      %v1832 = vunpack.c.l.b16 %v1659
      %v1833 = vunpack.c.h.b16 %v1659
      %v1834 = vunpack.c.l.b16 %v1660
      %v1835 = vunpack.c.h.b16 %v1660
      %v1836 = vunpack.c.l.b16 %v1661
      %v1837 = vunpack.c.h.b16 %v1661
      %v1838 = vunpack.c.l.b16 %v1662
      %v1839 = vunpack.c.h.b16 %v1662
      %v1840 = vunpack.c.l.b16 %v1663
      %v1841 = vunpack.c.h.b16 %v1663
      %v1842 = vunpack.c.l.b16 %v1664
      %v1843 = vunpack.c.h.b16 %v1664
      %v1844 = vunpack.c.l.b16 %v1665
      %v1845 = vunpack.c.h.b16 %v1665
      %v1846 = vunpack.c.l.b16 %v1666
      %v1847 = vunpack.c.h.b16 %v1666
      %v1848 = vunpack.c.l.b16 %v1667
      %v1849 = vunpack.c.h.b16 %v1667
      %v1850 = vunpack.c.l.b16 %v1668
      %v1851 = vunpack.c.h.b16 %v1668
      %v1852 = vunpack.c.l.b16 %v1669
      %v1853 = vunpack.c.h.b16 %v1669
      %v1854 = vunpack.c.l.b16 %v1670
      %v1855 = vunpack.c.h.b16 %v1670
      %v1856 = vunpack.c.l.b16 %v1671
      %v1857 = vunpack.c.h.b16 %v1671
      %v1858 = vunpack.c.l.b16 %v1672
      %v1859 = vunpack.c.h.b16 %v1672
      %v1860 = vunpack.c.l.b16 %v1673
      %v1861 = vunpack.c.h.b16 %v1673
      %v1862 = vunpack.c.l.b16 %v1674
      %v1863 = vunpack.c.h.b16 %v1674
      %v1864 = vunpack.c.l.b16 %v1675
      %v1865 = vunpack.c.h.b16 %v1675
      %v1866 = vunpack.c.l.b16 %v1676
      %v1867 = vunpack.c.h.b16 %v1676
      %v1868 = vunpack.c.l.b16 %v1677
      %v1869 = vunpack.c.h.b16 %v1677
      %v1870 = vpack.c.b16 %v1742, %v1742
      %v1871 = vpack.c.b16 %v1743, %v1743
      %v1872 = vpack.c.b16 %v1744, %v1744
      %v1873 = vpack.c.b16 %v1745, %v1745
      %v1874 = vpack.c.b16 %v1746, %v1746
      %v1875 = vpack.c.b16 %v1747, %v1747
      %v1876 = vpack.c.b16 %v1748, %v1748
      %v1877 = vpack.c.b16 %v1749, %v1749
      %v1878 = vpack.c.b16 %v1750, %v1750
      %v1879 = vpack.c.b16 %v1751, %v1751
      %v1880 = vpack.c.b16 %v1752, %v1752
      %v1881 = vpack.c.b16 %v1753, %v1753
      %v1882 = vpack.c.b16 %v1754, %v1754
      %v1883 = vpack.c.b16 %v1755, %v1755
      %v1884 = vpack.c.b16 %v1756, %v1756
      %v1885 = vpack.c.b16 %v1757, %v1757
      %v1886 = vpack.c.b16 %v1758, %v1758
      %v1887 = vpack.c.b16 %v1759, %v1759
      %v1888 = vpack.c.b16 %v1760, %v1760
      %v1889 = vpack.c.b16 %v1761, %v1761
      %v1890 = vpack.c.b16 %v1762, %v1762
      %v1891 = vpack.c.b16 %v1763, %v1763
      %v1892 = vpack.c.b16 %v1764, %v1764
      %v1893 = vpack.c.b16 %v1765, %v1765
      %v1894 = vpack.c.b16 %v1766, %v1766
      %v1895 = vpack.c.b16 %v1767, %v1767
      %v1896 = vpack.c.b16 %v1768, %v1768
      %v1897 = vpack.c.b16 %v1769, %v1769
      %v1898 = vpack.c.b16 %v1770, %v1770
      %v1899 = vpack.c.b16 %v1771, %v1771
      %v1900 = vpack.c.b16 %v1772, %v1772
      %v1901 = vpack.c.b16 %v1773, %v1773
      %v1902 = vpack.c.b16 %v1774, %v1774
      %v1903 = vpack.c.b16 %v1775, %v1775
      %v1904 = vpack.c.b16 %v1776, %v1776
      %v1905 = vpack.c.b16 %v1777, %v1777
      %v1906 = vpack.c.b16 %v1778, %v1778
      %v1907 = vpack.c.b16 %v1779, %v1779
      %v1908 = vpack.c.b16 %v1780, %v1780
      %v1909 = vpack.c.b16 %v1781, %v1781
      %v1910 = vpack.c.b16 %v1782, %v1782
      %v1911 = vpack.c.b16 %v1783, %v1783
      %v1912 = vpack.c.b16 %v1784, %v1784
      %v1913 = vpack.c.b16 %v1785, %v1785
      %v1914 = vpack.c.b16 %v1786, %v1786
      %v1915 = vpack.c.b16 %v1787, %v1787
      %v1916 = vpack.c.b16 %v1788, %v1788
      %v1917 = vpack.c.b16 %v1789, %v1789
      %v1918 = vpack.c.b16 %v1790, %v1790
      %v1919 = vpack.c.b16 %v1791, %v1791
      %v1920 = vpack.c.b16 %v1792, %v1792
      %v1921 = vpack.c.b16 %v1793, %v1793
      %v1922 = vpack.c.b16 %v1794, %v1794
      %v1923 = vpack.c.b16 %v1795, %v1795
      %v1924 = vpack.c.b16 %v1796, %v1796
      %v1925 = vpack.c.b16 %v1797, %v1797
      %v1926 = vpack.c.b16 %v1798, %v1798
      %v1927 = vpack.c.b16 %v1799, %v1799
      %v1928 = vpack.c.b16 %v1800, %v1800
      %v1929 = vpack.c.b16 %v1801, %v1801
      %v1930 = vpack.c.b16 %v1802, %v1802
      %v1931 = vpack.c.b16 %v1803, %v1803
      %v1932 = vpack.c.b16 %v1804, %v1804
      %v1933 = vpack.c.b16 %v1805, %v1805
      %v1934 = vpack.c.b16 %v1806, %v1806
      %v1935 = vpack.c.b16 %v1807, %v1807
      %v1936 = vpack.c.b16 %v1808, %v1808
      %v1937 = vpack.c.b16 %v1809, %v1809
      %v1938 = vpack.c.b16 %v1810, %v1810
      %v1939 = vpack.c.b16 %v1811, %v1811
      %v1940 = vpack.c.b16 %v1812, %v1812
      %v1941 = vpack.c.b16 %v1813, %v1813
      %v1942 = vpack.c.b16 %v1814, %v1814
      %v1943 = vpack.c.b16 %v1815, %v1815
      %v1944 = vpack.c.b16 %v1816, %v1816
      %v1945 = vpack.c.b16 %v1817, %v1817
      %v1946 = vpack.c.b16 %v1818, %v1818
      %v1947 = vpack.c.b16 %v1819, %v1819
      %v1948 = vpack.c.b16 %v1820, %v1820
      %v1949 = vpack.c.b16 %v1821, %v1821
      %v1950 = vpack.c.b16 %v1822, %v1822
      %v1951 = vpack.c.b16 %v1823, %v1823
      %v1952 = vpack.c.b16 %v1824, %v1824
      %v1953 = vpack.c.b16 %v1825, %v1825
      %v1954 = vpack.c.b16 %v1826, %v1826
      %v1955 = vpack.c.b16 %v1827, %v1827
      %v1956 = vpack.c.b16 %v1828, %v1828
      %v1957 = vpack.c.b16 %v1829, %v1829
      %v1958 = vpack.c.b16 %v1830, %v1830
      %v1959 = vpack.c.b16 %v1831, %v1831
      %v1960 = vpack.c.b16 %v1832, %v1832
      %v1961 = vpack.c.b16 %v1833, %v1833
      %v1962 = vpack.c.b16 %v1834, %v1834
      %v1963 = vpack.c.b16 %v1835, %v1835
      %v1964 = vpack.c.b16 %v1836, %v1836
      %v1965 = vpack.c.b16 %v1837, %v1837
      %v1966 = vpack.c.b16 %v1838, %v1838
      %v1967 = vpack.c.b16 %v1839, %v1839
      %v1968 = vpack.c.b16 %v1840, %v1840
      %v1969 = vpack.c.b16 %v1841, %v1841
      %v1970 = vpack.c.b16 %v1842, %v1842
      %v1971 = vpack.c.b16 %v1843, %v1843
      %v1972 = vpack.c.b16 %v1844, %v1844
      %v1973 = vpack.c.b16 %v1845, %v1845
      %v1974 = vpack.c.b16 %v1846, %v1846
      %v1975 = vpack.c.b16 %v1847, %v1847
      %v1976 = vpack.c.b16 %v1848, %v1848
      %v1977 = vpack.c.b16 %v1849, %v1849
      %v1978 = vpack.c.b16 %v1850, %v1850
      %v1979 = vpack.c.b16 %v1851, %v1851
      %v1980 = vpack.c.b16 %v1852, %v1852
      %v1981 = vpack.c.b16 %v1853, %v1853
      %v1982 = vpack.c.b16 %v1854, %v1854
      %v1983 = vpack.c.b16 %v1855, %v1855
      %v1984 = vpack.c.b16 %v1856, %v1856
      %v1985 = vpack.c.b16 %v1857, %v1857
      %v1986 = vpack.c.b16 %v1858, %v1858
      %v1987 = vpack.c.b16 %v1859, %v1859
      %v1988 = vpack.c.b16 %v1860, %v1860
      %v1989 = vpack.c.b16 %v1861, %v1861
      %v1990 = vpack.c.b16 %v1862, %v1862
      %v1991 = vpack.c.b16 %v1863, %v1863
      %v1992 = vpack.c.b16 %v1864, %v1864
      %v1993 = vpack.c.b16 %v1865, %v1865
      %v1994 = vpack.c.b16 %v1866, %v1866
      %v1995 = vpack.c.b16 %v1867, %v1867
      %v1996 = vpack.c.b16 %v1868, %v1868
      %v1997 = vpack.c.b16 %v1869, %v1869
      %2126 = vst [vmem:[%s145] sm:$0xf] %v1870
      %2127 = vst [vmem:[%s145 + $0x4] sm:$0xf] %v1871
      %2128 = vst [vmem:[%s145 + $0x8] sm:$0xf] %v1872
      %2129 = vst [vmem:[%s145 + $0xc] sm:$0xf] %v1873
      %2130 = vst [vmem:[%s145 + $0x10] sm:$0xf] %v1874
      %2131 = vst [vmem:[%s145 + $0x14] sm:$0xf] %v1875
      %2132 = vst [vmem:[%s145 + $0x18] sm:$0xf] %v1876
      %2133 = vst [vmem:[%s145 + $0x1c] sm:$0xf] %v1877
      %2134 = vst [vmem:[%s145 + $0x20] sm:$0xf] %v1878
      %2135 = vst [vmem:[%s145 + $0x24] sm:$0xf] %v1879
      %2136 = vst [vmem:[%s145 + $0x28] sm:$0xf] %v1880
      %2137 = vst [vmem:[%s145 + $0x2c] sm:$0xf] %v1881
      %2138 = vst [vmem:[%s145 + $0x30] sm:$0xf] %v1882
      %2139 = vst [vmem:[%s145 + $0x34] sm:$0xf] %v1883
      %2140 = vst [vmem:[%s145 + $0x38] sm:$0xf] %v1884
      %2141 = vst [vmem:[%s145 + $0x3c] sm:$0xf] %v1885
      %2142 = vst [vmem:[%s145 + $0x40] sm:$0xf] %v1886
      %2143 = vst [vmem:[%s145 + $0x44] sm:$0xf] %v1887
      %2144 = vst [vmem:[%s145 + $0x48] sm:$0xf] %v1888
      %2145 = vst [vmem:[%s145 + $0x4c] sm:$0xf] %v1889
      %2146 = vst [vmem:[%s145 + $0x50] sm:$0xf] %v1890
      %2147 = vst [vmem:[%s145 + $0x54] sm:$0xf] %v1891
      %2148 = vst [vmem:[%s145 + $0x58] sm:$0xf] %v1892
      %2149 = vst [vmem:[%s145 + $0x5c] sm:$0xf] %v1893
      %2150 = vst [vmem:[%s145 + $0x60] sm:$0xf] %v1894
      %2151 = vst [vmem:[%s145 + $0x64] sm:$0xf] %v1895
      %2152 = vst [vmem:[%s145 + $0x68] sm:$0xf] %v1896
      %2153 = vst [vmem:[%s145 + $0x6c] sm:$0xf] %v1897
      %2154 = vst [vmem:[%s145 + $0x70] sm:$0xf] %v1898
      %2155 = vst [vmem:[%s145 + $0x74] sm:$0xf] %v1899
      %2156 = vst [vmem:[%s145 + $0x78] sm:$0xf] %v1900
      %2157 = vst [vmem:[%s145 + $0x7c] sm:$0xf] %v1901
      %2158 = vst [vmem:[%s145 + $0x80] sm:$0xf] %v1902
      %2159 = vst [vmem:[%s145 + $0x84] sm:$0xf] %v1903
      %2160 = vst [vmem:[%s145 + $0x88] sm:$0xf] %v1904
      %2161 = vst [vmem:[%s145 + $0x8c] sm:$0xf] %v1905
      %2162 = vst [vmem:[%s145 + $0x90] sm:$0xf] %v1906
      %2163 = vst [vmem:[%s145 + $0x94] sm:$0xf] %v1907
      %2164 = vst [vmem:[%s145 + $0x98] sm:$0xf] %v1908
      %2165 = vst [vmem:[%s145 + $0x9c] sm:$0xf] %v1909
      %2166 = vst [vmem:[%s145 + $0xa0] sm:$0xf] %v1910
      %2167 = vst [vmem:[%s145 + $0xa4] sm:$0xf] %v1911
      %2168 = vst [vmem:[%s145 + $0xa8] sm:$0xf] %v1912
      %2169 = vst [vmem:[%s145 + $0xac] sm:$0xf] %v1913
      %2170 = vst [vmem:[%s145 + $0xb0] sm:$0xf] %v1914
      %2171 = vst [vmem:[%s145 + $0xb4] sm:$0xf] %v1915
      %2172 = vst [vmem:[%s145 + $0xb8] sm:$0xf] %v1916
      %2173 = vst [vmem:[%s145 + $0xbc] sm:$0xf] %v1917
      %2174 = vst [vmem:[%s145 + $0xc0] sm:$0xf] %v1918
      %2175 = vst [vmem:[%s145 + $0xc4] sm:$0xf] %v1919
      %2176 = vst [vmem:[%s145 + $0xc8] sm:$0xf] %v1920
      %2177 = vst [vmem:[%s145 + $0xcc] sm:$0xf] %v1921
      %2178 = vst [vmem:[%s145 + $0xd0] sm:$0xf] %v1922
      %2179 = vst [vmem:[%s145 + $0xd4] sm:$0xf] %v1923
      %2180 = vst [vmem:[%s145 + $0xd8] sm:$0xf] %v1924
      %2181 = vst [vmem:[%s145 + $0xdc] sm:$0xf] %v1925
      %2182 = vst [vmem:[%s145 + $0xe0] sm:$0xf] %v1926
      %2183 = vst [vmem:[%s145 + $0xe4] sm:$0xf] %v1927
      %2184 = vst [vmem:[%s145 + $0xe8] sm:$0xf] %v1928
      %2185 = vst [vmem:[%s145 + $0xec] sm:$0xf] %v1929
      %2186 = vst [vmem:[%s145 + $0xf0] sm:$0xf] %v1930
      %2187 = vst [vmem:[%s145 + $0xf4] sm:$0xf] %v1931
      %2188 = vst [vmem:[%s145 + $0xf8] sm:$0xf] %v1932
      %2189 = vst [vmem:[%s145 + $0xfc] sm:$0xf] %v1933
      %2190 = vst [vmem:[%s145 + $0x100] sm:$0xf] %v1934
      %2191 = vst [vmem:[%s145 + $0x104] sm:$0xf] %v1935
      %2192 = vst [vmem:[%s145 + $0x108] sm:$0xf] %v1936
      %2193 = vst [vmem:[%s145 + $0x10c] sm:$0xf] %v1937
      %2194 = vst [vmem:[%s145 + $0x110] sm:$0xf] %v1938
      %2195 = vst [vmem:[%s145 + $0x114] sm:$0xf] %v1939
      %2196 = vst [vmem:[%s145 + $0x118] sm:$0xf] %v1940
      %2197 = vst [vmem:[%s145 + $0x11c] sm:$0xf] %v1941
      %2198 = vst [vmem:[%s145 + $0x120] sm:$0xf] %v1942
      %2199 = vst [vmem:[%s145 + $0x124] sm:$0xf] %v1943
      %2200 = vst [vmem:[%s145 + $0x128] sm:$0xf] %v1944
      %2201 = vst [vmem:[%s145 + $0x12c] sm:$0xf] %v1945
      %2202 = vst [vmem:[%s145 + $0x130] sm:$0xf] %v1946
      %2203 = vst [vmem:[%s145 + $0x134] sm:$0xf] %v1947
      %2204 = vst [vmem:[%s145 + $0x138] sm:$0xf] %v1948
      %2205 = vst [vmem:[%s145 + $0x13c] sm:$0xf] %v1949
      %2206 = vst [vmem:[%s145 + $0x140] sm:$0xf] %v1950
      %2207 = vst [vmem:[%s145 + $0x144] sm:$0xf] %v1951
      %2208 = vst [vmem:[%s145 + $0x148] sm:$0xf] %v1952
      %2209 = vst [vmem:[%s145 + $0x14c] sm:$0xf] %v1953
      %2210 = vst [vmem:[%s145 + $0x150] sm:$0xf] %v1954
      %2211 = vst [vmem:[%s145 + $0x154] sm:$0xf] %v1955
      %2212 = vst [vmem:[%s145 + $0x158] sm:$0xf] %v1956
      %2213 = vst [vmem:[%s145 + $0x15c] sm:$0xf] %v1957
      %2214 = vst [vmem:[%s145 + $0x160] sm:$0xf] %v1958
      %2215 = vst [vmem:[%s145 + $0x164] sm:$0xf] %v1959
      %2216 = vst [vmem:[%s145 + $0x168] sm:$0xf] %v1960
      %2217 = vst [vmem:[%s145 + $0x16c] sm:$0xf] %v1961
      %2218 = vst [vmem:[%s145 + $0x170] sm:$0xf] %v1962
      %2219 = vst [vmem:[%s145 + $0x174] sm:$0xf] %v1963
      %2220 = vst [vmem:[%s145 + $0x178] sm:$0xf] %v1964
      %2221 = vst [vmem:[%s145 + $0x17c] sm:$0xf] %v1965
      %2222 = vst [vmem:[%s145 + $0x180] sm:$0xf] %v1966
      %2223 = vst [vmem:[%s145 + $0x184] sm:$0xf] %v1967
      %2224 = vst [vmem:[%s145 + $0x188] sm:$0xf] %v1968
      %2225 = vst [vmem:[%s145 + $0x18c] sm:$0xf] %v1969
      %2226 = vst [vmem:[%s145 + $0x190] sm:$0xf] %v1970
      %2227 = vst [vmem:[%s145 + $0x194] sm:$0xf] %v1971
      %2228 = vst [vmem:[%s145 + $0x198] sm:$0xf] %v1972
      %2229 = vst [vmem:[%s145 + $0x19c] sm:$0xf] %v1973
      %2230 = vst [vmem:[%s145 + $0x1a0] sm:$0xf] %v1974
      %2231 = vst [vmem:[%s145 + $0x1a4] sm:$0xf] %v1975
      %2232 = vst [vmem:[%s145 + $0x1a8] sm:$0xf] %v1976
      %2233 = vst [vmem:[%s145 + $0x1ac] sm:$0xf] %v1977
      %2234 = vst [vmem:[%s145 + $0x1b0] sm:$0xf] %v1978
      %2235 = vst [vmem:[%s145 + $0x1b4] sm:$0xf] %v1979
      %2236 = vst [vmem:[%s145 + $0x1b8] sm:$0xf] %v1980
      %2237 = vst [vmem:[%s145 + $0x1bc] sm:$0xf] %v1981
      %2238 = vst [vmem:[%s145 + $0x1c0] sm:$0xf] %v1982
      %2239 = vst [vmem:[%s145 + $0x1c4] sm:$0xf] %v1983
      %2240 = vst [vmem:[%s145 + $0x1c8] sm:$0xf] %v1984
      %2241 = vst [vmem:[%s145 + $0x1cc] sm:$0xf] %v1985
      %2242 = vst [vmem:[%s145 + $0x1d0] sm:$0xf] %v1986
      %2243 = vst [vmem:[%s145 + $0x1d4] sm:$0xf] %v1987
      %2244 = vst [vmem:[%s145 + $0x1d8] sm:$0xf] %v1988
      %2245 = vst [vmem:[%s145 + $0x1dc] sm:$0xf] %v1989
      %2246 = vst [vmem:[%s145 + $0x1e0] sm:$0xf] %v1990
      %2247 = vst [vmem:[%s145 + $0x1e4] sm:$0xf] %v1991
      %2248 = vst [vmem:[%s145 + $0x1e8] sm:$0xf] %v1992
      %2249 = vst [vmem:[%s145 + $0x1ec] sm:$0xf] %v1993
      %2250 = vst [vmem:[%s145 + $0x1f0] sm:$0xf] %v1994
      %2251 = vst [vmem:[%s145 + $0x1f4] sm:$0xf] %v1995
      %2252 = vst [vmem:[%s145 + $0x1f8] sm:$0xf] %v1996
      %2253 = vst [vmem:[%s145 + $0x1fc] sm:$0xf] %v1997
      %s2254 = smul.u32 128, %s13
      %p2255 = scmp.lt.s32.totalorder %s2254, 255
      %s2256 = scalar_select %p2255, %s2254, 255
      %s2257 = smul.addr %s2256, 4
      %s2258 = scalar_lea.vmem %s2, %s2257
      // Predicated region
      $region29: #{netD_forward.4} parent=27 // pred_check
        %p2259 = pneg %p78
      $region30: #{netD_forward.4} parent=27 // pred_check_branch
        %2261 = sbr.rel (%p2259) target = $region32
      $region31: #{netD_forward.4} parent=27 // pred_region
        %s2262 = smul.u32 128, %s13
      $region32: #{netD_forward.4} parent=27 // pred_fallthru
        _
    $region28: #{netD_forward.4} parent=5 // pred_fallthru
      _
    %p2263 = scmp.le.s32.totalorder 2, %s8
    // Predicated region
    $region33: #{netD_forward.4} parent=5 // pred_check
      %p2264 = pneg %p2263
    $region34: #{netD_forward.4} parent=5 // pred_check_branch
      %2266 = sbr.rel (%p2264) target = $region36
    $region35: #{netD_forward.4} parent=5 // pred_region
      %s2267 = ssub.s32 %s8, 2
      // Predicated region
      $region37: #{netD_forward.4} parent=35 // pred_check
        %p2268 = pneg %p84
      $region38: #{netD_forward.4} parent=35 // pred_check_branch
        %2270 = sbr.rel (%p2268) target = $region40
      $region39: #{netD_forward.4} parent=35 // pred_region
        %s2271 = smul.u32 128, %s14
        %p2272 = scmp.lt.s32.totalorder %s2271, 255
        %s2273 = scalar_select %p2272, %s2271, 255
        %s2274 = smul.addr %s2273, 4
        %s2275 = scalar_lea.vmem %s2, %s2274
      $region40: #{netD_forward.4} parent=35 // pred_fallthru
        _
    $region36: #{netD_forward.4} parent=5 // pred_fallthru
      _
  $region6: #{netD_forward.4} parent=0 // loop_footer
    %s12 = sadd.s32 1, %s8
  $region7: #{netD_forward.4} parent=0 // loop_footer_branch
    %7 = sbr.rel target = $region3
  $region8: #{netD_forward.4} parent=0 // loop_exit
    _

// kernel: netD_forward.5
$region0: #{netD_forward.5}
  #allocation0 [shape = 'u32[]', space=smem, size = 0x4, offset = 0x4, fixed_abs, tag = 'smem constant byte address 0x4 - core index']
  #allocation1 [shape = 'u32[144,128]{1,0:T(1,128)}', space=vmem, size = 0x12000, scoped, tag = 'internal scratch']
  #allocation2 [shape = 'f32[512,128]{1,0:T(8,128)}', space=vmem, size = 0x40000, scoped, tag = 'scratch operand']
  %s0 = inlined_call_operand.vmem [shape: bf16[512,128], index: 0, kind: input, shape index: {}]
  %s1 = inlined_call_operand.vmem [shape: bf16[128,128], index: 1, kind: input, shape index: {}]
  %s2 = inlined_call_operand.vmem [shape: f32[1,128], index: 2, kind: input, shape index: {}]
  %s3 = inlined_call_operand.vmem [shape: f32[1,128], index: 3, kind: input, shape index: {}]
  %s4 = inlined_call_operand.vmem [shape: bf16[512,128], index: 4, kind: output, shape index: {}]
  %s5 = sld [smem:[#allocation0]]
  $region30: #{netD_forward.5} parent=0
    _
  %s7 = ssub.s32 1, %s5
  %s8 = scalar_select 0, %s7, %s5
  // Predicated region
  $region2: #{netD_forward.5} parent=0 // pred_check
    _
  $region3: #{netD_forward.5} parent=0 // pred_check_branch
    %10 = sbr.rel (0) target = $region5
  $region4: #{netD_forward.5} parent=0 // pred_region
    _
  $region5: #{netD_forward.5} parent=0 // pred_fallthru
    _
  // Predicated region
  $region6: #{netD_forward.5} parent=0 // pred_check
    _
  $region7: #{netD_forward.5} parent=0 // pred_check_branch
    %12 = sbr.rel (0) target = $region9
  $region8: #{netD_forward.5} parent=0 // pred_region
    _
  $region9: #{netD_forward.5} parent=0 // pred_fallthru
    _
  // Predicated region
  $region10: #{netD_forward.5} parent=0 // pred_check
    _
  $region11: #{netD_forward.5} parent=0 // pred_check_branch
    %14 = sbr.rel (0) target = $region13
  $region12: #{netD_forward.5} parent=0 // pred_region
    _
  $region13: #{netD_forward.5} parent=0 // pred_fallthru
    _
  // Predicated region
  $region14: #{netD_forward.5} parent=0 // pred_check
    _
  $region15: #{netD_forward.5} parent=0 // pred_check_branch
    %16 = sbr.rel (0) target = $region17
  $region16: #{netD_forward.5} parent=0 // pred_region
    _
  $region17: #{netD_forward.5} parent=0 // pred_fallthru
    _
  %s18 = smul.u32 0, 512
  %v19 = vld [vmem:[%s0] sm:$0xf]
  %v20 = vld [vmem:[%s0 + $0x4] sm:$0xf]
  %v21 = vld [vmem:[%s0 + $0x8] sm:$0xf]
  %v22 = vld [vmem:[%s0 + $0xc] sm:$0xf]
  %v23 = vld [vmem:[%s0 + $0x10] sm:$0xf]
  %v24 = vld [vmem:[%s0 + $0x14] sm:$0xf]
  %v25 = vld [vmem:[%s0 + $0x18] sm:$0xf]
  %v26 = vld [vmem:[%s0 + $0x1c] sm:$0xf]
  %v27 = vld [vmem:[%s0 + $0x20] sm:$0xf]
  %v28 = vld [vmem:[%s0 + $0x24] sm:$0xf]
  %v29 = vld [vmem:[%s0 + $0x28] sm:$0xf]
  %v30 = vld [vmem:[%s0 + $0x2c] sm:$0xf]
  %v31 = vld [vmem:[%s0 + $0x30] sm:$0xf]
  %v32 = vld [vmem:[%s0 + $0x34] sm:$0xf]
  %v33 = vld [vmem:[%s0 + $0x38] sm:$0xf]
  %v34 = vld [vmem:[%s0 + $0x3c] sm:$0xf]
  %v35 = vld [vmem:[%s0 + $0x40] sm:$0xf]
  %v36 = vld [vmem:[%s0 + $0x44] sm:$0xf]
  %v37 = vld [vmem:[%s0 + $0x48] sm:$0xf]
  %v38 = vld [vmem:[%s0 + $0x4c] sm:$0xf]
  %v39 = vld [vmem:[%s0 + $0x50] sm:$0xf]
  %v40 = vld [vmem:[%s0 + $0x54] sm:$0xf]
  %v41 = vld [vmem:[%s0 + $0x58] sm:$0xf]
  %v42 = vld [vmem:[%s0 + $0x5c] sm:$0xf]
  %v43 = vld [vmem:[%s0 + $0x60] sm:$0xf]
  %v44 = vld [vmem:[%s0 + $0x64] sm:$0xf]
  %v45 = vld [vmem:[%s0 + $0x68] sm:$0xf]
  %v46 = vld [vmem:[%s0 + $0x6c] sm:$0xf]
  %v47 = vld [vmem:[%s0 + $0x70] sm:$0xf]
  %v48 = vld [vmem:[%s0 + $0x74] sm:$0xf]
  %v49 = vld [vmem:[%s0 + $0x78] sm:$0xf]
  %v50 = vld [vmem:[%s0 + $0x7c] sm:$0xf]
  %v51 = vld [vmem:[%s0 + $0x80] sm:$0xf]
  %v52 = vld [vmem:[%s0 + $0x84] sm:$0xf]
  %v53 = vld [vmem:[%s0 + $0x88] sm:$0xf]
  %v54 = vld [vmem:[%s0 + $0x8c] sm:$0xf]
  %v55 = vld [vmem:[%s0 + $0x90] sm:$0xf]
  %v56 = vld [vmem:[%s0 + $0x94] sm:$0xf]
  %v57 = vld [vmem:[%s0 + $0x98] sm:$0xf]
  %v58 = vld [vmem:[%s0 + $0x9c] sm:$0xf]
  %v59 = vld [vmem:[%s0 + $0xa0] sm:$0xf]
  %v60 = vld [vmem:[%s0 + $0xa4] sm:$0xf]
  %v61 = vld [vmem:[%s0 + $0xa8] sm:$0xf]
  %v62 = vld [vmem:[%s0 + $0xac] sm:$0xf]
  %v63 = vld [vmem:[%s0 + $0xb0] sm:$0xf]
  %v64 = vld [vmem:[%s0 + $0xb4] sm:$0xf]
  %v65 = vld [vmem:[%s0 + $0xb8] sm:$0xf]
  %v66 = vld [vmem:[%s0 + $0xbc] sm:$0xf]
  %v67 = vld [vmem:[%s0 + $0xc0] sm:$0xf]
  %v68 = vld [vmem:[%s0 + $0xc4] sm:$0xf]
  %v69 = vld [vmem:[%s0 + $0xc8] sm:$0xf]
  %v70 = vld [vmem:[%s0 + $0xcc] sm:$0xf]
  %v71 = vld [vmem:[%s0 + $0xd0] sm:$0xf]
  %v72 = vld [vmem:[%s0 + $0xd4] sm:$0xf]
  %v73 = vld [vmem:[%s0 + $0xd8] sm:$0xf]
  %v74 = vld [vmem:[%s0 + $0xdc] sm:$0xf]
  %v75 = vld [vmem:[%s0 + $0xe0] sm:$0xf]
  %v76 = vld [vmem:[%s0 + $0xe4] sm:$0xf]
  %v77 = vld [vmem:[%s0 + $0xe8] sm:$0xf]
  %v78 = vld [vmem:[%s0 + $0xec] sm:$0xf]
  %v79 = vld [vmem:[%s0 + $0xf0] sm:$0xf]
  %v80 = vld [vmem:[%s0 + $0xf4] sm:$0xf]
  %v81 = vld [vmem:[%s0 + $0xf8] sm:$0xf]
  %v82 = vld [vmem:[%s0 + $0xfc] sm:$0xf]
  %v83 = vld [vmem:[%s1] sm:$0xf]
  %v84 = vld [vmem:[%s1 + $0x4] sm:$0xf]
  %v85 = vld [vmem:[%s1 + $0x8] sm:$0xf]
  %v86 = vld [vmem:[%s1 + $0xc] sm:$0xf]
  %v87 = vld [vmem:[%s1 + $0x10] sm:$0xf]
  %v88 = vld [vmem:[%s1 + $0x14] sm:$0xf]
  %v89 = vld [vmem:[%s1 + $0x18] sm:$0xf]
  %v90 = vld [vmem:[%s1 + $0x1c] sm:$0xf]
  %v91 = vld [vmem:[%s1 + $0x20] sm:$0xf]
  %v92 = vld [vmem:[%s1 + $0x24] sm:$0xf]
  %v93 = vld [vmem:[%s1 + $0x28] sm:$0xf]
  %v94 = vld [vmem:[%s1 + $0x2c] sm:$0xf]
  %v95 = vld [vmem:[%s1 + $0x30] sm:$0xf]
  %v96 = vld [vmem:[%s1 + $0x34] sm:$0xf]
  %v97 = vld [vmem:[%s1 + $0x38] sm:$0xf]
  %v98 = vld [vmem:[%s1 + $0x3c] sm:$0xf]
  %v163 = vunpack.c.l.b16 %v19
  %v164 = vunpack.c.l.b16 %v20
  %v165 = vunpack.c.l.b16 %v21
  %v166 = vunpack.c.l.b16 %v22
  %v167 = vunpack.c.l.b16 %v23
  %v168 = vunpack.c.l.b16 %v24
  %v169 = vunpack.c.l.b16 %v25
  %v170 = vunpack.c.l.b16 %v26
  %v171 = vunpack.c.l.b16 %v27
  %v172 = vunpack.c.l.b16 %v28
  %v173 = vunpack.c.l.b16 %v29
  %v174 = vunpack.c.l.b16 %v30
  %v175 = vunpack.c.l.b16 %v31
  %v176 = vunpack.c.l.b16 %v32
  %v177 = vunpack.c.l.b16 %v33
  %v178 = vunpack.c.l.b16 %v34
  %v179 = vunpack.c.l.b16 %v35
  %v180 = vunpack.c.l.b16 %v36
  %v181 = vunpack.c.l.b16 %v37
  %v182 = vunpack.c.l.b16 %v38
  %v183 = vunpack.c.l.b16 %v39
  %v184 = vunpack.c.l.b16 %v40
  %v185 = vunpack.c.l.b16 %v41
  %v186 = vunpack.c.l.b16 %v42
  %v187 = vunpack.c.l.b16 %v43
  %v188 = vunpack.c.l.b16 %v44
  %v189 = vunpack.c.l.b16 %v45
  %v190 = vunpack.c.l.b16 %v46
  %v191 = vunpack.c.l.b16 %v47
  %v192 = vunpack.c.l.b16 %v48
  %v193 = vunpack.c.l.b16 %v49
  %v194 = vunpack.c.l.b16 %v50
  %v195 = vunpack.c.l.b16 %v51
  %v196 = vunpack.c.l.b16 %v52
  %v197 = vunpack.c.l.b16 %v53
  %v198 = vunpack.c.l.b16 %v54
  %v199 = vunpack.c.l.b16 %v55
  %v200 = vunpack.c.l.b16 %v56
  %v201 = vunpack.c.l.b16 %v57
  %v202 = vunpack.c.l.b16 %v58
  %v203 = vunpack.c.l.b16 %v59
  %v204 = vunpack.c.l.b16 %v60
  %v205 = vunpack.c.l.b16 %v61
  %v206 = vunpack.c.l.b16 %v62
  %v207 = vunpack.c.l.b16 %v63
  %v208 = vunpack.c.l.b16 %v64
  %v209 = vunpack.c.l.b16 %v65
  %v210 = vunpack.c.l.b16 %v66
  %v211 = vunpack.c.l.b16 %v67
  %v212 = vunpack.c.l.b16 %v68
  %v213 = vunpack.c.l.b16 %v69
  %v214 = vunpack.c.l.b16 %v70
  %v215 = vunpack.c.l.b16 %v71
  %v216 = vunpack.c.l.b16 %v72
  %v217 = vunpack.c.l.b16 %v73
  %v218 = vunpack.c.l.b16 %v74
  %v219 = vunpack.c.l.b16 %v75
  %v220 = vunpack.c.l.b16 %v76
  %v221 = vunpack.c.l.b16 %v77
  %v222 = vunpack.c.l.b16 %v78
  %v223 = vunpack.c.l.b16 %v79
  %v224 = vunpack.c.l.b16 %v80
  %v225 = vunpack.c.l.b16 %v81
  %v226 = vunpack.c.l.b16 %v82
  %v227 = vpack.c.b16 %v164, %v163
  %v228 = vpack.c.b16 %v166, %v165
  %v229 = vpack.c.b16 %v168, %v167
  %v230 = vpack.c.b16 %v170, %v169
  %v231 = vpack.c.b16 %v172, %v171
  %v232 = vpack.c.b16 %v174, %v173
  %v233 = vpack.c.b16 %v176, %v175
  %v234 = vpack.c.b16 %v178, %v177
  %v235 = vpack.c.b16 %v180, %v179
  %v236 = vpack.c.b16 %v182, %v181
  %v237 = vpack.c.b16 %v184, %v183
  %v238 = vpack.c.b16 %v186, %v185
  %v239 = vpack.c.b16 %v188, %v187
  %v240 = vpack.c.b16 %v190, %v189
  %v241 = vpack.c.b16 %v192, %v191
  %v242 = vpack.c.b16 %v194, %v193
  %v243 = vpack.c.b16 %v196, %v195
  %v244 = vpack.c.b16 %v198, %v197
  %v245 = vpack.c.b16 %v200, %v199
  %v246 = vpack.c.b16 %v202, %v201
  %v247 = vpack.c.b16 %v204, %v203
  %v248 = vpack.c.b16 %v206, %v205
  %v249 = vpack.c.b16 %v208, %v207
  %v250 = vpack.c.b16 %v210, %v209
  %v251 = vpack.c.b16 %v212, %v211
  %v252 = vpack.c.b16 %v214, %v213
  %v253 = vpack.c.b16 %v216, %v215
  %v254 = vpack.c.b16 %v218, %v217
  %v255 = vpack.c.b16 %v220, %v219
  %v256 = vpack.c.b16 %v222, %v221
  %v257 = vpack.c.b16 %v224, %v223
  %v258 = vpack.c.b16 %v226, %v225
  %v307 = vunpack.c.l.b16 %v83
  %v308 = vunpack.c.l.b16 %v84
  %v309 = vunpack.c.l.b16 %v85
  %v310 = vunpack.c.l.b16 %v86
  %v311 = vunpack.c.l.b16 %v87
  %v312 = vunpack.c.l.b16 %v88
  %v313 = vunpack.c.l.b16 %v89
  %v314 = vunpack.c.l.b16 %v90
  %v315 = vunpack.c.l.b16 %v91
  %v316 = vunpack.c.l.b16 %v92
  %v317 = vunpack.c.l.b16 %v93
  %v318 = vunpack.c.l.b16 %v94
  %v319 = vunpack.c.l.b16 %v95
  %v320 = vunpack.c.l.b16 %v96
  %v321 = vunpack.c.l.b16 %v97
  %v322 = vunpack.c.l.b16 %v98
  %v323 = vpack.c.b16 %v308, %v307
  %v324 = vpack.c.b16 %v310, %v309
  %v325 = vpack.c.b16 %v312, %v311
  %v326 = vpack.c.b16 %v314, %v313
  %v327 = vpack.c.b16 %v316, %v315
  %v328 = vpack.c.b16 %v318, %v317
  %v329 = vpack.c.b16 %v320, %v319
  %v330 = vpack.c.b16 %v322, %v321
  %339 = vmatprep.subr.bf16.mxu0 0
  %340 = vmatpush1.bf16.msra.mxu0 %v323
  %341 = vmatprep.subr.bf16.mxu0 0
  %342 = vmatpush1.bf16.msra.mxu0 %v324
  %343 = vmatprep.subr.bf16.mxu0 0
  %344 = vmatpush1.bf16.msra.mxu0 %v325
  %345 = vmatprep.subr.bf16.mxu0 0
  %346 = vmatpush1.bf16.msra.mxu0 %v326
  %347 = vmatprep.subr.bf16.mxu0 0
  %348 = vmatpush1.bf16.msra.mxu0 %v327
  %349 = vmatprep.subr.bf16.mxu0 0
  %350 = vmatpush1.bf16.msra.mxu0 %v328
  %351 = vmatprep.subr.bf16.mxu0 0
  %352 = vmatpush1.bf16.msra.mxu0 %v329
  %353 = vmatprep.subr.bf16.mxu0 0
  %354 = vmatpush1.bf16.msra.mxu0 %v330
  %355 = vmatprep.subr.bf16.mxu0 0
  %356 = vmatpush1.bf16.msra.mxu0 0
  %357 = vmatprep.subr.bf16.mxu0 0
  %358 = vmatpush1.bf16.msra.mxu0 0
  %359 = vmatprep.subr.bf16.mxu0 0
  %360 = vmatpush1.bf16.msra.mxu0 0
  %361 = vmatprep.subr.bf16.mxu0 0
  %362 = vmatpush1.bf16.msra.mxu0 0
  %363 = vmatprep.subr.bf16.mxu0 0
  %364 = vmatpush1.bf16.msra.mxu0 0
  %365 = vmatprep.subr.bf16.mxu0 0
  %366 = vmatpush1.bf16.msra.mxu0 0
  %367 = vmatprep.subr.bf16.mxu0 0
  %368 = vmatpush1.bf16.msra.mxu0 0
  %369 = vmatprep.subr.bf16.mxu0 0
  %370 = vmatpush1.bf16.msra.mxu0 0
  %371 = vmatprep.mubr.bf16.mxu0 0
  %372 = vmatmul.mubr.bf16.gmra.mrb[0].mxu0 %v227
  %v373 = vpop.f32.mrb[0].mxu0
  %v374 = vadd.f32 0.0, %v373
  %v375 = vpop.f32.mrb[0].mxu0
  %v376 = vpop.f32.mrb[0].mxu0
  %v377 = vadd.f32 0.0, %v376
  %v378 = vpop.f32.mrb[0].mxu0
  %379 = vmatprep.mubr.bf16.mxu0 0
  %380 = vmatmul.mubr.bf16.gmra.mrb[0].mxu0 %v228
  %v381 = vpop.f32.mrb[0].mxu0
  %v382 = vadd.f32 0.0, %v381
  %v383 = vpop.f32.mrb[0].mxu0
  %v384 = vpop.f32.mrb[0].mxu0
  %v385 = vadd.f32 0.0, %v384
  %v386 = vpop.f32.mrb[0].mxu0
  %387 = vmatprep.mubr.bf16.mxu0 0
  %388 = vmatmul.mubr.bf16.gmra.mrb[0].mxu0 %v229
  %v389 = vpop.f32.mrb[0].mxu0
  %v390 = vadd.f32 0.0, %v389
  %v391 = vpop.f32.mrb[0].mxu0
  %v392 = vpop.f32.mrb[0].mxu0
  %v393 = vadd.f32 0.0, %v392
  %v394 = vpop.f32.mrb[0].mxu0
  %395 = vmatprep.mubr.bf16.mxu0 0
  %396 = vmatmul.mubr.bf16.gmra.mrb[0].mxu0 %v230
  %v397 = vpop.f32.mrb[0].mxu0
  %v398 = vadd.f32 0.0, %v397
  %v399 = vpop.f32.mrb[0].mxu0
  %v400 = vpop.f32.mrb[0].mxu0
  %v401 = vadd.f32 0.0, %v400
  %v402 = vpop.f32.mrb[0].mxu0
  %403 = vmatprep.mubr.bf16.mxu0 0
  %404 = vmatmul.mubr.bf16.gmra.mrb[0].mxu0 %v231
  %v405 = vpop.f32.mrb[0].mxu0
  %v406 = vadd.f32 0.0, %v405
  %v407 = vpop.f32.mrb[0].mxu0
  %v408 = vpop.f32.mrb[0].mxu0
  %v409 = vadd.f32 0.0, %v408
  %v410 = vpop.f32.mrb[0].mxu0
  %411 = vmatprep.mubr.bf16.mxu0 0
  %412 = vmatmul.mubr.bf16.gmra.mrb[0].mxu0 %v232
  %v413 = vpop.f32.mrb[0].mxu0
  %v414 = vadd.f32 0.0, %v413
  %v415 = vpop.f32.mrb[0].mxu0
  %v416 = vpop.f32.mrb[0].mxu0
  %v417 = vadd.f32 0.0, %v416
  %v418 = vpop.f32.mrb[0].mxu0
  %419 = vmatprep.mubr.bf16.mxu0 0
  %420 = vmatmul.mubr.bf16.gmra.mrb[0].mxu0 %v233
  %v421 = vpop.f32.mrb[0].mxu0
  %v422 = vadd.f32 0.0, %v421
  %v423 = vpop.f32.mrb[0].mxu0
  %v424 = vpop.f32.mrb[0].mxu0
  %v425 = vadd.f32 0.0, %v424
  %v426 = vpop.f32.mrb[0].mxu0
  %427 = vmatprep.mubr.bf16.mxu0 0
  %428 = vmatmul.mubr.bf16.gmra.mrb[0].mxu0 %v234
  %v429 = vpop.f32.mrb[0].mxu0
  %v430 = vadd.f32 0.0, %v429
  %v431 = vpop.f32.mrb[0].mxu0
  %v432 = vpop.f32.mrb[0].mxu0
  %v433 = vadd.f32 0.0, %v432
  %v434 = vpop.f32.mrb[0].mxu0
  %435 = vmatprep.mubr.bf16.mxu0 0
  %436 = vmatmul.mubr.bf16.gmra.mrb[0].mxu0 %v235
  %v437 = vpop.f32.mrb[0].mxu0
  %v438 = vadd.f32 0.0, %v437
  %v439 = vpop.f32.mrb[0].mxu0
  %v440 = vpop.f32.mrb[0].mxu0
  %v441 = vadd.f32 0.0, %v440
  %v442 = vpop.f32.mrb[0].mxu0
  %443 = vmatprep.mubr.bf16.mxu0 0
  %444 = vmatmul.mubr.bf16.gmra.mrb[0].mxu0 %v236
  %v445 = vpop.f32.mrb[0].mxu0
  %v446 = vadd.f32 0.0, %v445
  %v447 = vpop.f32.mrb[0].mxu0
  %v448 = vpop.f32.mrb[0].mxu0
  %v449 = vadd.f32 0.0, %v448
  %v450 = vpop.f32.mrb[0].mxu0
  %451 = vmatprep.mubr.bf16.mxu0 0
  %452 = vmatmul.mubr.bf16.gmra.mrb[0].mxu0 %v237
  %v453 = vpop.f32.mrb[0].mxu0
  %v454 = vadd.f32 0.0, %v453
  %v455 = vpop.f32.mrb[0].mxu0
  %v456 = vpop.f32.mrb[0].mxu0
  %v457 = vadd.f32 0.0, %v456
  %v458 = vpop.f32.mrb[0].mxu0
  %459 = vmatprep.mubr.bf16.mxu0 0
  %460 = vmatmul.mubr.bf16.gmra.mrb[0].mxu0 %v238
  %v461 = vpop.f32.mrb[0].mxu0
  %v462 = vadd.f32 0.0, %v461
  %v463 = vpop.f32.mrb[0].mxu0
  %v464 = vpop.f32.mrb[0].mxu0
  %v465 = vadd.f32 0.0, %v464
  %v466 = vpop.f32.mrb[0].mxu0
  %467 = vmatprep.mubr.bf16.mxu0 0
  %468 = vmatmul.mubr.bf16.gmra.mrb[0].mxu0 %v239
  %v469 = vpop.f32.mrb[0].mxu0
  %v470 = vadd.f32 0.0, %v469
  %v471 = vpop.f32.mrb[0].mxu0
  %v472 = vpop.f32.mrb[0].mxu0
  %v473 = vadd.f32 0.0, %v472
  %v474 = vpop.f32.mrb[0].mxu0
  %475 = vmatprep.mubr.bf16.mxu0 0
  %476 = vmatmul.mubr.bf16.gmra.mrb[0].mxu0 %v240
  %v477 = vpop.f32.mrb[0].mxu0
  %v478 = vadd.f32 0.0, %v477
  %v479 = vpop.f32.mrb[0].mxu0
  %v480 = vpop.f32.mrb[0].mxu0
  %v481 = vadd.f32 0.0, %v480
  %v482 = vpop.f32.mrb[0].mxu0
  %483 = vmatprep.mubr.bf16.mxu0 0
  %484 = vmatmul.mubr.bf16.gmra.mrb[0].mxu0 %v241
  %v485 = vpop.f32.mrb[0].mxu0
  %v486 = vadd.f32 0.0, %v485
  %v487 = vpop.f32.mrb[0].mxu0
  %v488 = vpop.f32.mrb[0].mxu0
  %v489 = vadd.f32 0.0, %v488
  %v490 = vpop.f32.mrb[0].mxu0
  %491 = vmatprep.mubr.bf16.mxu0 0
  %492 = vmatmul.mubr.bf16.gmra.mrb[0].mxu0 %v242
  %v493 = vpop.f32.mrb[0].mxu0
  %v494 = vadd.f32 0.0, %v493
  %v495 = vpop.f32.mrb[0].mxu0
  %v496 = vpop.f32.mrb[0].mxu0
  %v497 = vadd.f32 0.0, %v496
  %v498 = vpop.f32.mrb[0].mxu0
  %499 = vmatprep.mubr.bf16.mxu0 0
  %500 = vmatmul.mubr.bf16.gmra.mrb[0].mxu0 %v243
  %v501 = vpop.f32.mrb[0].mxu0
  %v502 = vadd.f32 0.0, %v501
  %v503 = vpop.f32.mrb[0].mxu0
  %v504 = vpop.f32.mrb[0].mxu0
  %v505 = vadd.f32 0.0, %v504
  %v506 = vpop.f32.mrb[0].mxu0
  %507 = vmatprep.mubr.bf16.mxu0 0
  %508 = vmatmul.mubr.bf16.gmra.mrb[0].mxu0 %v244
  %v509 = vpop.f32.mrb[0].mxu0
  %v510 = vadd.f32 0.0, %v509
  %v511 = vpop.f32.mrb[0].mxu0
  %v512 = vpop.f32.mrb[0].mxu0
  %v513 = vadd.f32 0.0, %v512
  %v514 = vpop.f32.mrb[0].mxu0
  %515 = vmatprep.mubr.bf16.mxu0 0
  %516 = vmatmul.mubr.bf16.gmra.mrb[0].mxu0 %v245
  %v517 = vpop.f32.mrb[0].mxu0
  %v518 = vadd.f32 0.0, %v517
  %v519 = vpop.f32.mrb[0].mxu0
  %v520 = vpop.f32.mrb[0].mxu0
  %v521 = vadd.f32 0.0, %v520
  %v522 = vpop.f32.mrb[0].mxu0
  %523 = vmatprep.mubr.bf16.mxu0 0
  %524 = vmatmul.mubr.bf16.gmra.mrb[0].mxu0 %v246
  %v525 = vpop.f32.mrb[0].mxu0
  %v526 = vadd.f32 0.0, %v525
  %v527 = vpop.f32.mrb[0].mxu0
  %v528 = vpop.f32.mrb[0].mxu0
  %v529 = vadd.f32 0.0, %v528
  %v530 = vpop.f32.mrb[0].mxu0
  %531 = vmatprep.mubr.bf16.mxu0 0
  %532 = vmatmul.mubr.bf16.gmra.mrb[0].mxu0 %v247
  %v533 = vpop.f32.mrb[0].mxu0
  %v534 = vadd.f32 0.0, %v533
  %v535 = vpop.f32.mrb[0].mxu0
  %v536 = vpop.f32.mrb[0].mxu0
  %v537 = vadd.f32 0.0, %v536
  %v538 = vpop.f32.mrb[0].mxu0
  %539 = vmatprep.mubr.bf16.mxu0 0
  %540 = vmatmul.mubr.bf16.gmra.mrb[0].mxu0 %v248
  %v541 = vpop.f32.mrb[0].mxu0
  %v542 = vadd.f32 0.0, %v541
  %v543 = vpop.f32.mrb[0].mxu0
  %v544 = vpop.f32.mrb[0].mxu0
  %v545 = vadd.f32 0.0, %v544
  %v546 = vpop.f32.mrb[0].mxu0
  %547 = vmatprep.mubr.bf16.mxu0 0
  %548 = vmatmul.mubr.bf16.gmra.mrb[0].mxu0 %v249
  %v549 = vpop.f32.mrb[0].mxu0
  %v550 = vadd.f32 0.0, %v549
  %v551 = vpop.f32.mrb[0].mxu0
  %v552 = vpop.f32.mrb[0].mxu0
  %v553 = vadd.f32 0.0, %v552
  %v554 = vpop.f32.mrb[0].mxu0
  %555 = vmatprep.mubr.bf16.mxu0 0
  %556 = vmatmul.mubr.bf16.gmra.mrb[0].mxu0 %v250
  %v557 = vpop.f32.mrb[0].mxu0
  %v558 = vadd.f32 0.0, %v557
  %v559 = vpop.f32.mrb[0].mxu0
  %v560 = vpop.f32.mrb[0].mxu0
  %v561 = vadd.f32 0.0, %v560
  %v562 = vpop.f32.mrb[0].mxu0
  %563 = vmatprep.mubr.bf16.mxu0 0
  %564 = vmatmul.mubr.bf16.gmra.mrb[0].mxu0 %v251
  %v565 = vpop.f32.mrb[0].mxu0
  %v566 = vadd.f32 0.0, %v565
  %v567 = vpop.f32.mrb[0].mxu0
  %v568 = vpop.f32.mrb[0].mxu0
  %v569 = vadd.f32 0.0, %v568
  %v570 = vpop.f32.mrb[0].mxu0
  %571 = vmatprep.mubr.bf16.mxu0 0
  %572 = vmatmul.mubr.bf16.gmra.mrb[0].mxu0 %v252
  %v573 = vpop.f32.mrb[0].mxu0
  %v574 = vadd.f32 0.0, %v573
  %v575 = vpop.f32.mrb[0].mxu0
  %v576 = vpop.f32.mrb[0].mxu0
  %v577 = vadd.f32 0.0, %v576
  %v578 = vpop.f32.mrb[0].mxu0
  %579 = vmatprep.mubr.bf16.mxu0 0
  %580 = vmatmul.mubr.bf16.gmra.mrb[0].mxu0 %v253
  %v581 = vpop.f32.mrb[0].mxu0
  %v582 = vadd.f32 0.0, %v581
  %v583 = vpop.f32.mrb[0].mxu0
  %v584 = vpop.f32.mrb[0].mxu0
  %v585 = vadd.f32 0.0, %v584
  %v586 = vpop.f32.mrb[0].mxu0
  %587 = vmatprep.mubr.bf16.mxu0 0
  %588 = vmatmul.mubr.bf16.gmra.mrb[0].mxu0 %v254
  %v589 = vpop.f32.mrb[0].mxu0
  %v590 = vadd.f32 0.0, %v589
  %v591 = vpop.f32.mrb[0].mxu0
  %v592 = vpop.f32.mrb[0].mxu0
  %v593 = vadd.f32 0.0, %v592
  %v594 = vpop.f32.mrb[0].mxu0
  %595 = vmatprep.mubr.bf16.mxu0 0
  %596 = vmatmul.mubr.bf16.gmra.mrb[0].mxu0 %v255
  %v597 = vpop.f32.mrb[0].mxu0
  %v598 = vadd.f32 0.0, %v597
  %v599 = vpop.f32.mrb[0].mxu0
  %v600 = vpop.f32.mrb[0].mxu0
  %v601 = vadd.f32 0.0, %v600
  %v602 = vpop.f32.mrb[0].mxu0
  %603 = vmatprep.mubr.bf16.mxu0 0
  %604 = vmatmul.mubr.bf16.gmra.mrb[0].mxu0 %v256
  %v605 = vpop.f32.mrb[0].mxu0
  %v606 = vadd.f32 0.0, %v605
  %v607 = vpop.f32.mrb[0].mxu0
  %v608 = vpop.f32.mrb[0].mxu0
  %v609 = vadd.f32 0.0, %v608
  %v610 = vpop.f32.mrb[0].mxu0
  %611 = vmatprep.mubr.bf16.mxu0 0
  %612 = vmatmul.mubr.bf16.gmra.mrb[0].mxu0 %v257
  %v613 = vpop.f32.mrb[0].mxu0
  %v614 = vadd.f32 0.0, %v613
  %v615 = vpop.f32.mrb[0].mxu0
  %v616 = vpop.f32.mrb[0].mxu0
  %v617 = vadd.f32 0.0, %v616
  %v618 = vpop.f32.mrb[0].mxu0
  %619 = vmatprep.mubr.bf16.mxu0 0
  %620 = vmatmul.mubr.bf16.gmra.mrb[0].mxu0 %v258
  %v621 = vpop.f32.mrb[0].mxu0
  %v622 = vadd.f32 0.0, %v621
  %v623 = vpop.f32.mrb[0].mxu0
  %v624 = vpop.f32.mrb[0].mxu0
  %v625 = vadd.f32 0.0, %v624
  %v626 = vpop.f32.mrb[0].mxu0
  %627 = vdwg.mxu0
  %s628 = scalar_lea.vmem [#allocation2], %s18
  %629 = vst [vmem:[%s628] sm:$0xff] %v374
  %630 = vst [vmem:[%s628 + $0x8] sm:$0xff] %v377
  %631 = vst [vmem:[%s628 + $0x10] sm:$0xff] %v382
  %632 = vst [vmem:[%s628 + $0x18] sm:$0xff] %v385
  %633 = vst [vmem:[%s628 + $0x20] sm:$0xff] %v390
  %634 = vst [vmem:[%s628 + $0x28] sm:$0xff] %v393
  %635 = vst [vmem:[%s628 + $0x30] sm:$0xff] %v398
  %636 = vst [vmem:[%s628 + $0x38] sm:$0xff] %v401
  %637 = vst [vmem:[%s628 + $0x40] sm:$0xff] %v406
  %638 = vst [vmem:[%s628 + $0x48] sm:$0xff] %v409
  %639 = vst [vmem:[%s628 + $0x50] sm:$0xff] %v414
  %640 = vst [vmem:[%s628 + $0x58] sm:$0xff] %v417
  %641 = vst [vmem:[%s628 + $0x60] sm:$0xff] %v422
  %642 = vst [vmem:[%s628 + $0x68] sm:$0xff] %v425
  %643 = vst [vmem:[%s628 + $0x70] sm:$0xff] %v430
  %644 = vst [vmem:[%s628 + $0x78] sm:$0xff] %v433
  %645 = vst [vmem:[%s628 + $0x80] sm:$0xff] %v438
  %646 = vst [vmem:[%s628 + $0x88] sm:$0xff] %v441
  %647 = vst [vmem:[%s628 + $0x90] sm:$0xff] %v446
  %648 = vst [vmem:[%s628 + $0x98] sm:$0xff] %v449
  %649 = vst [vmem:[%s628 + $0xa0] sm:$0xff] %v454
  %650 = vst [vmem:[%s628 + $0xa8] sm:$0xff] %v457
  %651 = vst [vmem:[%s628 + $0xb0] sm:$0xff] %v462
  %652 = vst [vmem:[%s628 + $0xb8] sm:$0xff] %v465
  %653 = vst [vmem:[%s628 + $0xc0] sm:$0xff] %v470
  %654 = vst [vmem:[%s628 + $0xc8] sm:$0xff] %v473
  %655 = vst [vmem:[%s628 + $0xd0] sm:$0xff] %v478
  %656 = vst [vmem:[%s628 + $0xd8] sm:$0xff] %v481
  %657 = vst [vmem:[%s628 + $0xe0] sm:$0xff] %v486
  %658 = vst [vmem:[%s628 + $0xe8] sm:$0xff] %v489
  %659 = vst [vmem:[%s628 + $0xf0] sm:$0xff] %v494
  %660 = vst [vmem:[%s628 + $0xf8] sm:$0xff] %v497
  %661 = vst [vmem:[%s628 + $0x100] sm:$0xff] %v502
  %662 = vst [vmem:[%s628 + $0x108] sm:$0xff] %v505
  %663 = vst [vmem:[%s628 + $0x110] sm:$0xff] %v510
  %664 = vst [vmem:[%s628 + $0x118] sm:$0xff] %v513
  %665 = vst [vmem:[%s628 + $0x120] sm:$0xff] %v518
  %666 = vst [vmem:[%s628 + $0x128] sm:$0xff] %v521
  %667 = vst [vmem:[%s628 + $0x130] sm:$0xff] %v526
  %668 = vst [vmem:[%s628 + $0x138] sm:$0xff] %v529
  %669 = vst [vmem:[%s628 + $0x140] sm:$0xff] %v534
  %670 = vst [vmem:[%s628 + $0x148] sm:$0xff] %v537
  %671 = vst [vmem:[%s628 + $0x150] sm:$0xff] %v542
  %672 = vst [vmem:[%s628 + $0x158] sm:$0xff] %v545
  %673 = vst [vmem:[%s628 + $0x160] sm:$0xff] %v550
  %674 = vst [vmem:[%s628 + $0x168] sm:$0xff] %v553
  %675 = vst [vmem:[%s628 + $0x170] sm:$0xff] %v558
  %676 = vst [vmem:[%s628 + $0x178] sm:$0xff] %v561
  %677 = vst [vmem:[%s628 + $0x180] sm:$0xff] %v566
  %678 = vst [vmem:[%s628 + $0x188] sm:$0xff] %v569
  %679 = vst [vmem:[%s628 + $0x190] sm:$0xff] %v574
  %680 = vst [vmem:[%s628 + $0x198] sm:$0xff] %v577
  %681 = vst [vmem:[%s628 + $0x1a0] sm:$0xff] %v582
  %682 = vst [vmem:[%s628 + $0x1a8] sm:$0xff] %v585
  %683 = vst [vmem:[%s628 + $0x1b0] sm:$0xff] %v590
  %684 = vst [vmem:[%s628 + $0x1b8] sm:$0xff] %v593
  %685 = vst [vmem:[%s628 + $0x1c0] sm:$0xff] %v598
  %686 = vst [vmem:[%s628 + $0x1c8] sm:$0xff] %v601
  %687 = vst [vmem:[%s628 + $0x1d0] sm:$0xff] %v606
  %688 = vst [vmem:[%s628 + $0x1d8] sm:$0xff] %v609
  %689 = vst [vmem:[%s628 + $0x1e0] sm:$0xff] %v614
  %690 = vst [vmem:[%s628 + $0x1e8] sm:$0xff] %v617
  %691 = vst [vmem:[%s628 + $0x1f0] sm:$0xff] %v622
  %692 = vst [vmem:[%s628 + $0x1f8] sm:$0xff] %v625
  %p693 = scmp.eq.s32.totalorder 0, 0
  // Predicated region
  $region18: #{netD_forward.5} parent=0 // pred_check
    %p694 = pneg %p693
  $region19: #{netD_forward.5} parent=0 // pred_check_branch
    %696 = sbr.rel (%p694) target = $region21
  $region20: #{netD_forward.5} parent=0 // pred_region
    %v697 = vld [vmem:[#allocation2] sm:$0xff]
    %v698 = vld [vmem:[#allocation2 + $0x8] sm:$0xff]
    %v699 = vld [vmem:[#allocation2 + $0x10] sm:$0xff]
    %v700 = vld [vmem:[#allocation2 + $0x18] sm:$0xff]
    %v701 = vld [vmem:[#allocation2 + $0x20] sm:$0xff]
    %v702 = vld [vmem:[#allocation2 + $0x28] sm:$0xff]
    %v703 = vld [vmem:[#allocation2 + $0x30] sm:$0xff]
    %v704 = vld [vmem:[#allocation2 + $0x38] sm:$0xff]
    %v705 = vld [vmem:[#allocation2 + $0x40] sm:$0xff]
    %v706 = vld [vmem:[#allocation2 + $0x48] sm:$0xff]
    %v707 = vld [vmem:[#allocation2 + $0x50] sm:$0xff]
    %v708 = vld [vmem:[#allocation2 + $0x58] sm:$0xff]
    %v709 = vld [vmem:[#allocation2 + $0x60] sm:$0xff]
    %v710 = vld [vmem:[#allocation2 + $0x68] sm:$0xff]
    %v711 = vld [vmem:[#allocation2 + $0x70] sm:$0xff]
    %v712 = vld [vmem:[#allocation2 + $0x78] sm:$0xff]
    %v713 = vld [vmem:[#allocation2 + $0x80] sm:$0xff]
    %v714 = vld [vmem:[#allocation2 + $0x88] sm:$0xff]
    %v715 = vld [vmem:[#allocation2 + $0x90] sm:$0xff]
    %v716 = vld [vmem:[#allocation2 + $0x98] sm:$0xff]
    %v717 = vld [vmem:[#allocation2 + $0xa0] sm:$0xff]
    %v718 = vld [vmem:[#allocation2 + $0xa8] sm:$0xff]
    %v719 = vld [vmem:[#allocation2 + $0xb0] sm:$0xff]
    %v720 = vld [vmem:[#allocation2 + $0xb8] sm:$0xff]
    %v721 = vld [vmem:[#allocation2 + $0xc0] sm:$0xff]
    %v722 = vld [vmem:[#allocation2 + $0xc8] sm:$0xff]
    %v723 = vld [vmem:[#allocation2 + $0xd0] sm:$0xff]
    %v724 = vld [vmem:[#allocation2 + $0xd8] sm:$0xff]
    %v725 = vld [vmem:[#allocation2 + $0xe0] sm:$0xff]
    %v726 = vld [vmem:[#allocation2 + $0xe8] sm:$0xff]
    %v727 = vld [vmem:[#allocation2 + $0xf0] sm:$0xff]
    %v728 = vld [vmem:[#allocation2 + $0xf8] sm:$0xff]
    %v729 = vld [vmem:[#allocation2 + $0x100] sm:$0xff]
    %v730 = vld [vmem:[#allocation2 + $0x108] sm:$0xff]
    %v731 = vld [vmem:[#allocation2 + $0x110] sm:$0xff]
    %v732 = vld [vmem:[#allocation2 + $0x118] sm:$0xff]
    %v733 = vld [vmem:[#allocation2 + $0x120] sm:$0xff]
    %v734 = vld [vmem:[#allocation2 + $0x128] sm:$0xff]
    %v735 = vld [vmem:[#allocation2 + $0x130] sm:$0xff]
    %v736 = vld [vmem:[#allocation2 + $0x138] sm:$0xff]
    %v737 = vld [vmem:[#allocation2 + $0x140] sm:$0xff]
    %v738 = vld [vmem:[#allocation2 + $0x148] sm:$0xff]
    %v739 = vld [vmem:[#allocation2 + $0x150] sm:$0xff]
    %v740 = vld [vmem:[#allocation2 + $0x158] sm:$0xff]
    %v741 = vld [vmem:[#allocation2 + $0x160] sm:$0xff]
    %v742 = vld [vmem:[#allocation2 + $0x168] sm:$0xff]
    %v743 = vld [vmem:[#allocation2 + $0x170] sm:$0xff]
    %v744 = vld [vmem:[#allocation2 + $0x178] sm:$0xff]
    %v745 = vld [vmem:[#allocation2 + $0x180] sm:$0xff]
    %v746 = vld [vmem:[#allocation2 + $0x188] sm:$0xff]
    %v747 = vld [vmem:[#allocation2 + $0x190] sm:$0xff]
    %v748 = vld [vmem:[#allocation2 + $0x198] sm:$0xff]
    %v749 = vld [vmem:[#allocation2 + $0x1a0] sm:$0xff]
    %v750 = vld [vmem:[#allocation2 + $0x1a8] sm:$0xff]
    %v751 = vld [vmem:[#allocation2 + $0x1b0] sm:$0xff]
    %v752 = vld [vmem:[#allocation2 + $0x1b8] sm:$0xff]
    %v753 = vld [vmem:[#allocation2 + $0x1c0] sm:$0xff]
    %v754 = vld [vmem:[#allocation2 + $0x1c8] sm:$0xff]
    %v755 = vld [vmem:[#allocation2 + $0x1d0] sm:$0xff]
    %v756 = vld [vmem:[#allocation2 + $0x1d8] sm:$0xff]
    %v757 = vld [vmem:[#allocation2 + $0x1e0] sm:$0xff]
    %v758 = vld [vmem:[#allocation2 + $0x1e8] sm:$0xff]
    %v759 = vld [vmem:[#allocation2 + $0x1f0] sm:$0xff]
    %v760 = vld [vmem:[#allocation2 + $0x1f8] sm:$0xff]
    %v761 = vadd.f32 %v697, %v698
    %v762 = vadd.f32 %v761, %v699
    %v763 = vadd.f32 %v762, %v700
    %v764 = vadd.f32 %v763, %v701
    %v765 = vadd.f32 %v764, %v702
    %v766 = vadd.f32 %v765, %v703
    %v767 = vadd.f32 %v766, %v704
    %v768 = vadd.f32 %v767, %v705
    %v769 = vadd.f32 %v768, %v706
    %v770 = vadd.f32 %v769, %v707
    %v771 = vadd.f32 %v770, %v708
    %v772 = vadd.f32 %v771, %v709
    %v773 = vadd.f32 %v772, %v710
    %v774 = vadd.f32 %v773, %v711
    %v775 = vadd.f32 %v774, %v712
    %v776 = vadd.f32 %v775, %v713
    %v777 = vadd.f32 %v776, %v714
    %v778 = vadd.f32 %v777, %v715
    %v779 = vadd.f32 %v778, %v716
    %v780 = vadd.f32 %v779, %v717
    %v781 = vadd.f32 %v780, %v718
    %v782 = vadd.f32 %v781, %v719
    %v783 = vadd.f32 %v782, %v720
    %v784 = vadd.f32 %v783, %v721
    %v785 = vadd.f32 %v784, %v722
    %v786 = vadd.f32 %v785, %v723
    %v787 = vadd.f32 %v786, %v724
    %v788 = vadd.f32 %v787, %v725
    %v789 = vadd.f32 %v788, %v726
    %v790 = vadd.f32 %v789, %v727
    %v791 = vadd.f32 %v790, %v728
    %v792 = vadd.f32 %v791, %v729
    %v793 = vadd.f32 %v792, %v730
    %v794 = vadd.f32 %v793, %v731
    %v795 = vadd.f32 %v794, %v732
    %v796 = vadd.f32 %v795, %v733
    %v797 = vadd.f32 %v796, %v734
    %v798 = vadd.f32 %v797, %v735
    %v799 = vadd.f32 %v798, %v736
    %v800 = vadd.f32 %v799, %v737
    %v801 = vadd.f32 %v800, %v738
    %v802 = vadd.f32 %v801, %v739
    %v803 = vadd.f32 %v802, %v740
    %v804 = vadd.f32 %v803, %v741
    %v805 = vadd.f32 %v804, %v742
    %v806 = vadd.f32 %v805, %v743
    %v807 = vadd.f32 %v806, %v744
    %v808 = vadd.f32 %v807, %v745
    %v809 = vadd.f32 %v808, %v746
    %v810 = vadd.f32 %v809, %v747
    %v811 = vadd.f32 %v810, %v748
    %v812 = vadd.f32 %v811, %v749
    %v813 = vadd.f32 %v812, %v750
    %v814 = vadd.f32 %v813, %v751
    %v815 = vadd.f32 %v814, %v752
    %v816 = vadd.f32 %v815, %v753
    %v817 = vadd.f32 %v816, %v754
    %v818 = vadd.f32 %v817, %v755
    %v819 = vadd.f32 %v818, %v756
    %v820 = vadd.f32 %v819, %v757
    %v821 = vadd.f32 %v820, %v758
    %v822 = vadd.f32 %v821, %v759
    %v823 = vadd.f32 %v822, %v760
    %v824 = vrot.slane %v823, 4
    %v825 = vadd.f32 %v823, %v824
    %v826 = vrot.slane %v825, 2
    %v827 = vadd.f32 %v825, %v826
    %v828 = vrot.slane %v827, 1
    %v829 = vadd.f32 %v827, %v828
    %v830 = vrcp.pop 512.0
    %v831 = vmul.f32 %v829, %v830
    %v832 = vsub.f32 %v697, %v831
    %v833 = vsub.f32 %v698, %v831
    %v834 = vsub.f32 %v699, %v831
    %v835 = vsub.f32 %v700, %v831
    %v836 = vsub.f32 %v701, %v831
    %v837 = vsub.f32 %v702, %v831
    %v838 = vsub.f32 %v703, %v831
    %v839 = vsub.f32 %v704, %v831
    %v840 = vsub.f32 %v705, %v831
    %v841 = vsub.f32 %v706, %v831
    %v842 = vsub.f32 %v707, %v831
    %v843 = vsub.f32 %v708, %v831
    %v844 = vsub.f32 %v709, %v831
    %v845 = vsub.f32 %v710, %v831
    %v846 = vsub.f32 %v711, %v831
    %v847 = vsub.f32 %v712, %v831
    %v848 = vsub.f32 %v713, %v831
    %v849 = vsub.f32 %v714, %v831
    %v850 = vsub.f32 %v715, %v831
    %v851 = vsub.f32 %v716, %v831
    %v852 = vsub.f32 %v717, %v831
    %v853 = vsub.f32 %v718, %v831
    %v854 = vsub.f32 %v719, %v831
    %v855 = vsub.f32 %v720, %v831
    %v856 = vsub.f32 %v721, %v831
    %v857 = vsub.f32 %v722, %v831
    %v858 = vsub.f32 %v723, %v831
    %v859 = vsub.f32 %v724, %v831
    %v860 = vsub.f32 %v725, %v831
    %v861 = vsub.f32 %v726, %v831
    %v862 = vsub.f32 %v727, %v831
    %v863 = vsub.f32 %v728, %v831
    %v864 = vsub.f32 %v729, %v831
    %v865 = vsub.f32 %v730, %v831
    %v866 = vsub.f32 %v731, %v831
    %v867 = vsub.f32 %v732, %v831
    %v868 = vsub.f32 %v733, %v831
    %v869 = vsub.f32 %v734, %v831
    %v870 = vsub.f32 %v735, %v831
    %v871 = vsub.f32 %v736, %v831
    %v872 = vsub.f32 %v737, %v831
    %v873 = vsub.f32 %v738, %v831
    %v874 = vsub.f32 %v739, %v831
    %v875 = vsub.f32 %v740, %v831
    %v876 = vsub.f32 %v741, %v831
    %v877 = vsub.f32 %v742, %v831
    %v878 = vsub.f32 %v743, %v831
    %v879 = vsub.f32 %v744, %v831
    %v880 = vsub.f32 %v745, %v831
    %v881 = vsub.f32 %v746, %v831
    %v882 = vsub.f32 %v747, %v831
    %v883 = vsub.f32 %v748, %v831
    %v884 = vsub.f32 %v749, %v831
    %v885 = vsub.f32 %v750, %v831
    %v886 = vsub.f32 %v751, %v831
    %v887 = vsub.f32 %v752, %v831
    %v888 = vsub.f32 %v753, %v831
    %v889 = vsub.f32 %v754, %v831
    %v890 = vsub.f32 %v755, %v831
    %v891 = vsub.f32 %v756, %v831
    %v892 = vsub.f32 %v757, %v831
    %v893 = vsub.f32 %v758, %v831
    %v894 = vsub.f32 %v759, %v831
    %v895 = vsub.f32 %v760, %v831
    %v896 = vmul.f32 %v832, %v832
    %v897 = vmul.f32 %v833, %v833
    %v898 = vmul.f32 %v834, %v834
    %v899 = vmul.f32 %v835, %v835
    %v900 = vmul.f32 %v836, %v836
    %v901 = vmul.f32 %v837, %v837
    %v902 = vmul.f32 %v838, %v838
    %v903 = vmul.f32 %v839, %v839
    %v904 = vmul.f32 %v840, %v840
    %v905 = vmul.f32 %v841, %v841
    %v906 = vmul.f32 %v842, %v842
    %v907 = vmul.f32 %v843, %v843
    %v908 = vmul.f32 %v844, %v844
    %v909 = vmul.f32 %v845, %v845
    %v910 = vmul.f32 %v846, %v846
    %v911 = vmul.f32 %v847, %v847
    %v912 = vmul.f32 %v848, %v848
    %v913 = vmul.f32 %v849, %v849
    %v914 = vmul.f32 %v850, %v850
    %v915 = vmul.f32 %v851, %v851
    %v916 = vmul.f32 %v852, %v852
    %v917 = vmul.f32 %v853, %v853
    %v918 = vmul.f32 %v854, %v854
    %v919 = vmul.f32 %v855, %v855
    %v920 = vmul.f32 %v856, %v856
    %v921 = vmul.f32 %v857, %v857
    %v922 = vmul.f32 %v858, %v858
    %v923 = vmul.f32 %v859, %v859
    %v924 = vmul.f32 %v860, %v860
    %v925 = vmul.f32 %v861, %v861
    %v926 = vmul.f32 %v862, %v862
    %v927 = vmul.f32 %v863, %v863
    %v928 = vmul.f32 %v864, %v864
    %v929 = vmul.f32 %v865, %v865
    %v930 = vmul.f32 %v866, %v866
    %v931 = vmul.f32 %v867, %v867
    %v932 = vmul.f32 %v868, %v868
    %v933 = vmul.f32 %v869, %v869
    %v934 = vmul.f32 %v870, %v870
    %v935 = vmul.f32 %v871, %v871
    %v936 = vmul.f32 %v872, %v872
    %v937 = vmul.f32 %v873, %v873
    %v938 = vmul.f32 %v874, %v874
    %v939 = vmul.f32 %v875, %v875
    %v940 = vmul.f32 %v876, %v876
    %v941 = vmul.f32 %v877, %v877
    %v942 = vmul.f32 %v878, %v878
    %v943 = vmul.f32 %v879, %v879
    %v944 = vmul.f32 %v880, %v880
    %v945 = vmul.f32 %v881, %v881
    %v946 = vmul.f32 %v882, %v882
    %v947 = vmul.f32 %v883, %v883
    %v948 = vmul.f32 %v884, %v884
    %v949 = vmul.f32 %v885, %v885
    %v950 = vmul.f32 %v886, %v886
    %v951 = vmul.f32 %v887, %v887
    %v952 = vmul.f32 %v888, %v888
    %v953 = vmul.f32 %v889, %v889
    %v954 = vmul.f32 %v890, %v890
    %v955 = vmul.f32 %v891, %v891
    %v956 = vmul.f32 %v892, %v892
    %v957 = vmul.f32 %v893, %v893
    %v958 = vmul.f32 %v894, %v894
    %v959 = vmul.f32 %v895, %v895
    %v960 = vadd.f32 %v896, %v897
    %v961 = vadd.f32 %v960, %v898
    %v962 = vadd.f32 %v961, %v899
    %v963 = vadd.f32 %v962, %v900
    %v964 = vadd.f32 %v963, %v901
    %v965 = vadd.f32 %v964, %v902
    %v966 = vadd.f32 %v965, %v903
    %v967 = vadd.f32 %v966, %v904
    %v968 = vadd.f32 %v967, %v905
    %v969 = vadd.f32 %v968, %v906
    %v970 = vadd.f32 %v969, %v907
    %v971 = vadd.f32 %v970, %v908
    %v972 = vadd.f32 %v971, %v909
    %v973 = vadd.f32 %v972, %v910
    %v974 = vadd.f32 %v973, %v911
    %v975 = vadd.f32 %v974, %v912
    %v976 = vadd.f32 %v975, %v913
    %v977 = vadd.f32 %v976, %v914
    %v978 = vadd.f32 %v977, %v915
    %v979 = vadd.f32 %v978, %v916
    %v980 = vadd.f32 %v979, %v917
    %v981 = vadd.f32 %v980, %v918
    %v982 = vadd.f32 %v981, %v919
    %v983 = vadd.f32 %v982, %v920
    %v984 = vadd.f32 %v983, %v921
    %v985 = vadd.f32 %v984, %v922
    %v986 = vadd.f32 %v985, %v923
    %v987 = vadd.f32 %v986, %v924
    %v988 = vadd.f32 %v987, %v925
    %v989 = vadd.f32 %v988, %v926
    %v990 = vadd.f32 %v989, %v927
    %v991 = vadd.f32 %v990, %v928
    %v992 = vadd.f32 %v991, %v929
    %v993 = vadd.f32 %v992, %v930
    %v994 = vadd.f32 %v993, %v931
    %v995 = vadd.f32 %v994, %v932
    %v996 = vadd.f32 %v995, %v933
    %v997 = vadd.f32 %v996, %v934
    %v998 = vadd.f32 %v997, %v935
    %v999 = vadd.f32 %v998, %v936
    %v1000 = vadd.f32 %v999, %v937
    %v1001 = vadd.f32 %v1000, %v938
    %v1002 = vadd.f32 %v1001, %v939
    %v1003 = vadd.f32 %v1002, %v940
    %v1004 = vadd.f32 %v1003, %v941
    %v1005 = vadd.f32 %v1004, %v942
    %v1006 = vadd.f32 %v1005, %v943
    %v1007 = vadd.f32 %v1006, %v944
    %v1008 = vadd.f32 %v1007, %v945
    %v1009 = vadd.f32 %v1008, %v946
    %v1010 = vadd.f32 %v1009, %v947
    %v1011 = vadd.f32 %v1010, %v948
    %v1012 = vadd.f32 %v1011, %v949
    %v1013 = vadd.f32 %v1012, %v950
    %v1014 = vadd.f32 %v1013, %v951
    %v1015 = vadd.f32 %v1014, %v952
    %v1016 = vadd.f32 %v1015, %v953
    %v1017 = vadd.f32 %v1016, %v954
    %v1018 = vadd.f32 %v1017, %v955
    %v1019 = vadd.f32 %v1018, %v956
    %v1020 = vadd.f32 %v1019, %v957
    %v1021 = vadd.f32 %v1020, %v958
    %v1022 = vadd.f32 %v1021, %v959
    %v1023 = vrot.slane %v1022, 4
    %v1024 = vadd.f32 %v1022, %v1023
    %v1025 = vrot.slane %v1024, 2
    %v1026 = vadd.f32 %v1024, %v1025
    %v1027 = vrot.slane %v1026, 1
    %v1028 = vadd.f32 %v1026, %v1027
    %v1029 = vmul.f32 %v1028, %v830
    %v1030 = vadd.f32 %v1029, 1e-05
    %v1031 = vrsqrt.pop %v1030
    %v1032 = vld [vmem:[%s2] sm:$0x1]
    %v1033 = vmul.f32 %v1031, %v1032
    %v1034 = vld [vmem:[%s3] sm:$0x1]
    %v1035 = vmul.f32 %v831, %v1033
    %v1036 = vsub.f32 %v1034, %v1035
    %v1037 = vlaneseq
    %v1038 = vshrl.u32 %v1037, 7
    %v1039 = vsub.s32 0, %v1038
    %v1040 = vrot.slane %v1033, %v1039
    %v1041 = vmul.f32 %v697, %v1040
    %v1042 = vmul.f32 %v698, %v1040
    %v1043 = vmul.f32 %v699, %v1040
    %v1044 = vmul.f32 %v700, %v1040
    %v1045 = vmul.f32 %v701, %v1040
    %v1046 = vmul.f32 %v702, %v1040
    %v1047 = vmul.f32 %v703, %v1040
    %v1048 = vmul.f32 %v704, %v1040
    %v1049 = vmul.f32 %v705, %v1040
    %v1050 = vmul.f32 %v706, %v1040
    %v1051 = vmul.f32 %v707, %v1040
    %v1052 = vmul.f32 %v708, %v1040
    %v1053 = vmul.f32 %v709, %v1040
    %v1054 = vmul.f32 %v710, %v1040
    %v1055 = vmul.f32 %v711, %v1040
    %v1056 = vmul.f32 %v712, %v1040
    %v1057 = vmul.f32 %v713, %v1040
    %v1058 = vmul.f32 %v714, %v1040
    %v1059 = vmul.f32 %v715, %v1040
    %v1060 = vmul.f32 %v716, %v1040
    %v1061 = vmul.f32 %v717, %v1040
    %v1062 = vmul.f32 %v718, %v1040
    %v1063 = vmul.f32 %v719, %v1040
    %v1064 = vmul.f32 %v720, %v1040
    %v1065 = vmul.f32 %v721, %v1040
    %v1066 = vmul.f32 %v722, %v1040
    %v1067 = vmul.f32 %v723, %v1040
    %v1068 = vmul.f32 %v724, %v1040
    %v1069 = vmul.f32 %v725, %v1040
    %v1070 = vmul.f32 %v726, %v1040
    %v1071 = vmul.f32 %v727, %v1040
    %v1072 = vmul.f32 %v728, %v1040
    %v1073 = vmul.f32 %v729, %v1040
    %v1074 = vmul.f32 %v730, %v1040
    %v1075 = vmul.f32 %v731, %v1040
    %v1076 = vmul.f32 %v732, %v1040
    %v1077 = vmul.f32 %v733, %v1040
    %v1078 = vmul.f32 %v734, %v1040
    %v1079 = vmul.f32 %v735, %v1040
    %v1080 = vmul.f32 %v736, %v1040
    %v1081 = vmul.f32 %v737, %v1040
    %v1082 = vmul.f32 %v738, %v1040
    %v1083 = vmul.f32 %v739, %v1040
    %v1084 = vmul.f32 %v740, %v1040
    %v1085 = vmul.f32 %v741, %v1040
    %v1086 = vmul.f32 %v742, %v1040
    %v1087 = vmul.f32 %v743, %v1040
    %v1088 = vmul.f32 %v744, %v1040
    %v1089 = vmul.f32 %v745, %v1040
    %v1090 = vmul.f32 %v746, %v1040
    %v1091 = vmul.f32 %v747, %v1040
    %v1092 = vmul.f32 %v748, %v1040
    %v1093 = vmul.f32 %v749, %v1040
    %v1094 = vmul.f32 %v750, %v1040
    %v1095 = vmul.f32 %v751, %v1040
    %v1096 = vmul.f32 %v752, %v1040
    %v1097 = vmul.f32 %v753, %v1040
    %v1098 = vmul.f32 %v754, %v1040
    %v1099 = vmul.f32 %v755, %v1040
    %v1100 = vmul.f32 %v756, %v1040
    %v1101 = vmul.f32 %v757, %v1040
    %v1102 = vmul.f32 %v758, %v1040
    %v1103 = vmul.f32 %v759, %v1040
    %v1104 = vmul.f32 %v760, %v1040
    %v1106 = vlaneseq
    %v1107 = vshrl.u32 %v1106, 7
    %v1108 = vsub.s32 0, %v1107
    %v1109 = vrot.slane %v1036, %v1108
    %v1111 = vadd.f32 %v1041, %v1109
    %v1112 = vadd.f32 %v1042, %v1109
    %v1113 = vadd.f32 %v1043, %v1109
    %v1114 = vadd.f32 %v1044, %v1109
    %v1115 = vadd.f32 %v1045, %v1109
    %v1116 = vadd.f32 %v1046, %v1109
    %v1117 = vadd.f32 %v1047, %v1109
    %v1118 = vadd.f32 %v1048, %v1109
    %v1119 = vadd.f32 %v1049, %v1109
    %v1120 = vadd.f32 %v1050, %v1109
    %v1121 = vadd.f32 %v1051, %v1109
    %v1122 = vadd.f32 %v1052, %v1109
    %v1123 = vadd.f32 %v1053, %v1109
    %v1124 = vadd.f32 %v1054, %v1109
    %v1125 = vadd.f32 %v1055, %v1109
    %v1126 = vadd.f32 %v1056, %v1109
    %v1127 = vadd.f32 %v1057, %v1109
    %v1128 = vadd.f32 %v1058, %v1109
    %v1129 = vadd.f32 %v1059, %v1109
    %v1130 = vadd.f32 %v1060, %v1109
    %v1131 = vadd.f32 %v1061, %v1109
    %v1132 = vadd.f32 %v1062, %v1109
    %v1133 = vadd.f32 %v1063, %v1109
    %v1134 = vadd.f32 %v1064, %v1109
    %v1135 = vadd.f32 %v1065, %v1109
    %v1136 = vadd.f32 %v1066, %v1109
    %v1137 = vadd.f32 %v1067, %v1109
    %v1138 = vadd.f32 %v1068, %v1109
    %v1139 = vadd.f32 %v1069, %v1109
    %v1140 = vadd.f32 %v1070, %v1109
    %v1141 = vadd.f32 %v1071, %v1109
    %v1142 = vadd.f32 %v1072, %v1109
    %v1143 = vadd.f32 %v1073, %v1109
    %v1144 = vadd.f32 %v1074, %v1109
    %v1145 = vadd.f32 %v1075, %v1109
    %v1146 = vadd.f32 %v1076, %v1109
    %v1147 = vadd.f32 %v1077, %v1109
    %v1148 = vadd.f32 %v1078, %v1109
    %v1149 = vadd.f32 %v1079, %v1109
    %v1150 = vadd.f32 %v1080, %v1109
    %v1151 = vadd.f32 %v1081, %v1109
    %v1152 = vadd.f32 %v1082, %v1109
    %v1153 = vadd.f32 %v1083, %v1109
    %v1154 = vadd.f32 %v1084, %v1109
    %v1155 = vadd.f32 %v1085, %v1109
    %v1156 = vadd.f32 %v1086, %v1109
    %v1157 = vadd.f32 %v1087, %v1109
    %v1158 = vadd.f32 %v1088, %v1109
    %v1159 = vadd.f32 %v1089, %v1109
    %v1160 = vadd.f32 %v1090, %v1109
    %v1161 = vadd.f32 %v1091, %v1109
    %v1162 = vadd.f32 %v1092, %v1109
    %v1163 = vadd.f32 %v1093, %v1109
    %v1164 = vadd.f32 %v1094, %v1109
    %v1165 = vadd.f32 %v1095, %v1109
    %v1166 = vadd.f32 %v1096, %v1109
    %v1167 = vadd.f32 %v1097, %v1109
    %v1168 = vadd.f32 %v1098, %v1109
    %v1169 = vadd.f32 %v1099, %v1109
    %v1170 = vadd.f32 %v1100, %v1109
    %v1171 = vadd.f32 %v1101, %v1109
    %v1172 = vadd.f32 %v1102, %v1109
    %v1173 = vadd.f32 %v1103, %v1109
    %v1174 = vadd.f32 %v1104, %v1109
    %v1175 = vmul.f32 %v1111, 0.2
    %v1176 = vmul.f32 %v1112, 0.2
    %v1177 = vmul.f32 %v1113, 0.2
    %v1178 = vmul.f32 %v1114, 0.2
    %v1179 = vmul.f32 %v1115, 0.2
    %v1180 = vmul.f32 %v1116, 0.2
    %v1181 = vmul.f32 %v1117, 0.2
    %v1182 = vmul.f32 %v1118, 0.2
    %v1183 = vmul.f32 %v1119, 0.2
    %v1184 = vmul.f32 %v1120, 0.2
    %v1185 = vmul.f32 %v1121, 0.2
    %v1186 = vmul.f32 %v1122, 0.2
    %v1187 = vmul.f32 %v1123, 0.2
    %v1188 = vmul.f32 %v1124, 0.2
    %v1189 = vmul.f32 %v1125, 0.2
    %v1190 = vmul.f32 %v1126, 0.2
    %v1191 = vmul.f32 %v1127, 0.2
    %v1192 = vmul.f32 %v1128, 0.2
    %v1193 = vmul.f32 %v1129, 0.2
    %v1194 = vmul.f32 %v1130, 0.2
    %v1195 = vmul.f32 %v1131, 0.2
    %v1196 = vmul.f32 %v1132, 0.2
    %v1197 = vmul.f32 %v1133, 0.2
    %v1198 = vmul.f32 %v1134, 0.2
    %v1199 = vmul.f32 %v1135, 0.2
    %v1200 = vmul.f32 %v1136, 0.2
    %v1201 = vmul.f32 %v1137, 0.2
    %v1202 = vmul.f32 %v1138, 0.2
    %v1203 = vmul.f32 %v1139, 0.2
    %v1204 = vmul.f32 %v1140, 0.2
    %v1205 = vmul.f32 %v1141, 0.2
    %v1206 = vmul.f32 %v1142, 0.2
    %v1207 = vmul.f32 %v1143, 0.2
    %v1208 = vmul.f32 %v1144, 0.2
    %v1209 = vmul.f32 %v1145, 0.2
    %v1210 = vmul.f32 %v1146, 0.2
    %v1211 = vmul.f32 %v1147, 0.2
    %v1212 = vmul.f32 %v1148, 0.2
    %v1213 = vmul.f32 %v1149, 0.2
    %v1214 = vmul.f32 %v1150, 0.2
    %v1215 = vmul.f32 %v1151, 0.2
    %v1216 = vmul.f32 %v1152, 0.2
    %v1217 = vmul.f32 %v1153, 0.2
    %v1218 = vmul.f32 %v1154, 0.2
    %v1219 = vmul.f32 %v1155, 0.2
    %v1220 = vmul.f32 %v1156, 0.2
    %v1221 = vmul.f32 %v1157, 0.2
    %v1222 = vmul.f32 %v1158, 0.2
    %v1223 = vmul.f32 %v1159, 0.2
    %v1224 = vmul.f32 %v1160, 0.2
    %v1225 = vmul.f32 %v1161, 0.2
    %v1226 = vmul.f32 %v1162, 0.2
    %v1227 = vmul.f32 %v1163, 0.2
    %v1228 = vmul.f32 %v1164, 0.2
    %v1229 = vmul.f32 %v1165, 0.2
    %v1230 = vmul.f32 %v1166, 0.2
    %v1231 = vmul.f32 %v1167, 0.2
    %v1232 = vmul.f32 %v1168, 0.2
    %v1233 = vmul.f32 %v1169, 0.2
    %v1234 = vmul.f32 %v1170, 0.2
    %v1235 = vmul.f32 %v1171, 0.2
    %v1236 = vmul.f32 %v1172, 0.2
    %v1237 = vmul.f32 %v1173, 0.2
    %v1238 = vmul.f32 %v1174, 0.2
    %v1239 = vmax.f32 %v1111, %v1175
    %v1240 = vmax.f32 %v1112, %v1176
    %v1241 = vmax.f32 %v1113, %v1177
    %v1242 = vmax.f32 %v1114, %v1178
    %v1243 = vmax.f32 %v1115, %v1179
    %v1244 = vmax.f32 %v1116, %v1180
    %v1245 = vmax.f32 %v1117, %v1181
    %v1246 = vmax.f32 %v1118, %v1182
    %v1247 = vmax.f32 %v1119, %v1183
    %v1248 = vmax.f32 %v1120, %v1184
    %v1249 = vmax.f32 %v1121, %v1185
    %v1250 = vmax.f32 %v1122, %v1186
    %v1251 = vmax.f32 %v1123, %v1187
    %v1252 = vmax.f32 %v1124, %v1188
    %v1253 = vmax.f32 %v1125, %v1189
    %v1254 = vmax.f32 %v1126, %v1190
    %v1255 = vmax.f32 %v1127, %v1191
    %v1256 = vmax.f32 %v1128, %v1192
    %v1257 = vmax.f32 %v1129, %v1193
    %v1258 = vmax.f32 %v1130, %v1194
    %v1259 = vmax.f32 %v1131, %v1195
    %v1260 = vmax.f32 %v1132, %v1196
    %v1261 = vmax.f32 %v1133, %v1197
    %v1262 = vmax.f32 %v1134, %v1198
    %v1263 = vmax.f32 %v1135, %v1199
    %v1264 = vmax.f32 %v1136, %v1200
    %v1265 = vmax.f32 %v1137, %v1201
    %v1266 = vmax.f32 %v1138, %v1202
    %v1267 = vmax.f32 %v1139, %v1203
    %v1268 = vmax.f32 %v1140, %v1204
    %v1269 = vmax.f32 %v1141, %v1205
    %v1270 = vmax.f32 %v1142, %v1206
    %v1271 = vmax.f32 %v1143, %v1207
    %v1272 = vmax.f32 %v1144, %v1208
    %v1273 = vmax.f32 %v1145, %v1209
    %v1274 = vmax.f32 %v1146, %v1210
    %v1275 = vmax.f32 %v1147, %v1211
    %v1276 = vmax.f32 %v1148, %v1212
    %v1277 = vmax.f32 %v1149, %v1213
    %v1278 = vmax.f32 %v1150, %v1214
    %v1279 = vmax.f32 %v1151, %v1215
    %v1280 = vmax.f32 %v1152, %v1216
    %v1281 = vmax.f32 %v1153, %v1217
    %v1282 = vmax.f32 %v1154, %v1218
    %v1283 = vmax.f32 %v1155, %v1219
    %v1284 = vmax.f32 %v1156, %v1220
    %v1285 = vmax.f32 %v1157, %v1221
    %v1286 = vmax.f32 %v1158, %v1222
    %v1287 = vmax.f32 %v1159, %v1223
    %v1288 = vmax.f32 %v1160, %v1224
    %v1289 = vmax.f32 %v1161, %v1225
    %v1290 = vmax.f32 %v1162, %v1226
    %v1291 = vmax.f32 %v1163, %v1227
    %v1292 = vmax.f32 %v1164, %v1228
    %v1293 = vmax.f32 %v1165, %v1229
    %v1294 = vmax.f32 %v1166, %v1230
    %v1295 = vmax.f32 %v1167, %v1231
    %v1296 = vmax.f32 %v1168, %v1232
    %v1297 = vmax.f32 %v1169, %v1233
    %v1298 = vmax.f32 %v1170, %v1234
    %v1299 = vmax.f32 %v1171, %v1235
    %v1300 = vmax.f32 %v1172, %v1236
    %v1301 = vmax.f32 %v1173, %v1237
    %v1302 = vmax.f32 %v1174, %v1238
    %v1303 = vpack.c.bf16 %v1240, %v1239
    %v1304 = vpack.c.bf16 %v1242, %v1241
    %v1305 = vpack.c.bf16 %v1244, %v1243
    %v1306 = vpack.c.bf16 %v1246, %v1245
    %v1307 = vpack.c.bf16 %v1248, %v1247
    %v1308 = vpack.c.bf16 %v1250, %v1249
    %v1309 = vpack.c.bf16 %v1252, %v1251
    %v1310 = vpack.c.bf16 %v1254, %v1253
    %v1311 = vpack.c.bf16 %v1256, %v1255
    %v1312 = vpack.c.bf16 %v1258, %v1257
    %v1313 = vpack.c.bf16 %v1260, %v1259
    %v1314 = vpack.c.bf16 %v1262, %v1261
    %v1315 = vpack.c.bf16 %v1264, %v1263
    %v1316 = vpack.c.bf16 %v1266, %v1265
    %v1317 = vpack.c.bf16 %v1268, %v1267
    %v1318 = vpack.c.bf16 %v1270, %v1269
    %v1319 = vpack.c.bf16 %v1272, %v1271
    %v1320 = vpack.c.bf16 %v1274, %v1273
    %v1321 = vpack.c.bf16 %v1276, %v1275
    %v1322 = vpack.c.bf16 %v1278, %v1277
    %v1323 = vpack.c.bf16 %v1280, %v1279
    %v1324 = vpack.c.bf16 %v1282, %v1281
    %v1325 = vpack.c.bf16 %v1284, %v1283
    %v1326 = vpack.c.bf16 %v1286, %v1285
    %v1327 = vpack.c.bf16 %v1288, %v1287
    %v1328 = vpack.c.bf16 %v1290, %v1289
    %v1329 = vpack.c.bf16 %v1292, %v1291
    %v1330 = vpack.c.bf16 %v1294, %v1293
    %v1331 = vpack.c.bf16 %v1296, %v1295
    %v1332 = vpack.c.bf16 %v1298, %v1297
    %v1333 = vpack.c.bf16 %v1300, %v1299
    %v1334 = vpack.c.bf16 %v1302, %v1301
    %v1367 = vunpack.c.l.b16 %v1303
    %v1368 = vunpack.c.h.b16 %v1303
    %v1369 = vunpack.c.l.b16 %v1304
    %v1370 = vunpack.c.h.b16 %v1304
    %v1371 = vunpack.c.l.b16 %v1305
    %v1372 = vunpack.c.h.b16 %v1305
    %v1373 = vunpack.c.l.b16 %v1306
    %v1374 = vunpack.c.h.b16 %v1306
    %v1375 = vunpack.c.l.b16 %v1307
    %v1376 = vunpack.c.h.b16 %v1307
    %v1377 = vunpack.c.l.b16 %v1308
    %v1378 = vunpack.c.h.b16 %v1308
    %v1379 = vunpack.c.l.b16 %v1309
    %v1380 = vunpack.c.h.b16 %v1309
    %v1381 = vunpack.c.l.b16 %v1310
    %v1382 = vunpack.c.h.b16 %v1310
    %v1383 = vunpack.c.l.b16 %v1311
    %v1384 = vunpack.c.h.b16 %v1311
    %v1385 = vunpack.c.l.b16 %v1312
    %v1386 = vunpack.c.h.b16 %v1312
    %v1387 = vunpack.c.l.b16 %v1313
    %v1388 = vunpack.c.h.b16 %v1313
    %v1389 = vunpack.c.l.b16 %v1314
    %v1390 = vunpack.c.h.b16 %v1314
    %v1391 = vunpack.c.l.b16 %v1315
    %v1392 = vunpack.c.h.b16 %v1315
    %v1393 = vunpack.c.l.b16 %v1316
    %v1394 = vunpack.c.h.b16 %v1316
    %v1395 = vunpack.c.l.b16 %v1317
    %v1396 = vunpack.c.h.b16 %v1317
    %v1397 = vunpack.c.l.b16 %v1318
    %v1398 = vunpack.c.h.b16 %v1318
    %v1399 = vunpack.c.l.b16 %v1319
    %v1400 = vunpack.c.h.b16 %v1319
    %v1401 = vunpack.c.l.b16 %v1320
    %v1402 = vunpack.c.h.b16 %v1320
    %v1403 = vunpack.c.l.b16 %v1321
    %v1404 = vunpack.c.h.b16 %v1321
    %v1405 = vunpack.c.l.b16 %v1322
    %v1406 = vunpack.c.h.b16 %v1322
    %v1407 = vunpack.c.l.b16 %v1323
    %v1408 = vunpack.c.h.b16 %v1323
    %v1409 = vunpack.c.l.b16 %v1324
    %v1410 = vunpack.c.h.b16 %v1324
    %v1411 = vunpack.c.l.b16 %v1325
    %v1412 = vunpack.c.h.b16 %v1325
    %v1413 = vunpack.c.l.b16 %v1326
    %v1414 = vunpack.c.h.b16 %v1326
    %v1415 = vunpack.c.l.b16 %v1327
    %v1416 = vunpack.c.h.b16 %v1327
    %v1417 = vunpack.c.l.b16 %v1328
    %v1418 = vunpack.c.h.b16 %v1328
    %v1419 = vunpack.c.l.b16 %v1329
    %v1420 = vunpack.c.h.b16 %v1329
    %v1421 = vunpack.c.l.b16 %v1330
    %v1422 = vunpack.c.h.b16 %v1330
    %v1423 = vunpack.c.l.b16 %v1331
    %v1424 = vunpack.c.h.b16 %v1331
    %v1425 = vunpack.c.l.b16 %v1332
    %v1426 = vunpack.c.h.b16 %v1332
    %v1427 = vunpack.c.l.b16 %v1333
    %v1428 = vunpack.c.h.b16 %v1333
    %v1429 = vunpack.c.l.b16 %v1334
    %v1430 = vunpack.c.h.b16 %v1334
    %v1431 = vpack.c.b16 %v1367, %v1367
    %v1432 = vpack.c.b16 %v1368, %v1368
    %v1433 = vpack.c.b16 %v1369, %v1369
    %v1434 = vpack.c.b16 %v1370, %v1370
    %v1435 = vpack.c.b16 %v1371, %v1371
    %v1436 = vpack.c.b16 %v1372, %v1372
    %v1437 = vpack.c.b16 %v1373, %v1373
    %v1438 = vpack.c.b16 %v1374, %v1374
    %v1439 = vpack.c.b16 %v1375, %v1375
    %v1440 = vpack.c.b16 %v1376, %v1376
    %v1441 = vpack.c.b16 %v1377, %v1377
    %v1442 = vpack.c.b16 %v1378, %v1378
    %v1443 = vpack.c.b16 %v1379, %v1379
    %v1444 = vpack.c.b16 %v1380, %v1380
    %v1445 = vpack.c.b16 %v1381, %v1381
    %v1446 = vpack.c.b16 %v1382, %v1382
    %v1447 = vpack.c.b16 %v1383, %v1383
    %v1448 = vpack.c.b16 %v1384, %v1384
    %v1449 = vpack.c.b16 %v1385, %v1385
    %v1450 = vpack.c.b16 %v1386, %v1386
    %v1451 = vpack.c.b16 %v1387, %v1387
    %v1452 = vpack.c.b16 %v1388, %v1388
    %v1453 = vpack.c.b16 %v1389, %v1389
    %v1454 = vpack.c.b16 %v1390, %v1390
    %v1455 = vpack.c.b16 %v1391, %v1391
    %v1456 = vpack.c.b16 %v1392, %v1392
    %v1457 = vpack.c.b16 %v1393, %v1393
    %v1458 = vpack.c.b16 %v1394, %v1394
    %v1459 = vpack.c.b16 %v1395, %v1395
    %v1460 = vpack.c.b16 %v1396, %v1396
    %v1461 = vpack.c.b16 %v1397, %v1397
    %v1462 = vpack.c.b16 %v1398, %v1398
    %v1463 = vpack.c.b16 %v1399, %v1399
    %v1464 = vpack.c.b16 %v1400, %v1400
    %v1465 = vpack.c.b16 %v1401, %v1401
    %v1466 = vpack.c.b16 %v1402, %v1402
    %v1467 = vpack.c.b16 %v1403, %v1403
    %v1468 = vpack.c.b16 %v1404, %v1404
    %v1469 = vpack.c.b16 %v1405, %v1405
    %v1470 = vpack.c.b16 %v1406, %v1406
    %v1471 = vpack.c.b16 %v1407, %v1407
    %v1472 = vpack.c.b16 %v1408, %v1408
    %v1473 = vpack.c.b16 %v1409, %v1409
    %v1474 = vpack.c.b16 %v1410, %v1410
    %v1475 = vpack.c.b16 %v1411, %v1411
    %v1476 = vpack.c.b16 %v1412, %v1412
    %v1477 = vpack.c.b16 %v1413, %v1413
    %v1478 = vpack.c.b16 %v1414, %v1414
    %v1479 = vpack.c.b16 %v1415, %v1415
    %v1480 = vpack.c.b16 %v1416, %v1416
    %v1481 = vpack.c.b16 %v1417, %v1417
    %v1482 = vpack.c.b16 %v1418, %v1418
    %v1483 = vpack.c.b16 %v1419, %v1419
    %v1484 = vpack.c.b16 %v1420, %v1420
    %v1485 = vpack.c.b16 %v1421, %v1421
    %v1486 = vpack.c.b16 %v1422, %v1422
    %v1487 = vpack.c.b16 %v1423, %v1423
    %v1488 = vpack.c.b16 %v1424, %v1424
    %v1489 = vpack.c.b16 %v1425, %v1425
    %v1490 = vpack.c.b16 %v1426, %v1426
    %v1491 = vpack.c.b16 %v1427, %v1427
    %v1492 = vpack.c.b16 %v1428, %v1428
    %v1493 = vpack.c.b16 %v1429, %v1429
    %v1494 = vpack.c.b16 %v1430, %v1430
    %1559 = vst [vmem:[%s4] sm:$0xf] %v1431
    %1560 = vst [vmem:[%s4 + $0x4] sm:$0xf] %v1432
    %1561 = vst [vmem:[%s4 + $0x8] sm:$0xf] %v1433
    %1562 = vst [vmem:[%s4 + $0xc] sm:$0xf] %v1434
    %1563 = vst [vmem:[%s4 + $0x10] sm:$0xf] %v1435
    %1564 = vst [vmem:[%s4 + $0x14] sm:$0xf] %v1436
    %1565 = vst [vmem:[%s4 + $0x18] sm:$0xf] %v1437
    %1566 = vst [vmem:[%s4 + $0x1c] sm:$0xf] %v1438
    %1567 = vst [vmem:[%s4 + $0x20] sm:$0xf] %v1439
    %1568 = vst [vmem:[%s4 + $0x24] sm:$0xf] %v1440
    %1569 = vst [vmem:[%s4 + $0x28] sm:$0xf] %v1441
    %1570 = vst [vmem:[%s4 + $0x2c] sm:$0xf] %v1442
    %1571 = vst [vmem:[%s4 + $0x30] sm:$0xf] %v1443
    %1572 = vst [vmem:[%s4 + $0x34] sm:$0xf] %v1444
    %1573 = vst [vmem:[%s4 + $0x38] sm:$0xf] %v1445
    %1574 = vst [vmem:[%s4 + $0x3c] sm:$0xf] %v1446
    %1575 = vst [vmem:[%s4 + $0x40] sm:$0xf] %v1447
    %1576 = vst [vmem:[%s4 + $0x44] sm:$0xf] %v1448
    %1577 = vst [vmem:[%s4 + $0x48] sm:$0xf] %v1449
    %1578 = vst [vmem:[%s4 + $0x4c] sm:$0xf] %v1450
    %1579 = vst [vmem:[%s4 + $0x50] sm:$0xf] %v1451
    %1580 = vst [vmem:[%s4 + $0x54] sm:$0xf] %v1452
    %1581 = vst [vmem:[%s4 + $0x58] sm:$0xf] %v1453
    %1582 = vst [vmem:[%s4 + $0x5c] sm:$0xf] %v1454
    %1583 = vst [vmem:[%s4 + $0x60] sm:$0xf] %v1455
    %1584 = vst [vmem:[%s4 + $0x64] sm:$0xf] %v1456
    %1585 = vst [vmem:[%s4 + $0x68] sm:$0xf] %v1457
    %1586 = vst [vmem:[%s4 + $0x6c] sm:$0xf] %v1458
    %1587 = vst [vmem:[%s4 + $0x70] sm:$0xf] %v1459
    %1588 = vst [vmem:[%s4 + $0x74] sm:$0xf] %v1460
    %1589 = vst [vmem:[%s4 + $0x78] sm:$0xf] %v1461
    %1590 = vst [vmem:[%s4 + $0x7c] sm:$0xf] %v1462
    %1591 = vst [vmem:[%s4 + $0x80] sm:$0xf] %v1463
    %1592 = vst [vmem:[%s4 + $0x84] sm:$0xf] %v1464
    %1593 = vst [vmem:[%s4 + $0x88] sm:$0xf] %v1465
    %1594 = vst [vmem:[%s4 + $0x8c] sm:$0xf] %v1466
    %1595 = vst [vmem:[%s4 + $0x90] sm:$0xf] %v1467
    %1596 = vst [vmem:[%s4 + $0x94] sm:$0xf] %v1468
    %1597 = vst [vmem:[%s4 + $0x98] sm:$0xf] %v1469
    %1598 = vst [vmem:[%s4 + $0x9c] sm:$0xf] %v1470
    %1599 = vst [vmem:[%s4 + $0xa0] sm:$0xf] %v1471
    %1600 = vst [vmem:[%s4 + $0xa4] sm:$0xf] %v1472
    %1601 = vst [vmem:[%s4 + $0xa8] sm:$0xf] %v1473
    %1602 = vst [vmem:[%s4 + $0xac] sm:$0xf] %v1474
    %1603 = vst [vmem:[%s4 + $0xb0] sm:$0xf] %v1475
    %1604 = vst [vmem:[%s4 + $0xb4] sm:$0xf] %v1476
    %1605 = vst [vmem:[%s4 + $0xb8] sm:$0xf] %v1477
    %1606 = vst [vmem:[%s4 + $0xbc] sm:$0xf] %v1478
    %1607 = vst [vmem:[%s4 + $0xc0] sm:$0xf] %v1479
    %1608 = vst [vmem:[%s4 + $0xc4] sm:$0xf] %v1480
    %1609 = vst [vmem:[%s4 + $0xc8] sm:$0xf] %v1481
    %1610 = vst [vmem:[%s4 + $0xcc] sm:$0xf] %v1482
    %1611 = vst [vmem:[%s4 + $0xd0] sm:$0xf] %v1483
    %1612 = vst [vmem:[%s4 + $0xd4] sm:$0xf] %v1484
    %1613 = vst [vmem:[%s4 + $0xd8] sm:$0xf] %v1485
    %1614 = vst [vmem:[%s4 + $0xdc] sm:$0xf] %v1486
    %1615 = vst [vmem:[%s4 + $0xe0] sm:$0xf] %v1487
    %1616 = vst [vmem:[%s4 + $0xe4] sm:$0xf] %v1488
    %1617 = vst [vmem:[%s4 + $0xe8] sm:$0xf] %v1489
    %1618 = vst [vmem:[%s4 + $0xec] sm:$0xf] %v1490
    %1619 = vst [vmem:[%s4 + $0xf0] sm:$0xf] %v1491
    %1620 = vst [vmem:[%s4 + $0xf4] sm:$0xf] %v1492
    %1621 = vst [vmem:[%s4 + $0xf8] sm:$0xf] %v1493
    %1622 = vst [vmem:[%s4 + $0xfc] sm:$0xf] %v1494
  $region21: #{netD_forward.5} parent=0 // pred_fallthru
    _
  // Predicated region
  $region22: #{netD_forward.5} parent=0 // pred_check
    _
  $region23: #{netD_forward.5} parent=0 // pred_check_branch
    %1624 = sbr.rel (0) target = $region25
  $region24: #{netD_forward.5} parent=0 // pred_region
    _
  $region25: #{netD_forward.5} parent=0 // pred_fallthru
    _
  // Predicated region
  $region26: #{netD_forward.5} parent=0 // pred_check
    _
  $region27: #{netD_forward.5} parent=0 // pred_check_branch
    %1626 = sbr.rel (0) target = $region29
  $region28: #{netD_forward.5} parent=0 // pred_region
    _
  $region29: #{netD_forward.5} parent=0 // pred_fallthru
    _

// kernel: netD_forward.6
$region0: #{netD_forward.6}
  #allocation0 [shape = 'u32[]', space=smem, size = 0x4, offset = 0x4, fixed_abs, tag = 'smem constant byte address 0x4 - core index']
  #allocation1 [shape = 'u32[144,128]{1,0:T(1,128)}', space=vmem, size = 0x12000, scoped, tag = 'internal scratch']
  #allocation2 [shape = 'f32[128,128]{1,0:T(8,128)}', space=vmem, size = 0x10000, scoped, tag = 'scratch operand']
  %s0 = inlined_call_operand.vmem [shape: bf16[128,256], index: 0, kind: input, shape index: {}]
  %s1 = inlined_call_operand.vmem [shape: bf16[256,128], index: 1, kind: input, shape index: {}]
  %s2 = inlined_call_operand.vmem [shape: f32[1,128], index: 2, kind: input, shape index: {}]
  %s3 = inlined_call_operand.vmem [shape: f32[1,128], index: 3, kind: input, shape index: {}]
  %s4 = inlined_call_operand.vmem [shape: bf16[128,128], index: 4, kind: output, shape index: {}]
  %s5 = sld [smem:[#allocation0]]
  $region30: #{netD_forward.6} parent=0
    _
  %s7 = ssub.s32 1, %s5
  %s8 = scalar_select 0, %s7, %s5
  // Predicated region
  $region2: #{netD_forward.6} parent=0 // pred_check
    _
  $region3: #{netD_forward.6} parent=0 // pred_check_branch
    %10 = sbr.rel (0) target = $region5
  $region4: #{netD_forward.6} parent=0 // pred_region
    _
  $region5: #{netD_forward.6} parent=0 // pred_fallthru
    _
  // Predicated region
  $region6: #{netD_forward.6} parent=0 // pred_check
    _
  $region7: #{netD_forward.6} parent=0 // pred_check_branch
    %12 = sbr.rel (0) target = $region9
  $region8: #{netD_forward.6} parent=0 // pred_region
    _
  $region9: #{netD_forward.6} parent=0 // pred_fallthru
    _
  // Predicated region
  $region10: #{netD_forward.6} parent=0 // pred_check
    _
  $region11: #{netD_forward.6} parent=0 // pred_check_branch
    %14 = sbr.rel (0) target = $region13
  $region12: #{netD_forward.6} parent=0 // pred_region
    _
  $region13: #{netD_forward.6} parent=0 // pred_fallthru
    _
  // Predicated region
  $region14: #{netD_forward.6} parent=0 // pred_check
    _
  $region15: #{netD_forward.6} parent=0 // pred_check_branch
    %16 = sbr.rel (0) target = $region17
  $region16: #{netD_forward.6} parent=0 // pred_region
    _
  $region17: #{netD_forward.6} parent=0 // pred_fallthru
    _
  %s18 = smul.u32 0, 128
  %v19 = vld [vmem:[%s0] sm:$0xff]
  %v20 = vld [vmem:[%s0 + $0x8] sm:$0xff]
  %v21 = vld [vmem:[%s0 + $0x10] sm:$0xff]
  %v22 = vld [vmem:[%s0 + $0x18] sm:$0xff]
  %v23 = vld [vmem:[%s0 + $0x20] sm:$0xff]
  %v24 = vld [vmem:[%s0 + $0x28] sm:$0xff]
  %v25 = vld [vmem:[%s0 + $0x30] sm:$0xff]
  %v26 = vld [vmem:[%s0 + $0x38] sm:$0xff]
  %v27 = vld [vmem:[%s0 + $0x40] sm:$0xff]
  %v28 = vld [vmem:[%s0 + $0x48] sm:$0xff]
  %v29 = vld [vmem:[%s0 + $0x50] sm:$0xff]
  %v30 = vld [vmem:[%s0 + $0x58] sm:$0xff]
  %v31 = vld [vmem:[%s0 + $0x60] sm:$0xff]
  %v32 = vld [vmem:[%s0 + $0x68] sm:$0xff]
  %v33 = vld [vmem:[%s0 + $0x70] sm:$0xff]
  %v34 = vld [vmem:[%s0 + $0x78] sm:$0xff]
  %v35 = vld [vmem:[%s1] sm:$0xf]
  %v36 = vld [vmem:[%s1 + $0x4] sm:$0xf]
  %v37 = vld [vmem:[%s1 + $0x8] sm:$0xf]
  %v38 = vld [vmem:[%s1 + $0xc] sm:$0xf]
  %v39 = vld [vmem:[%s1 + $0x10] sm:$0xf]
  %v40 = vld [vmem:[%s1 + $0x14] sm:$0xf]
  %v41 = vld [vmem:[%s1 + $0x18] sm:$0xf]
  %v42 = vld [vmem:[%s1 + $0x1c] sm:$0xf]
  %v43 = vld [vmem:[%s1 + $0x20] sm:$0xf]
  %v44 = vld [vmem:[%s1 + $0x24] sm:$0xf]
  %v45 = vld [vmem:[%s1 + $0x28] sm:$0xf]
  %v46 = vld [vmem:[%s1 + $0x2c] sm:$0xf]
  %v47 = vld [vmem:[%s1 + $0x30] sm:$0xf]
  %v48 = vld [vmem:[%s1 + $0x34] sm:$0xf]
  %v49 = vld [vmem:[%s1 + $0x38] sm:$0xf]
  %v50 = vld [vmem:[%s1 + $0x3c] sm:$0xf]
  %v51 = vld [vmem:[%s1 + $0x40] sm:$0xf]
  %v52 = vld [vmem:[%s1 + $0x44] sm:$0xf]
  %v53 = vld [vmem:[%s1 + $0x48] sm:$0xf]
  %v54 = vld [vmem:[%s1 + $0x4c] sm:$0xf]
  %v55 = vld [vmem:[%s1 + $0x50] sm:$0xf]
  %v56 = vld [vmem:[%s1 + $0x54] sm:$0xf]
  %v57 = vld [vmem:[%s1 + $0x58] sm:$0xf]
  %v58 = vld [vmem:[%s1 + $0x5c] sm:$0xf]
  %v59 = vld [vmem:[%s1 + $0x60] sm:$0xf]
  %v60 = vld [vmem:[%s1 + $0x64] sm:$0xf]
  %v61 = vld [vmem:[%s1 + $0x68] sm:$0xf]
  %v62 = vld [vmem:[%s1 + $0x6c] sm:$0xf]
  %v63 = vld [vmem:[%s1 + $0x70] sm:$0xf]
  %v64 = vld [vmem:[%s1 + $0x74] sm:$0xf]
  %v65 = vld [vmem:[%s1 + $0x78] sm:$0xf]
  %v66 = vld [vmem:[%s1 + $0x7c] sm:$0xf]
  %v83 = vunpack.c.l.b16 %v19
  %v84 = vunpack.c.h.b16 %v19
  %v85 = vunpack.c.l.b16 %v20
  %v86 = vunpack.c.h.b16 %v20
  %v87 = vunpack.c.l.b16 %v21
  %v88 = vunpack.c.h.b16 %v21
  %v89 = vunpack.c.l.b16 %v22
  %v90 = vunpack.c.h.b16 %v22
  %v91 = vunpack.c.l.b16 %v23
  %v92 = vunpack.c.h.b16 %v23
  %v93 = vunpack.c.l.b16 %v24
  %v94 = vunpack.c.h.b16 %v24
  %v95 = vunpack.c.l.b16 %v25
  %v96 = vunpack.c.h.b16 %v25
  %v97 = vunpack.c.l.b16 %v26
  %v98 = vunpack.c.h.b16 %v26
  %v99 = vunpack.c.l.b16 %v27
  %v100 = vunpack.c.h.b16 %v27
  %v101 = vunpack.c.l.b16 %v28
  %v102 = vunpack.c.h.b16 %v28
  %v103 = vunpack.c.l.b16 %v29
  %v104 = vunpack.c.h.b16 %v29
  %v105 = vunpack.c.l.b16 %v30
  %v106 = vunpack.c.h.b16 %v30
  %v107 = vunpack.c.l.b16 %v31
  %v108 = vunpack.c.h.b16 %v31
  %v109 = vunpack.c.l.b16 %v32
  %v110 = vunpack.c.h.b16 %v32
  %v111 = vunpack.c.l.b16 %v33
  %v112 = vunpack.c.h.b16 %v33
  %v113 = vunpack.c.l.b16 %v34
  %v114 = vunpack.c.h.b16 %v34
  %v115 = vpack.c.b16 %v85, %v83
  %v116 = vpack.c.b16 %v86, %v84
  %v117 = vpack.c.b16 %v89, %v87
  %v118 = vpack.c.b16 %v90, %v88
  %v119 = vpack.c.b16 %v93, %v91
  %v120 = vpack.c.b16 %v94, %v92
  %v121 = vpack.c.b16 %v97, %v95
  %v122 = vpack.c.b16 %v98, %v96
  %v123 = vpack.c.b16 %v101, %v99
  %v124 = vpack.c.b16 %v102, %v100
  %v125 = vpack.c.b16 %v105, %v103
  %v126 = vpack.c.b16 %v106, %v104
  %v127 = vpack.c.b16 %v109, %v107
  %v128 = vpack.c.b16 %v110, %v108
  %v129 = vpack.c.b16 %v113, %v111
  %v130 = vpack.c.b16 %v114, %v112
  %v179 = vunpack.c.l.b16 %v35
  %v180 = vunpack.c.l.b16 %v36
  %v181 = vunpack.c.l.b16 %v37
  %v182 = vunpack.c.l.b16 %v38
  %v183 = vunpack.c.l.b16 %v39
  %v184 = vunpack.c.l.b16 %v40
  %v185 = vunpack.c.l.b16 %v41
  %v186 = vunpack.c.l.b16 %v42
  %v187 = vunpack.c.l.b16 %v43
  %v188 = vunpack.c.l.b16 %v44
  %v189 = vunpack.c.l.b16 %v45
  %v190 = vunpack.c.l.b16 %v46
  %v191 = vunpack.c.l.b16 %v47
  %v192 = vunpack.c.l.b16 %v48
  %v193 = vunpack.c.l.b16 %v49
  %v194 = vunpack.c.l.b16 %v50
  %v195 = vunpack.c.l.b16 %v51
  %v196 = vunpack.c.l.b16 %v52
  %v197 = vunpack.c.l.b16 %v53
  %v198 = vunpack.c.l.b16 %v54
  %v199 = vunpack.c.l.b16 %v55
  %v200 = vunpack.c.l.b16 %v56
  %v201 = vunpack.c.l.b16 %v57
  %v202 = vunpack.c.l.b16 %v58
  %v203 = vunpack.c.l.b16 %v59
  %v204 = vunpack.c.l.b16 %v60
  %v205 = vunpack.c.l.b16 %v61
  %v206 = vunpack.c.l.b16 %v62
  %v207 = vunpack.c.l.b16 %v63
  %v208 = vunpack.c.l.b16 %v64
  %v209 = vunpack.c.l.b16 %v65
  %v210 = vunpack.c.l.b16 %v66
  %v211 = vpack.c.b16 %v180, %v179
  %v212 = vpack.c.b16 %v182, %v181
  %v213 = vpack.c.b16 %v184, %v183
  %v214 = vpack.c.b16 %v186, %v185
  %v215 = vpack.c.b16 %v188, %v187
  %v216 = vpack.c.b16 %v190, %v189
  %v217 = vpack.c.b16 %v192, %v191
  %v218 = vpack.c.b16 %v194, %v193
  %v219 = vpack.c.b16 %v196, %v195
  %v220 = vpack.c.b16 %v198, %v197
  %v221 = vpack.c.b16 %v200, %v199
  %v222 = vpack.c.b16 %v202, %v201
  %v223 = vpack.c.b16 %v204, %v203
  %v224 = vpack.c.b16 %v206, %v205
  %v225 = vpack.c.b16 %v208, %v207
  %v226 = vpack.c.b16 %v210, %v209
  %243 = vmatprep.subr.bf16.mxu0 0
  %244 = vmatpush1.bf16.msra.mxu0 %v211
  %245 = vmatprep.subr.bf16.mxu0 0
  %246 = vmatpush1.bf16.msra.mxu0 %v212
  %247 = vmatprep.subr.bf16.mxu0 0
  %248 = vmatpush1.bf16.msra.mxu0 %v213
  %249 = vmatprep.subr.bf16.mxu0 0
  %250 = vmatpush1.bf16.msra.mxu0 %v214
  %251 = vmatprep.subr.bf16.mxu0 0
  %252 = vmatpush1.bf16.msra.mxu0 %v215
  %253 = vmatprep.subr.bf16.mxu0 0
  %254 = vmatpush1.bf16.msra.mxu0 %v216
  %255 = vmatprep.subr.bf16.mxu0 0
  %256 = vmatpush1.bf16.msra.mxu0 %v217
  %257 = vmatprep.subr.bf16.mxu0 0
  %258 = vmatpush1.bf16.msra.mxu0 %v218
  %259 = vmatprep.subr.bf16.mxu0 0
  %260 = vmatpush1.bf16.msra.mxu0 %v219
  %261 = vmatprep.subr.bf16.mxu0 0
  %262 = vmatpush1.bf16.msra.mxu0 %v220
  %263 = vmatprep.subr.bf16.mxu0 0
  %264 = vmatpush1.bf16.msra.mxu0 %v221
  %265 = vmatprep.subr.bf16.mxu0 0
  %266 = vmatpush1.bf16.msra.mxu0 %v222
  %267 = vmatprep.subr.bf16.mxu0 0
  %268 = vmatpush1.bf16.msra.mxu0 %v223
  %269 = vmatprep.subr.bf16.mxu0 0
  %270 = vmatpush1.bf16.msra.mxu0 %v224
  %271 = vmatprep.subr.bf16.mxu0 0
  %272 = vmatpush1.bf16.msra.mxu0 %v225
  %273 = vmatprep.subr.bf16.mxu0 0
  %274 = vmatpush1.bf16.msra.mxu0 %v226
  %275 = vmatprep.mubr.bf16.mxu0 %v116
  %276 = vmatmul.mubr.bf16.gmra.mrb[0].mxu0 %v115
  %v277 = vpop.f32.mrb[0].mxu0
  %v278 = vadd.f32 0.0, %v277
  %v279 = vpop.f32.mrb[0].mxu0
  %v280 = vpop.f32.mrb[0].mxu0
  %v281 = vadd.f32 0.0, %v280
  %v282 = vpop.f32.mrb[0].mxu0
  %283 = vmatprep.mubr.bf16.mxu0 %v118
  %284 = vmatmul.mubr.bf16.gmra.mrb[0].mxu0 %v117
  %v285 = vpop.f32.mrb[0].mxu0
  %v286 = vadd.f32 0.0, %v285
  %v287 = vpop.f32.mrb[0].mxu0
  %v288 = vpop.f32.mrb[0].mxu0
  %v289 = vadd.f32 0.0, %v288
  %v290 = vpop.f32.mrb[0].mxu0
  %291 = vmatprep.mubr.bf16.mxu0 %v120
  %292 = vmatmul.mubr.bf16.gmra.mrb[0].mxu0 %v119
  %v293 = vpop.f32.mrb[0].mxu0
  %v294 = vadd.f32 0.0, %v293
  %v295 = vpop.f32.mrb[0].mxu0
  %v296 = vpop.f32.mrb[0].mxu0
  %v297 = vadd.f32 0.0, %v296
  %v298 = vpop.f32.mrb[0].mxu0
  %299 = vmatprep.mubr.bf16.mxu0 %v122
  %300 = vmatmul.mubr.bf16.gmra.mrb[0].mxu0 %v121
  %v301 = vpop.f32.mrb[0].mxu0
  %v302 = vadd.f32 0.0, %v301
  %v303 = vpop.f32.mrb[0].mxu0
  %v304 = vpop.f32.mrb[0].mxu0
  %v305 = vadd.f32 0.0, %v304
  %v306 = vpop.f32.mrb[0].mxu0
  %307 = vmatprep.mubr.bf16.mxu0 %v124
  %308 = vmatmul.mubr.bf16.gmra.mrb[0].mxu0 %v123
  %v309 = vpop.f32.mrb[0].mxu0
  %v310 = vadd.f32 0.0, %v309
  %v311 = vpop.f32.mrb[0].mxu0
  %v312 = vpop.f32.mrb[0].mxu0
  %v313 = vadd.f32 0.0, %v312
  %v314 = vpop.f32.mrb[0].mxu0
  %315 = vmatprep.mubr.bf16.mxu0 %v126
  %316 = vmatmul.mubr.bf16.gmra.mrb[0].mxu0 %v125
  %v317 = vpop.f32.mrb[0].mxu0
  %v318 = vadd.f32 0.0, %v317
  %v319 = vpop.f32.mrb[0].mxu0
  %v320 = vpop.f32.mrb[0].mxu0
  %v321 = vadd.f32 0.0, %v320
  %v322 = vpop.f32.mrb[0].mxu0
  %323 = vmatprep.mubr.bf16.mxu0 %v128
  %324 = vmatmul.mubr.bf16.gmra.mrb[0].mxu0 %v127
  %v325 = vpop.f32.mrb[0].mxu0
  %v326 = vadd.f32 0.0, %v325
  %v327 = vpop.f32.mrb[0].mxu0
  %v328 = vpop.f32.mrb[0].mxu0
  %v329 = vadd.f32 0.0, %v328
  %v330 = vpop.f32.mrb[0].mxu0
  %331 = vmatprep.mubr.bf16.mxu0 %v130
  %332 = vmatmul.mubr.bf16.gmra.mrb[0].mxu0 %v129
  %v333 = vpop.f32.mrb[0].mxu0
  %v334 = vadd.f32 0.0, %v333
  %v335 = vpop.f32.mrb[0].mxu0
  %v336 = vpop.f32.mrb[0].mxu0
  %v337 = vadd.f32 0.0, %v336
  %v338 = vpop.f32.mrb[0].mxu0
  %339 = vdwg.mxu0
  %s340 = scalar_lea.vmem [#allocation2], %s18
  %341 = vst [vmem:[%s340] sm:$0xff] %v278
  %342 = vst [vmem:[%s340 + $0x8] sm:$0xff] %v281
  %343 = vst [vmem:[%s340 + $0x10] sm:$0xff] %v286
  %344 = vst [vmem:[%s340 + $0x18] sm:$0xff] %v289
  %345 = vst [vmem:[%s340 + $0x20] sm:$0xff] %v294
  %346 = vst [vmem:[%s340 + $0x28] sm:$0xff] %v297
  %347 = vst [vmem:[%s340 + $0x30] sm:$0xff] %v302
  %348 = vst [vmem:[%s340 + $0x38] sm:$0xff] %v305
  %349 = vst [vmem:[%s340 + $0x40] sm:$0xff] %v310
  %350 = vst [vmem:[%s340 + $0x48] sm:$0xff] %v313
  %351 = vst [vmem:[%s340 + $0x50] sm:$0xff] %v318
  %352 = vst [vmem:[%s340 + $0x58] sm:$0xff] %v321
  %353 = vst [vmem:[%s340 + $0x60] sm:$0xff] %v326
  %354 = vst [vmem:[%s340 + $0x68] sm:$0xff] %v329
  %355 = vst [vmem:[%s340 + $0x70] sm:$0xff] %v334
  %356 = vst [vmem:[%s340 + $0x78] sm:$0xff] %v337
  %p357 = scmp.eq.s32.totalorder 0, 0
  // Predicated region
  $region18: #{netD_forward.6} parent=0 // pred_check
    %p358 = pneg %p357
  $region19: #{netD_forward.6} parent=0 // pred_check_branch
    %360 = sbr.rel (%p358) target = $region21
  $region20: #{netD_forward.6} parent=0 // pred_region
    %v361 = vld [vmem:[#allocation2] sm:$0xff]
    %v362 = vld [vmem:[#allocation2 + $0x8] sm:$0xff]
    %v363 = vld [vmem:[#allocation2 + $0x10] sm:$0xff]
    %v364 = vld [vmem:[#allocation2 + $0x18] sm:$0xff]
    %v365 = vld [vmem:[#allocation2 + $0x20] sm:$0xff]
    %v366 = vld [vmem:[#allocation2 + $0x28] sm:$0xff]
    %v367 = vld [vmem:[#allocation2 + $0x30] sm:$0xff]
    %v368 = vld [vmem:[#allocation2 + $0x38] sm:$0xff]
    %v369 = vld [vmem:[#allocation2 + $0x40] sm:$0xff]
    %v370 = vld [vmem:[#allocation2 + $0x48] sm:$0xff]
    %v371 = vld [vmem:[#allocation2 + $0x50] sm:$0xff]
    %v372 = vld [vmem:[#allocation2 + $0x58] sm:$0xff]
    %v373 = vld [vmem:[#allocation2 + $0x60] sm:$0xff]
    %v374 = vld [vmem:[#allocation2 + $0x68] sm:$0xff]
    %v375 = vld [vmem:[#allocation2 + $0x70] sm:$0xff]
    %v376 = vld [vmem:[#allocation2 + $0x78] sm:$0xff]
    %v377 = vadd.f32 %v361, %v362
    %v378 = vadd.f32 %v377, %v363
    %v379 = vadd.f32 %v378, %v364
    %v380 = vadd.f32 %v379, %v365
    %v381 = vadd.f32 %v380, %v366
    %v382 = vadd.f32 %v381, %v367
    %v383 = vadd.f32 %v382, %v368
    %v384 = vadd.f32 %v383, %v369
    %v385 = vadd.f32 %v384, %v370
    %v386 = vadd.f32 %v385, %v371
    %v387 = vadd.f32 %v386, %v372
    %v388 = vadd.f32 %v387, %v373
    %v389 = vadd.f32 %v388, %v374
    %v390 = vadd.f32 %v389, %v375
    %v391 = vadd.f32 %v390, %v376
    %v392 = vrot.slane %v391, 4
    %v393 = vadd.f32 %v391, %v392
    %v394 = vrot.slane %v393, 2
    %v395 = vadd.f32 %v393, %v394
    %v396 = vrot.slane %v395, 1
    %v397 = vadd.f32 %v395, %v396
    %v398 = vrcp.pop 128.0
    %v399 = vmul.f32 %v397, %v398
    %v400 = vsub.f32 %v361, %v399
    %v401 = vsub.f32 %v362, %v399
    %v402 = vsub.f32 %v363, %v399
    %v403 = vsub.f32 %v364, %v399
    %v404 = vsub.f32 %v365, %v399
    %v405 = vsub.f32 %v366, %v399
    %v406 = vsub.f32 %v367, %v399
    %v407 = vsub.f32 %v368, %v399
    %v408 = vsub.f32 %v369, %v399
    %v409 = vsub.f32 %v370, %v399
    %v410 = vsub.f32 %v371, %v399
    %v411 = vsub.f32 %v372, %v399
    %v412 = vsub.f32 %v373, %v399
    %v413 = vsub.f32 %v374, %v399
    %v414 = vsub.f32 %v375, %v399
    %v415 = vsub.f32 %v376, %v399
    %v416 = vmul.f32 %v400, %v400
    %v417 = vmul.f32 %v401, %v401
    %v418 = vmul.f32 %v402, %v402
    %v419 = vmul.f32 %v403, %v403
    %v420 = vmul.f32 %v404, %v404
    %v421 = vmul.f32 %v405, %v405
    %v422 = vmul.f32 %v406, %v406
    %v423 = vmul.f32 %v407, %v407
    %v424 = vmul.f32 %v408, %v408
    %v425 = vmul.f32 %v409, %v409
    %v426 = vmul.f32 %v410, %v410
    %v427 = vmul.f32 %v411, %v411
    %v428 = vmul.f32 %v412, %v412
    %v429 = vmul.f32 %v413, %v413
    %v430 = vmul.f32 %v414, %v414
    %v431 = vmul.f32 %v415, %v415
    %v432 = vadd.f32 %v416, %v417
    %v433 = vadd.f32 %v432, %v418
    %v434 = vadd.f32 %v433, %v419
    %v435 = vadd.f32 %v434, %v420
    %v436 = vadd.f32 %v435, %v421
    %v437 = vadd.f32 %v436, %v422
    %v438 = vadd.f32 %v437, %v423
    %v439 = vadd.f32 %v438, %v424
    %v440 = vadd.f32 %v439, %v425
    %v441 = vadd.f32 %v440, %v426
    %v442 = vadd.f32 %v441, %v427
    %v443 = vadd.f32 %v442, %v428
    %v444 = vadd.f32 %v443, %v429
    %v445 = vadd.f32 %v444, %v430
    %v446 = vadd.f32 %v445, %v431
    %v447 = vrot.slane %v446, 4
    %v448 = vadd.f32 %v446, %v447
    %v449 = vrot.slane %v448, 2
    %v450 = vadd.f32 %v448, %v449
    %v451 = vrot.slane %v450, 1
    %v452 = vadd.f32 %v450, %v451
    %v453 = vmul.f32 %v452, %v398
    %v454 = vadd.f32 %v453, 1e-05
    %v455 = vrsqrt.pop %v454
    %v456 = vld [vmem:[%s2] sm:$0x1]
    %v457 = vmul.f32 %v455, %v456
    %v458 = vld [vmem:[%s3] sm:$0x1]
    %v459 = vmul.f32 %v399, %v457
    %v460 = vsub.f32 %v458, %v459
    %v461 = vlaneseq
    %v462 = vshrl.u32 %v461, 7
    %v463 = vsub.s32 0, %v462
    %v464 = vrot.slane %v457, %v463
    %v465 = vmul.f32 %v361, %v464
    %v466 = vmul.f32 %v362, %v464
    %v467 = vmul.f32 %v363, %v464
    %v468 = vmul.f32 %v364, %v464
    %v469 = vmul.f32 %v365, %v464
    %v470 = vmul.f32 %v366, %v464
    %v471 = vmul.f32 %v367, %v464
    %v472 = vmul.f32 %v368, %v464
    %v473 = vmul.f32 %v369, %v464
    %v474 = vmul.f32 %v370, %v464
    %v475 = vmul.f32 %v371, %v464
    %v476 = vmul.f32 %v372, %v464
    %v477 = vmul.f32 %v373, %v464
    %v478 = vmul.f32 %v374, %v464
    %v479 = vmul.f32 %v375, %v464
    %v480 = vmul.f32 %v376, %v464
    %v482 = vlaneseq
    %v483 = vshrl.u32 %v482, 7
    %v484 = vsub.s32 0, %v483
    %v485 = vrot.slane %v460, %v484
    %v487 = vadd.f32 %v465, %v485
    %v488 = vadd.f32 %v466, %v485
    %v489 = vadd.f32 %v467, %v485
    %v490 = vadd.f32 %v468, %v485
    %v491 = vadd.f32 %v469, %v485
    %v492 = vadd.f32 %v470, %v485
    %v493 = vadd.f32 %v471, %v485
    %v494 = vadd.f32 %v472, %v485
    %v495 = vadd.f32 %v473, %v485
    %v496 = vadd.f32 %v474, %v485
    %v497 = vadd.f32 %v475, %v485
    %v498 = vadd.f32 %v476, %v485
    %v499 = vadd.f32 %v477, %v485
    %v500 = vadd.f32 %v478, %v485
    %v501 = vadd.f32 %v479, %v485
    %v502 = vadd.f32 %v480, %v485
    %v503 = vmul.f32 %v487, 0.2
    %v504 = vmul.f32 %v488, 0.2
    %v505 = vmul.f32 %v489, 0.2
    %v506 = vmul.f32 %v490, 0.2
    %v507 = vmul.f32 %v491, 0.2
    %v508 = vmul.f32 %v492, 0.2
    %v509 = vmul.f32 %v493, 0.2
    %v510 = vmul.f32 %v494, 0.2
    %v511 = vmul.f32 %v495, 0.2
    %v512 = vmul.f32 %v496, 0.2
    %v513 = vmul.f32 %v497, 0.2
    %v514 = vmul.f32 %v498, 0.2
    %v515 = vmul.f32 %v499, 0.2
    %v516 = vmul.f32 %v500, 0.2
    %v517 = vmul.f32 %v501, 0.2
    %v518 = vmul.f32 %v502, 0.2
    %v519 = vmax.f32 %v487, %v503
    %v520 = vmax.f32 %v488, %v504
    %v521 = vmax.f32 %v489, %v505
    %v522 = vmax.f32 %v490, %v506
    %v523 = vmax.f32 %v491, %v507
    %v524 = vmax.f32 %v492, %v508
    %v525 = vmax.f32 %v493, %v509
    %v526 = vmax.f32 %v494, %v510
    %v527 = vmax.f32 %v495, %v511
    %v528 = vmax.f32 %v496, %v512
    %v529 = vmax.f32 %v497, %v513
    %v530 = vmax.f32 %v498, %v514
    %v531 = vmax.f32 %v499, %v515
    %v532 = vmax.f32 %v500, %v516
    %v533 = vmax.f32 %v501, %v517
    %v534 = vmax.f32 %v502, %v518
    %v535 = vpack.c.bf16 %v520, %v519
    %v536 = vpack.c.bf16 %v522, %v521
    %v537 = vpack.c.bf16 %v524, %v523
    %v538 = vpack.c.bf16 %v526, %v525
    %v539 = vpack.c.bf16 %v528, %v527
    %v540 = vpack.c.bf16 %v530, %v529
    %v541 = vpack.c.bf16 %v532, %v531
    %v542 = vpack.c.bf16 %v534, %v533
    %v551 = vunpack.c.l.b16 %v535
    %v552 = vunpack.c.h.b16 %v535
    %v553 = vunpack.c.l.b16 %v536
    %v554 = vunpack.c.h.b16 %v536
    %v555 = vunpack.c.l.b16 %v537
    %v556 = vunpack.c.h.b16 %v537
    %v557 = vunpack.c.l.b16 %v538
    %v558 = vunpack.c.h.b16 %v538
    %v559 = vunpack.c.l.b16 %v539
    %v560 = vunpack.c.h.b16 %v539
    %v561 = vunpack.c.l.b16 %v540
    %v562 = vunpack.c.h.b16 %v540
    %v563 = vunpack.c.l.b16 %v541
    %v564 = vunpack.c.h.b16 %v541
    %v565 = vunpack.c.l.b16 %v542
    %v566 = vunpack.c.h.b16 %v542
    %v567 = vpack.c.b16 %v551, %v551
    %v568 = vpack.c.b16 %v552, %v552
    %v569 = vpack.c.b16 %v553, %v553
    %v570 = vpack.c.b16 %v554, %v554
    %v571 = vpack.c.b16 %v555, %v555
    %v572 = vpack.c.b16 %v556, %v556
    %v573 = vpack.c.b16 %v557, %v557
    %v574 = vpack.c.b16 %v558, %v558
    %v575 = vpack.c.b16 %v559, %v559
    %v576 = vpack.c.b16 %v560, %v560
    %v577 = vpack.c.b16 %v561, %v561
    %v578 = vpack.c.b16 %v562, %v562
    %v579 = vpack.c.b16 %v563, %v563
    %v580 = vpack.c.b16 %v564, %v564
    %v581 = vpack.c.b16 %v565, %v565
    %v582 = vpack.c.b16 %v566, %v566
    %599 = vst [vmem:[%s4] sm:$0xf] %v567
    %600 = vst [vmem:[%s4 + $0x4] sm:$0xf] %v568
    %601 = vst [vmem:[%s4 + $0x8] sm:$0xf] %v569
    %602 = vst [vmem:[%s4 + $0xc] sm:$0xf] %v570
    %603 = vst [vmem:[%s4 + $0x10] sm:$0xf] %v571
    %604 = vst [vmem:[%s4 + $0x14] sm:$0xf] %v572
    %605 = vst [vmem:[%s4 + $0x18] sm:$0xf] %v573
    %606 = vst [vmem:[%s4 + $0x1c] sm:$0xf] %v574
    %607 = vst [vmem:[%s4 + $0x20] sm:$0xf] %v575
    %608 = vst [vmem:[%s4 + $0x24] sm:$0xf] %v576
    %609 = vst [vmem:[%s4 + $0x28] sm:$0xf] %v577
    %610 = vst [vmem:[%s4 + $0x2c] sm:$0xf] %v578
    %611 = vst [vmem:[%s4 + $0x30] sm:$0xf] %v579
    %612 = vst [vmem:[%s4 + $0x34] sm:$0xf] %v580
    %613 = vst [vmem:[%s4 + $0x38] sm:$0xf] %v581
    %614 = vst [vmem:[%s4 + $0x3c] sm:$0xf] %v582
  $region21: #{netD_forward.6} parent=0 // pred_fallthru
    _
  // Predicated region
  $region22: #{netD_forward.6} parent=0 // pred_check
    _
  $region23: #{netD_forward.6} parent=0 // pred_check_branch
    %616 = sbr.rel (0) target = $region25
  $region24: #{netD_forward.6} parent=0 // pred_region
    _
  $region25: #{netD_forward.6} parent=0 // pred_fallthru
    _
  // Predicated region
  $region26: #{netD_forward.6} parent=0 // pred_check
    _
  $region27: #{netD_forward.6} parent=0 // pred_check_branch
    %618 = sbr.rel (0) target = $region29
  $region28: #{netD_forward.6} parent=0 // pred_region
    _
  $region29: #{netD_forward.6} parent=0 // pred_fallthru
    _

// kernel: netD_forward.7
$region0: #{netD_forward.7}
  #allocation0 [shape = 'u32[]', space=smem, size = 0x4, offset = 0x4, fixed_abs, tag = 'smem constant byte address 0x4 - core index']
  #allocation1 [shape = 'u32[144,128]{1,0:T(1,128)}', space=vmem, size = 0x12000, scoped, tag = 'internal scratch']
  #allocation2 [shape = 'f32[32,128]{1,0:T(8,128)}', space=vmem, size = 0x4000, scoped, tag = 'scratch operand']
  %s0 = inlined_call_operand.vmem [shape: bf16[32,512], index: 0, kind: input, shape index: {}]
  %s1 = inlined_call_operand.vmem [shape: bf16[512,128], index: 1, kind: input, shape index: {}]
  %s2 = inlined_call_operand.vmem [shape: f32[1,128], index: 2, kind: input, shape index: {}]
  %s3 = inlined_call_operand.vmem [shape: f32[1,128], index: 3, kind: input, shape index: {}]
  %s4 = inlined_call_operand.vmem [shape: f32[32,128], index: 4, kind: input, shape index: {}]
  %s5 = inlined_call_operand.vmem [shape: f32[8,32], index: 5, kind: input, shape index: {}]
  %s6 = inlined_call_operand.vmem [shape: f32[8,1], index: 6, kind: output, shape index: {}]
  %s7 = sld [smem:[#allocation0]]
  $region38: #{netD_forward.7} parent=0
    _
  %s9 = ssub.s32 1, %s7
  %s10 = scalar_select 0, %s9, %s7
  // Predicated region
  $region2: #{netD_forward.7} parent=0 // pred_check
    _
  $region3: #{netD_forward.7} parent=0 // pred_check_branch
    %12 = sbr.rel (0) target = $region5
  $region4: #{netD_forward.7} parent=0 // pred_region
    _
  $region5: #{netD_forward.7} parent=0 // pred_fallthru
    _
  // Predicated region
  $region6: #{netD_forward.7} parent=0 // pred_check
    _
  $region7: #{netD_forward.7} parent=0 // pred_check_branch
    %14 = sbr.rel (0) target = $region9
  $region8: #{netD_forward.7} parent=0 // pred_region
    _
  $region9: #{netD_forward.7} parent=0 // pred_fallthru
    _
  // Predicated region
  $region10: #{netD_forward.7} parent=0 // pred_check
    _
  $region11: #{netD_forward.7} parent=0 // pred_check_branch
    %16 = sbr.rel (0) target = $region13
  $region12: #{netD_forward.7} parent=0 // pred_region
    _
  $region13: #{netD_forward.7} parent=0 // pred_fallthru
    _
  // Predicated region
  $region14: #{netD_forward.7} parent=0 // pred_check
    _
  $region15: #{netD_forward.7} parent=0 // pred_check_branch
    %18 = sbr.rel (0) target = $region17
  $region16: #{netD_forward.7} parent=0 // pred_region
    _
  $region17: #{netD_forward.7} parent=0 // pred_fallthru
    _
  // Predicated region
  $region18: #{netD_forward.7} parent=0 // pred_check
    _
  $region19: #{netD_forward.7} parent=0 // pred_check_branch
    %20 = sbr.rel (0) target = $region21
  $region20: #{netD_forward.7} parent=0 // pred_region
    _
  $region21: #{netD_forward.7} parent=0 // pred_fallthru
    _
  // Predicated region
  $region22: #{netD_forward.7} parent=0 // pred_check
    _
  $region23: #{netD_forward.7} parent=0 // pred_check_branch
    %22 = sbr.rel (0) target = $region25
  $region24: #{netD_forward.7} parent=0 // pred_region
    _
  $region25: #{netD_forward.7} parent=0 // pred_fallthru
    _
  %s24 = smul.u32 0, 32
  %v25 = vld [vmem:[%s0] sm:$0xff]
  %v26 = vld [vmem:[%s0 + $0x8] sm:$0xff]
  %v27 = vld [vmem:[%s0 + $0x10] sm:$0xff]
  %v28 = vld [vmem:[%s0 + $0x18] sm:$0xff]
  %v29 = vld [vmem:[%s0 + $0x20] sm:$0xff]
  %v30 = vld [vmem:[%s0 + $0x28] sm:$0xff]
  %v31 = vld [vmem:[%s0 + $0x30] sm:$0xff]
  %v32 = vld [vmem:[%s0 + $0x38] sm:$0xff]
  %v33 = vld [vmem:[%s1] sm:$0xf]
  %v34 = vld [vmem:[%s1 + $0x4] sm:$0xf]
  %v35 = vld [vmem:[%s1 + $0x8] sm:$0xf]
  %v36 = vld [vmem:[%s1 + $0xc] sm:$0xf]
  %v37 = vld [vmem:[%s1 + $0x10] sm:$0xf]
  %v38 = vld [vmem:[%s1 + $0x14] sm:$0xf]
  %v39 = vld [vmem:[%s1 + $0x18] sm:$0xf]
  %v40 = vld [vmem:[%s1 + $0x1c] sm:$0xf]
  %v41 = vld [vmem:[%s1 + $0x20] sm:$0xf]
  %v42 = vld [vmem:[%s1 + $0x24] sm:$0xf]
  %v43 = vld [vmem:[%s1 + $0x28] sm:$0xf]
  %v44 = vld [vmem:[%s1 + $0x2c] sm:$0xf]
  %v45 = vld [vmem:[%s1 + $0x30] sm:$0xf]
  %v46 = vld [vmem:[%s1 + $0x34] sm:$0xf]
  %v47 = vld [vmem:[%s1 + $0x38] sm:$0xf]
  %v48 = vld [vmem:[%s1 + $0x3c] sm:$0xf]
  %v49 = vld [vmem:[%s1 + $0x40] sm:$0xf]
  %v50 = vld [vmem:[%s1 + $0x44] sm:$0xf]
  %v51 = vld [vmem:[%s1 + $0x48] sm:$0xf]
  %v52 = vld [vmem:[%s1 + $0x4c] sm:$0xf]
  %v53 = vld [vmem:[%s1 + $0x50] sm:$0xf]
  %v54 = vld [vmem:[%s1 + $0x54] sm:$0xf]
  %v55 = vld [vmem:[%s1 + $0x58] sm:$0xf]
  %v56 = vld [vmem:[%s1 + $0x5c] sm:$0xf]
  %v57 = vld [vmem:[%s1 + $0x60] sm:$0xf]
  %v58 = vld [vmem:[%s1 + $0x64] sm:$0xf]
  %v59 = vld [vmem:[%s1 + $0x68] sm:$0xf]
  %v60 = vld [vmem:[%s1 + $0x6c] sm:$0xf]
  %v61 = vld [vmem:[%s1 + $0x70] sm:$0xf]
  %v62 = vld [vmem:[%s1 + $0x74] sm:$0xf]
  %v63 = vld [vmem:[%s1 + $0x78] sm:$0xf]
  %v64 = vld [vmem:[%s1 + $0x7c] sm:$0xf]
  %v65 = vld [vmem:[%s1 + $0x80] sm:$0xf]
  %v66 = vld [vmem:[%s1 + $0x84] sm:$0xf]
  %v67 = vld [vmem:[%s1 + $0x88] sm:$0xf]
  %v68 = vld [vmem:[%s1 + $0x8c] sm:$0xf]
  %v69 = vld [vmem:[%s1 + $0x90] sm:$0xf]
  %v70 = vld [vmem:[%s1 + $0x94] sm:$0xf]
  %v71 = vld [vmem:[%s1 + $0x98] sm:$0xf]
  %v72 = vld [vmem:[%s1 + $0x9c] sm:$0xf]
  %v73 = vld [vmem:[%s1 + $0xa0] sm:$0xf]
  %v74 = vld [vmem:[%s1 + $0xa4] sm:$0xf]
  %v75 = vld [vmem:[%s1 + $0xa8] sm:$0xf]
  %v76 = vld [vmem:[%s1 + $0xac] sm:$0xf]
  %v77 = vld [vmem:[%s1 + $0xb0] sm:$0xf]
  %v78 = vld [vmem:[%s1 + $0xb4] sm:$0xf]
  %v79 = vld [vmem:[%s1 + $0xb8] sm:$0xf]
  %v80 = vld [vmem:[%s1 + $0xbc] sm:$0xf]
  %v81 = vld [vmem:[%s1 + $0xc0] sm:$0xf]
  %v82 = vld [vmem:[%s1 + $0xc4] sm:$0xf]
  %v83 = vld [vmem:[%s1 + $0xc8] sm:$0xf]
  %v84 = vld [vmem:[%s1 + $0xcc] sm:$0xf]
  %v85 = vld [vmem:[%s1 + $0xd0] sm:$0xf]
  %v86 = vld [vmem:[%s1 + $0xd4] sm:$0xf]
  %v87 = vld [vmem:[%s1 + $0xd8] sm:$0xf]
  %v88 = vld [vmem:[%s1 + $0xdc] sm:$0xf]
  %v89 = vld [vmem:[%s1 + $0xe0] sm:$0xf]
  %v90 = vld [vmem:[%s1 + $0xe4] sm:$0xf]
  %v91 = vld [vmem:[%s1 + $0xe8] sm:$0xf]
  %v92 = vld [vmem:[%s1 + $0xec] sm:$0xf]
  %v93 = vld [vmem:[%s1 + $0xf0] sm:$0xf]
  %v94 = vld [vmem:[%s1 + $0xf4] sm:$0xf]
  %v95 = vld [vmem:[%s1 + $0xf8] sm:$0xf]
  %v96 = vld [vmem:[%s1 + $0xfc] sm:$0xf]
  %v105 = vunpack.c.l.b16 %v25
  %v106 = vunpack.c.h.b16 %v25
  %v107 = vunpack.c.l.b16 %v26
  %v108 = vunpack.c.h.b16 %v26
  %v109 = vunpack.c.l.b16 %v27
  %v110 = vunpack.c.h.b16 %v27
  %v111 = vunpack.c.l.b16 %v28
  %v112 = vunpack.c.h.b16 %v28
  %v113 = vunpack.c.l.b16 %v29
  %v114 = vunpack.c.h.b16 %v29
  %v115 = vunpack.c.l.b16 %v30
  %v116 = vunpack.c.h.b16 %v30
  %v117 = vunpack.c.l.b16 %v31
  %v118 = vunpack.c.h.b16 %v31
  %v119 = vunpack.c.l.b16 %v32
  %v120 = vunpack.c.h.b16 %v32
  %v121 = vpack.c.b16 %v109, %v105
  %v122 = vpack.c.b16 %v110, %v106
  %v123 = vpack.c.b16 %v111, %v107
  %v124 = vpack.c.b16 %v112, %v108
  %v125 = vpack.c.b16 %v117, %v113
  %v126 = vpack.c.b16 %v118, %v114
  %v127 = vpack.c.b16 %v119, %v115
  %v128 = vpack.c.b16 %v120, %v116
  %v201 = vunpack.c.l.b16 %v33
  %v202 = vunpack.c.l.b16 %v34
  %v203 = vunpack.c.l.b16 %v35
  %v204 = vunpack.c.l.b16 %v36
  %v205 = vunpack.c.l.b16 %v37
  %v206 = vunpack.c.l.b16 %v38
  %v207 = vunpack.c.l.b16 %v39
  %v208 = vunpack.c.l.b16 %v40
  %v209 = vunpack.c.l.b16 %v41
  %v210 = vunpack.c.l.b16 %v42
  %v211 = vunpack.c.l.b16 %v43
  %v212 = vunpack.c.l.b16 %v44
  %v213 = vunpack.c.l.b16 %v45
  %v214 = vunpack.c.l.b16 %v46
  %v215 = vunpack.c.l.b16 %v47
  %v216 = vunpack.c.l.b16 %v48
  %v217 = vunpack.c.l.b16 %v49
  %v218 = vunpack.c.l.b16 %v50
  %v219 = vunpack.c.l.b16 %v51
  %v220 = vunpack.c.l.b16 %v52
  %v221 = vunpack.c.l.b16 %v53
  %v222 = vunpack.c.l.b16 %v54
  %v223 = vunpack.c.l.b16 %v55
  %v224 = vunpack.c.l.b16 %v56
  %v225 = vunpack.c.l.b16 %v57
  %v226 = vunpack.c.l.b16 %v58
  %v227 = vunpack.c.l.b16 %v59
  %v228 = vunpack.c.l.b16 %v60
  %v229 = vunpack.c.l.b16 %v61
  %v230 = vunpack.c.l.b16 %v62
  %v231 = vunpack.c.l.b16 %v63
  %v232 = vunpack.c.l.b16 %v64
  %v233 = vunpack.c.l.b16 %v65
  %v234 = vunpack.c.l.b16 %v66
  %v235 = vunpack.c.l.b16 %v67
  %v236 = vunpack.c.l.b16 %v68
  %v237 = vunpack.c.l.b16 %v69
  %v238 = vunpack.c.l.b16 %v70
  %v239 = vunpack.c.l.b16 %v71
  %v240 = vunpack.c.l.b16 %v72
  %v241 = vunpack.c.l.b16 %v73
  %v242 = vunpack.c.l.b16 %v74
  %v243 = vunpack.c.l.b16 %v75
  %v244 = vunpack.c.l.b16 %v76
  %v245 = vunpack.c.l.b16 %v77
  %v246 = vunpack.c.l.b16 %v78
  %v247 = vunpack.c.l.b16 %v79
  %v248 = vunpack.c.l.b16 %v80
  %v249 = vunpack.c.l.b16 %v81
  %v250 = vunpack.c.l.b16 %v82
  %v251 = vunpack.c.l.b16 %v83
  %v252 = vunpack.c.l.b16 %v84
  %v253 = vunpack.c.l.b16 %v85
  %v254 = vunpack.c.l.b16 %v86
  %v255 = vunpack.c.l.b16 %v87
  %v256 = vunpack.c.l.b16 %v88
  %v257 = vunpack.c.l.b16 %v89
  %v258 = vunpack.c.l.b16 %v90
  %v259 = vunpack.c.l.b16 %v91
  %v260 = vunpack.c.l.b16 %v92
  %v261 = vunpack.c.l.b16 %v93
  %v262 = vunpack.c.l.b16 %v94
  %v263 = vunpack.c.l.b16 %v95
  %v264 = vunpack.c.l.b16 %v96
  %v265 = vpack.c.b16 %v202, %v201
  %v266 = vpack.c.b16 %v204, %v203
  %v267 = vpack.c.b16 %v206, %v205
  %v268 = vpack.c.b16 %v208, %v207
  %v269 = vpack.c.b16 %v210, %v209
  %v270 = vpack.c.b16 %v212, %v211
  %v271 = vpack.c.b16 %v214, %v213
  %v272 = vpack.c.b16 %v216, %v215
  %v273 = vpack.c.b16 %v218, %v217
  %v274 = vpack.c.b16 %v220, %v219
  %v275 = vpack.c.b16 %v222, %v221
  %v276 = vpack.c.b16 %v224, %v223
  %v277 = vpack.c.b16 %v226, %v225
  %v278 = vpack.c.b16 %v228, %v227
  %v279 = vpack.c.b16 %v230, %v229
  %v280 = vpack.c.b16 %v232, %v231
  %v281 = vpack.c.b16 %v234, %v233
  %v282 = vpack.c.b16 %v236, %v235
  %v283 = vpack.c.b16 %v238, %v237
  %v284 = vpack.c.b16 %v240, %v239
  %v285 = vpack.c.b16 %v242, %v241
  %v286 = vpack.c.b16 %v244, %v243
  %v287 = vpack.c.b16 %v246, %v245
  %v288 = vpack.c.b16 %v248, %v247
  %v289 = vpack.c.b16 %v250, %v249
  %v290 = vpack.c.b16 %v252, %v251
  %v291 = vpack.c.b16 %v254, %v253
  %v292 = vpack.c.b16 %v256, %v255
  %v293 = vpack.c.b16 %v258, %v257
  %v294 = vpack.c.b16 %v260, %v259
  %v295 = vpack.c.b16 %v262, %v261
  %v296 = vpack.c.b16 %v264, %v263
  %329 = vmatprep.subr.bf16.mxu0 0
  %330 = vmatpush1.bf16.msra.mxu0 %v265
  %331 = vmatprep.subr.bf16.mxu0 0
  %332 = vmatpush1.bf16.msra.mxu0 %v266
  %333 = vmatprep.subr.bf16.mxu0 0
  %334 = vmatpush1.bf16.msra.mxu0 %v267
  %335 = vmatprep.subr.bf16.mxu0 0
  %336 = vmatpush1.bf16.msra.mxu0 %v268
  %337 = vmatprep.subr.bf16.mxu0 0
  %338 = vmatpush1.bf16.msra.mxu0 %v269
  %339 = vmatprep.subr.bf16.mxu0 0
  %340 = vmatpush1.bf16.msra.mxu0 %v270
  %341 = vmatprep.subr.bf16.mxu0 0
  %342 = vmatpush1.bf16.msra.mxu0 %v271
  %343 = vmatprep.subr.bf16.mxu0 0
  %344 = vmatpush1.bf16.msra.mxu0 %v272
  %345 = vmatprep.subr.bf16.mxu0 0
  %346 = vmatpush1.bf16.msra.mxu0 %v273
  %347 = vmatprep.subr.bf16.mxu0 0
  %348 = vmatpush1.bf16.msra.mxu0 %v274
  %349 = vmatprep.subr.bf16.mxu0 0
  %350 = vmatpush1.bf16.msra.mxu0 %v275
  %351 = vmatprep.subr.bf16.mxu0 0
  %352 = vmatpush1.bf16.msra.mxu0 %v276
  %353 = vmatprep.subr.bf16.mxu0 0
  %354 = vmatpush1.bf16.msra.mxu0 %v277
  %355 = vmatprep.subr.bf16.mxu0 0
  %356 = vmatpush1.bf16.msra.mxu0 %v278
  %357 = vmatprep.subr.bf16.mxu0 0
  %358 = vmatpush1.bf16.msra.mxu0 %v279
  %359 = vmatprep.subr.bf16.mxu0 0
  %360 = vmatpush1.bf16.msra.mxu0 %v280
  %361 = vmatprep.mubr.bf16.mxu0 %v122
  %362 = vmatmul.mubr.bf16.gmra.mrb[0].mxu0 %v121
  %v363 = vpop.f32.mrb[0].mxu0
  %v364 = vadd.f32 0.0, %v363
  %v365 = vpop.f32.mrb[0].mxu0
  %v366 = vpop.f32.mrb[0].mxu0
  %v367 = vadd.f32 0.0, %v366
  %v368 = vpop.f32.mrb[0].mxu0
  %369 = vmatprep.mubr.bf16.mxu0 %v126
  %370 = vmatmul.mubr.bf16.gmra.mrb[0].mxu0 %v125
  %v371 = vpop.f32.mrb[0].mxu0
  %v372 = vadd.f32 0.0, %v371
  %v373 = vpop.f32.mrb[0].mxu0
  %v374 = vpop.f32.mrb[0].mxu0
  %v375 = vadd.f32 0.0, %v374
  %v376 = vpop.f32.mrb[0].mxu0
  %377 = vdwg.mxu0
  %378 = vmatprep.subr.bf16.mxu0 0
  %379 = vmatpush1.bf16.msra.mxu0 %v281
  %380 = vmatprep.subr.bf16.mxu0 0
  %381 = vmatpush1.bf16.msra.mxu0 %v282
  %382 = vmatprep.subr.bf16.mxu0 0
  %383 = vmatpush1.bf16.msra.mxu0 %v283
  %384 = vmatprep.subr.bf16.mxu0 0
  %385 = vmatpush1.bf16.msra.mxu0 %v284
  %386 = vmatprep.subr.bf16.mxu0 0
  %387 = vmatpush1.bf16.msra.mxu0 %v285
  %388 = vmatprep.subr.bf16.mxu0 0
  %389 = vmatpush1.bf16.msra.mxu0 %v286
  %390 = vmatprep.subr.bf16.mxu0 0
  %391 = vmatpush1.bf16.msra.mxu0 %v287
  %392 = vmatprep.subr.bf16.mxu0 0
  %393 = vmatpush1.bf16.msra.mxu0 %v288
  %394 = vmatprep.subr.bf16.mxu0 0
  %395 = vmatpush1.bf16.msra.mxu0 %v289
  %396 = vmatprep.subr.bf16.mxu0 0
  %397 = vmatpush1.bf16.msra.mxu0 %v290
  %398 = vmatprep.subr.bf16.mxu0 0
  %399 = vmatpush1.bf16.msra.mxu0 %v291
  %400 = vmatprep.subr.bf16.mxu0 0
  %401 = vmatpush1.bf16.msra.mxu0 %v292
  %402 = vmatprep.subr.bf16.mxu0 0
  %403 = vmatpush1.bf16.msra.mxu0 %v293
  %404 = vmatprep.subr.bf16.mxu0 0
  %405 = vmatpush1.bf16.msra.mxu0 %v294
  %406 = vmatprep.subr.bf16.mxu0 0
  %407 = vmatpush1.bf16.msra.mxu0 %v295
  %408 = vmatprep.subr.bf16.mxu0 0
  %409 = vmatpush1.bf16.msra.mxu0 %v296
  %410 = vmatprep.mubr.bf16.mxu0 %v124
  %411 = vmatmul.mubr.bf16.gmra.mrb[0].mxu0 %v123
  %v412 = vpop.f32.mrb[0].mxu0
  %v413 = vadd.f32 %v364, %v412
  %v414 = vpop.f32.mrb[0].mxu0
  %v415 = vpop.f32.mrb[0].mxu0
  %v416 = vadd.f32 %v367, %v415
  %v417 = vpop.f32.mrb[0].mxu0
  %418 = vmatprep.mubr.bf16.mxu0 %v128
  %419 = vmatmul.mubr.bf16.gmra.mrb[0].mxu0 %v127
  %v420 = vpop.f32.mrb[0].mxu0
  %v421 = vadd.f32 %v372, %v420
  %v422 = vpop.f32.mrb[0].mxu0
  %v423 = vpop.f32.mrb[0].mxu0
  %v424 = vadd.f32 %v375, %v423
  %v425 = vpop.f32.mrb[0].mxu0
  %426 = vdwg.mxu0
  %s427 = scalar_lea.vmem [#allocation2], %s24
  %428 = vst [vmem:[%s427] sm:$0xff] %v413
  %429 = vst [vmem:[%s427 + $0x8] sm:$0xff] %v416
  %430 = vst [vmem:[%s427 + $0x10] sm:$0xff] %v421
  %431 = vst [vmem:[%s427 + $0x18] sm:$0xff] %v424
  %p432 = scmp.eq.s32.totalorder 0, 0
  // Predicated region
  $region26: #{netD_forward.7} parent=0 // pred_check
    %p433 = pneg %p432
  $region27: #{netD_forward.7} parent=0 // pred_check_branch
    %435 = sbr.rel (%p433) target = $region29
  $region28: #{netD_forward.7} parent=0 // pred_region
    %v436 = vld [vmem:[#allocation2] sm:$0xff]
    %v437 = vld [vmem:[#allocation2 + $0x8] sm:$0xff]
    %v438 = vld [vmem:[#allocation2 + $0x10] sm:$0xff]
    %v439 = vld [vmem:[#allocation2 + $0x18] sm:$0xff]
    %v440 = vadd.f32 %v436, %v437
    %v441 = vadd.f32 %v440, %v438
    %v442 = vadd.f32 %v441, %v439
    %v443 = vrot.slane %v442, 4
    %v444 = vadd.f32 %v442, %v443
    %v445 = vrot.slane %v444, 2
    %v446 = vadd.f32 %v444, %v445
    %v447 = vrot.slane %v446, 1
    %v448 = vadd.f32 %v446, %v447
    %v449 = vrcp.pop 32.0
    %v450 = vmul.f32 %v448, %v449
    %v451 = vsub.f32 %v436, %v450
    %v452 = vsub.f32 %v437, %v450
    %v453 = vsub.f32 %v438, %v450
    %v454 = vsub.f32 %v439, %v450
    %v455 = vmul.f32 %v451, %v451
    %v456 = vmul.f32 %v452, %v452
    %v457 = vmul.f32 %v453, %v453
    %v458 = vmul.f32 %v454, %v454
    %v459 = vadd.f32 %v455, %v456
    %v460 = vadd.f32 %v459, %v457
    %v461 = vadd.f32 %v460, %v458
    %v462 = vrot.slane %v461, 4
    %v463 = vadd.f32 %v461, %v462
    %v464 = vrot.slane %v463, 2
    %v465 = vadd.f32 %v463, %v464
    %v466 = vrot.slane %v465, 1
    %v467 = vadd.f32 %v465, %v466
    %v468 = vmul.f32 %v467, %v449
    %v469 = vadd.f32 %v468, 1e-05
    %v470 = vrsqrt.pop %v469
    %v471 = vld [vmem:[%s2] sm:$0x1]
    %v472 = vmul.f32 %v470, %v471
    %v473 = vld [vmem:[%s3] sm:$0x1]
    %v474 = vmul.f32 %v450, %v472
    %v475 = vsub.f32 %v473, %v474
    %v476 = vlaneseq
    %v477 = vshrl.u32 %v476, 7
    %v478 = vsub.s32 0, %v477
    %v479 = vrot.slane %v472, %v478
    %v480 = vmul.f32 %v436, %v479
    %v481 = vmul.f32 %v437, %v479
    %v482 = vmul.f32 %v438, %v479
    %v483 = vmul.f32 %v439, %v479
    %v485 = vlaneseq
    %v486 = vshrl.u32 %v485, 7
    %v487 = vsub.s32 0, %v486
    %v488 = vrot.slane %v475, %v487
    %v490 = vadd.f32 %v480, %v488
    %v491 = vadd.f32 %v481, %v488
    %v492 = vadd.f32 %v482, %v488
    %v493 = vadd.f32 %v483, %v488
    %v494 = vmul.f32 %v490, 0.2
    %v495 = vmul.f32 %v491, 0.2
    %v496 = vmul.f32 %v492, 0.2
    %v497 = vmul.f32 %v493, 0.2
    %v498 = vmax.f32 %v490, %v494
    %v499 = vmax.f32 %v491, %v495
    %v500 = vmax.f32 %v492, %v496
    %v501 = vmax.f32 %v493, %v497
    %v502 = vld [vmem:[%s5] sm:$0xff]
    %v503 = vld [vmem:[%s4] sm:$0xff]
    %v504 = vld [vmem:[%s4 + $0x8] sm:$0xff]
    %v505 = vld [vmem:[%s4 + $0x10] sm:$0xff]
    %v506 = vld [vmem:[%s4 + $0x18] sm:$0xff]
    %v507 = vmul.f32 %v498, %v503
    %v508 = vmul.f32 %v499, %v504
    %v509 = vmul.f32 %v500, %v505
    %v510 = vmul.f32 %v501, %v506
    %vm511 = vcmask 261120
    %v513 = vsel %vm511, %v502, 0
    %515 = vmatprep.subr.mxu0 0.0
    %516 = vmatpush1.msra.mxu0 %v507
    %517 = vmatprep.subr.mxu0 0.0
    %518 = vmatpush1.msra.mxu0 %v508
    %519 = vmatprep.subr.mxu0 0.0
    %520 = vmatpush1.msra.mxu0 %v509
    %521 = vmatprep.subr.mxu0 0.0
    %522 = vmatpush1.msra.mxu0 %v510
    %523 = vmatprep.subr.mxu0 0.0
    %524 = vmatpush1.msra.mxu0 0.0
    %525 = vmatprep.subr.mxu0 0.0
    %526 = vmatpush1.msra.mxu0 0.0
    %527 = vmatprep.subr.mxu0 0.0
    %528 = vmatpush1.msra.mxu0 0.0
    %529 = vmatprep.subr.mxu0 0.0
    %530 = vmatpush1.msra.mxu0 0.0
    %531 = vmatprep.subr.mxu0 0.0
    %532 = vmatpush1.msra.mxu0 0.0
    %533 = vmatprep.subr.mxu0 0.0
    %534 = vmatpush1.msra.mxu0 0.0
    %535 = vmatprep.subr.mxu0 0.0
    %536 = vmatpush1.msra.mxu0 0.0
    %537 = vmatprep.subr.mxu0 0.0
    %538 = vmatpush1.msra.mxu0 0.0
    %539 = vmatprep.subr.mxu0 0.0
    %540 = vmatpush1.msra.mxu0 0.0
    %541 = vmatprep.subr.mxu0 0.0
    %542 = vmatpush1.msra.mxu0 0.0
    %543 = vmatprep.subr.mxu0 0.0
    %544 = vmatpush1.msra.mxu0 0.0
    %545 = vmatprep.subr.mxu0 0.0
    %546 = vmatpush1.msra.mxu0 0.0
    %547 = vmatprep.subr.mxu0 0.0
    %548 = vmatpush1.msra.mxu0 0.0
    %549 = vmatprep.subr.mxu0 0.0
    %550 = vmatpush1.msra.mxu0 0.0
    %551 = vmatprep.subr.mxu0 0.0
    %552 = vmatpush1.msra.mxu0 0.0
    %553 = vmatprep.subr.mxu0 0.0
    %554 = vmatpush1.msra.mxu0 0.0
    %555 = vmatprep.subr.mxu0 0.0
    %556 = vmatpush1.msra.mxu0 0.0
    %557 = vmatprep.subr.mxu0 0.0
    %558 = vmatpush1.msra.mxu0 0.0
    %559 = vmatprep.subr.mxu0 0.0
    %560 = vmatpush1.msra.mxu0 0.0
    %561 = vmatprep.subr.mxu0 0.0
    %562 = vmatpush1.msra.mxu0 0.0
    %563 = vmatprep.subr.mxu0 0.0
    %564 = vmatpush1.msra.mxu0 0.0
    %565 = vmatprep.subr.mxu0 0.0
    %566 = vmatpush1.msra.mxu0 0.0
    %567 = vmatprep.subr.mxu0 0.0
    %568 = vmatpush1.msra.mxu0 0.0
    %569 = vmatprep.subr.mxu0 0.0
    %570 = vmatpush1.msra.mxu0 0.0
    %571 = vmatprep.subr.mxu0 0.0
    %572 = vmatpush1.msra.mxu0 0.0
    %573 = vmatprep.subr.mxu0 0.0
    %574 = vmatpush1.msra.mxu0 0.0
    %575 = vmatprep.subr.mxu0 0.0
    %576 = vmatpush1.msra.mxu0 0.0
    %577 = vmatprep.subr.mxu0 0.0
    %578 = vmatpush1.msra.mxu0 0.0
    %579 = vmatprep.mubr.f32.mxu0 0.0
    %580 = vmatmul.mubr.f32.gmra.mrb[0].mxu0 %v513
    %v581 = vpop.f32.mrb[0].mxu0
    %v582 = vadd.f32 0.0, %v581
    %v583 = vpop.f32.mrb[0].mxu0
    %584 = vdwg.mxu0
    %585 = vadd.xlane.f32.xlu0 %v582
    %v586 = vpop.xlane.xlu0 %585
    %v587 = vand.u32 2147483647, %v586
    %v588 = vsub.f32 0.0, %v587
    %v589 = vmul.f32 %v588, 1.442695
    %v590 = vpow.pop %v589
    %vm591 = vcmp.ge.f32.partialorder %v586, 0.0
    %v592 = vadd.f32 %v590, 1.0
    %v593 = vrcp.pop %v592
    %v594 = vmul.f32 1.0, %v593
    %v595 = vmul.f32 %v590, %v593
    %v596 = vsel %vm591, %v594, %v595
    %vm597 = vcmask 7168
    %598 = vst.msk [vmem:[%s6] sm:$0xff] %vm597, %v596
  $region29: #{netD_forward.7} parent=0 // pred_fallthru
    _
  // Predicated region
  $region30: #{netD_forward.7} parent=0 // pred_check
    _
  $region31: #{netD_forward.7} parent=0 // pred_check_branch
    %600 = sbr.rel (0) target = $region33
  $region32: #{netD_forward.7} parent=0 // pred_region
    _
  $region33: #{netD_forward.7} parent=0 // pred_fallthru
    _
  // Predicated region
  $region34: #{netD_forward.7} parent=0 // pred_check
    _
  $region35: #{netD_forward.7} parent=0 // pred_check_branch
    %602 = sbr.rel (0) target = $region37
  $region36: #{netD_forward.7} parent=0 // pred_region
    _
  $region37: #{netD_forward.7} parent=0 // pred_fallthru
    _

</llo_original>
